<compile_context>
chip_gen: v5e
topology: v5e:2x2
jax: 0.10.0
libtpu: 0.0.40
codegen_flags: <defaults>
</compile_context>

<pallas_src>
import jax
import jax.numpy as jnp
import numpy as np
from jax.experimental import pallas as pl
from jax.experimental.pallas import tpu as pltpu

EPS = 1e-5


# --------------------------------------------------------------------------
# In-kernel helpers
# --------------------------------------------------------------------------
def _sigmoid(z):
    # Exact sigmoid: exp on the EUP + one divide (approx reciprocal was flagged
    # as a stacked-error risk in review).
    return 1.0 / (1.0 + jnp.exp(-z))


def _bn2d_sigmoid(y, fold, gamma, beta):
    """BatchNorm2d (batch statistics, two-pass variance) + sigmoid.

    `y` has rows=(image, height) and lanes=(width, channel).  `fold` is a
    precomputed (lanes, lanes) matrix that sums a per-lane row-sum across all
    width positions of the same channel and divides by the element count, so
    `sum_rows(y @ fold)` is the per-channel mean broadcast onto every lane.
    """
    mu = jnp.sum(jnp.dot(y, fold, preferred_element_type=jnp.float32),
                 axis=0, keepdims=True)
    d = y - mu
    var = jnp.sum(jnp.dot(d * d, fold, preferred_element_type=jnp.float32),
                  axis=0, keepdims=True)
    return _sigmoid(gamma * d * jax.lax.rsqrt(var + EPS) + beta)


def _bn1d_sigmoid(y, gamma, beta):
    """BatchNorm1d (batch statistics, biased variance) + sigmoid on (batch, C)."""
    mu = jnp.mean(y, axis=0, keepdims=True)
    d = y - mu
    var = jnp.mean(d * d, axis=0, keepdims=True)
    return _sigmoid(gamma * d * jax.lax.rsqrt(var + EPS) + beta)


# --------------------------------------------------------------------------
# The fused kernel: whole forward pass, everything VMEM-resident, no grid.
# --------------------------------------------------------------------------
def lenet_kernel(xsh_ref, b1_ref, g1_ref, be1_ref, a1_ref,
                 b2p_ref, rs1_ref, g2_ref, be2_ref, a2_ref,
                 cw_ref, rs2_ref, g3_ref, be3_ref,
                 w4_ref, g4_ref, be4_ref, w5_ref, b5_ref, o_ref):
    # xsh : (n*28, 5*32)  height-im2col of the padded input (rows=(n,i), lanes=(kh,b))
    # b1  : (160, 168)    conv1 banded weight (width taps + channels), bf16
    # a1/a2: BN2d statistic fold matrices, f32
    # b2p : (168, 5*160)  [2x2 width-pool (.) conv2 banded weight] per height tap, bf16
    # rs1 : (5, n*10, n*28) [conv2 height tap (.) 2x2 height-pool] row selectors, f32
    # cw  : (160, 5*120)  [2x2 width-pool (.) flatten (.) Linear(400,120)] per pooled row, bf16
    # rs2 : (5, n, n*10)  [flatten row group (.) 2x2 height-pool] row selectors, f32
    # w4  : (120, 84) bf16, w5: (84, 10) bf16, b5: (1, 10) f32
    # o   : (n, 10) f32 logits

    # ---- Conv1 (one banded matmul; bias dropped -- absorbed by batch-stat BN).
    c1 = jnp.dot(xsh_ref[...], b1_ref[...],
                 preferred_element_type=jnp.float32)            # (n*28, 28*6)

    # ---- BatchNorm2d(6) + Sigmoid.
    s1 = _bn2d_sigmoid(c1, a1_ref[...], g1_ref[...], be1_ref[...])

    # ---- AvgPool2x2 + Conv2(6->16,k=5), fused: width pooling + width taps are
    #      inside b2p; height pooling + height taps are the 5 row-select matmuls.
    y2 = jnp.dot(s1.astype(jnp.bfloat16), b2p_ref[...],
                 preferred_element_type=jnp.float32)            # (n*28, 5*160)
    blk = y2.shape[1] // 5
    c2 = jnp.dot(rs1_ref[0], y2[:, :blk], preferred_element_type=jnp.float32)
    for kh in range(1, 5):
        c2 += jnp.dot(rs1_ref[kh], y2[:, kh * blk:(kh + 1) * blk],
                      preferred_element_type=jnp.float32)       # (n*10, 10*16)

    # ---- BatchNorm2d(16) + Sigmoid.
    s2 = _bn2d_sigmoid(c2, a2_ref[...], g2_ref[...], be2_ref[...])

    # ---- AvgPool2x2 + Flatten + Linear(400,120), fused with the same trick.
    y3 = jnp.dot(s2.astype(jnp.bfloat16), cw_ref[...],
                 preferred_element_type=jnp.float32)            # (n*10, 5*120)
    blk = y3.shape[1] // 5
    h = jnp.dot(rs2_ref[0], y3[:, :blk], preferred_element_type=jnp.float32)
    for p in range(1, 5):
        h += jnp.dot(rs2_ref[p], y3[:, p * blk:(p + 1) * blk],
                     preferred_element_type=jnp.float32)        # (n, 120)

    # ---- BN1d(120)+Sigmoid, Linear(120,84), BN1d(84)+Sigmoid, Linear(84,10).
    h = _bn1d_sigmoid(h, g3_ref[...], be3_ref[...])
    h = jnp.dot(h.astype(jnp.bfloat16), w4_ref[...],
                preferred_element_type=jnp.float32)             # (n, 84)
    h = _bn1d_sigmoid(h, g4_ref[...], be4_ref[...])
    o_ref[...] = jnp.dot(h.astype(jnp.bfloat16), w5_ref[...],
                         preferred_element_type=jnp.float32) + b5_ref[...]


# --------------------------------------------------------------------------
# pallas_call wrapper + thin input glue (pad + 5 static slices, XLA side)
# --------------------------------------------------------------------------
def _height_im2col(x_nchw):
    """(n,1,28,28) -> (n*28, 5*32) bf16: rows=(n, out row i), lanes=(kh, padded b)."""
    n = x_nchw.shape[0]
    xp = jnp.pad(x_nchw.reshape(n, 28, 28).astype(jnp.float32),
                 ((0, 0), (2, 2), (2, 2)))                          # (n, 32, 32)
    sh = jnp.stack([xp[:, kh:kh + 28, :] for kh in range(5)], axis=2)  # (n,28,5,32)
    return sh.reshape(n * 28, 5 * 32).astype(jnp.bfloat16)


def lenet_forward(x, ops):
    n = x.shape[0]
    args = (_height_im2col(x),) + tuple(ops)
    return pl.pallas_call(
        lenet_kernel,
        out_shape=jax.ShapeDtypeStruct((n, 10), jnp.float32),
        in_specs=[pl.BlockSpec(memory_space=pltpu.MemorySpace.VMEM)] * len(args),
        out_specs=pl.BlockSpec(memory_space=pltpu.MemorySpace.VMEM),
    )(*args)


# --------------------------------------------------------------------------
# Parameters (deterministic synthetic init; shapes match the PyTorch module)
# --------------------------------------------------------------------------
def init_params(key):
    ks = jax.random.split(key, 10)

    def u(k, shape, scale):
        return jax.random.uniform(k, shape, jnp.float32, -1.0, 1.0) * scale

    return {
        "w1": u(ks[0], (6, 1, 5, 5), 0.2),   "b1": u(ks[1], (6,), 0.1),
        "g1": jnp.ones((6,), jnp.float32),   "be1": jnp.zeros((6,), jnp.float32),
        "w2": u(ks[2], (16, 6, 5, 5), 0.08), "b2": u(ks[3], (16,), 0.08),
        "g2": jnp.ones((16,), jnp.float32),  "be2": jnp.zeros((16,), jnp.float32),
        "w3": u(ks[4], (400, 120), 0.05),    "b3": u(ks[5], (120,), 0.05),
        "g3": jnp.ones((120,), jnp.float32), "be3": jnp.zeros((120,), jnp.float32),
        "w4": u(ks[6], (120, 84), 0.09),     "b4": u(ks[7], (84,), 0.09),
        "g4": jnp.ones((84,), jnp.float32),  "be4": jnp.zeros((84,), jnp.float32),
        "w5": u(ks[8], (84, 10), 0.1),       "b5": u(ks[9], (10,), 0.1),
    }


def prepare_params(p, batch):
    """One-time host-side re-layout of the module parameters into the banded /
    pooling / selection matrices consumed by the fused kernel."""
    n = batch
    f32 = np.float32
    w1 = np.asarray(p["w1"], f32)        # (6,1,5,5)
    w2 = np.asarray(p["w2"], f32)        # (16,6,5,5)
    w3 = np.asarray(p["w3"], f32)        # (400,120): y = x_flat @ w3 (torch weight.T)
    w4 = np.asarray(p["w4"], f32)
    w5 = np.asarray(p["w5"], f32)
    # b1/b2/b3/b4 are exact no-ops ahead of batch-statistics BatchNorm (the mean
    # subtraction absorbs per-channel constants), so they are dropped entirely.

    # Conv1 banded weight: b1[kh*32+b, j*6+c] = w1[c,0,kh,b-j] for 0<=b-j<=4.
    b1 = np.zeros((5 * 32, 28 * 6), f32)
    for kh in range(5):
        for kw in range(5):
            for j in range(28):
                b1[kh * 32 + j + kw, j * 6:(j + 1) * 6] = w1[:, 0, kh, kw]

    # 2x2 width-pooling matrices (0.5 here; the other 0.5 in the row selectors).
    half = np.array([[0.5], [0.5]], f32)
    poolc1 = np.kron(np.kron(np.eye(14, dtype=f32), half), np.eye(6, dtype=f32))
    poolc2 = np.kron(np.kron(np.eye(5, dtype=f32), half), np.eye(16, dtype=f32))

    # Conv2 banded weight per height tap, with stage-1 width pooling folded in.
    b2p = np.zeros((28 * 6, 5 * 160), f32)
    for kh in range(5):
        b2k = np.zeros((14 * 6, 10 * 16), f32)   # [(q,ci), (j,co)] = w2[co,ci,kh,q-j]
        for kw in range(5):
            for j in range(10):
                b2k[(j + kw) * 6:(j + kw + 1) * 6, j * 16:(j + 1) * 16] = \
                    w2[:, :, kh, kw].T
        b2p[:, kh * 160:(kh + 1) * 160] = poolc1 @ b2k

    # Stage-1 height pooling fused with conv2's height taps (row selectors).
    rowsel1 = np.zeros((5, n * 10, n * 28), f32)
    for kh in range(5):
        for img in range(n):
            for i in range(10):
                for da in range(2):
                    rowsel1[kh, img * 10 + i, img * 28 + 2 * (i + kh) + da] = 0.5

    # Linear(400,120) regrouped per pooled row p (PyTorch flatten = c*25+p*5+q),
    # with stage-2 width pooling folded in.
    cw = np.zeros((10 * 16, 5 * 120), f32)
    for pp in range(5):
        w3p = np.zeros((5 * 16, 120), f32)
        for q in range(5):
            for co in range(16):
                w3p[q * 16 + co] = w3[co * 25 + pp * 5 + q]
        cw[:, pp * 120:(pp + 1) * 120] = poolc2 @ w3p

    # Stage-2 height pooling fused with the flatten's p-grouping.
    rs2 = np.zeros((5, n, n * 10), f32)
    for pp in range(5):
        for img in range(n):
            for di in range(2):
                rs2[pp, img, img * 10 + 2 * pp + di] = 0.5

    # BN2d statistic fold matrices (channel-group sum / element count).
    a1 = np.kron(np.ones((28, 28), f32), np.eye(6, dtype=f32)) / (n * 28 * 28)
    a2 = np.kron(np.ones((10, 10), f32), np.eye(16, dtype=f32)) / (n * 10 * 10)

    def row(v, reps=1):
        return jnp.asarray(np.tile(np.asarray(v, f32), reps)[None, :])

    bf16 = jnp.bfloat16
    return (
        jnp.asarray(b1, bf16), row(p["g1"], 28), row(p["be1"], 28), jnp.asarray(a1),
        jnp.asarray(b2p, bf16), jnp.asarray(rowsel1),
        row(p["g2"], 10), row(p["be2"], 10), jnp.asarray(a2),
        jnp.asarray(cw, bf16), jnp.asarray(rs2),
        row(p["g3"]), row(p["be3"]),
        jnp.asarray(w4, bf16), row(p["g4"]), row(p["be4"]),
        jnp.asarray(w5, bf16), row(p["b5"]),
    )


if __name__ == "__main__":
    key = jax.random.PRNGKey(0)
    kx, kp = jax.random.split(key)
    # LeNet's 16*5*5 flatten implies 28x28 single-channel inputs; batch=2.
    x = jax.random.normal(kx, (2, 1, 28, 28), jnp.float32)
    ops = prepare_params(init_params(kp), batch=x.shape[0])

    out = jax.jit(lenet_forward)(x, ops)
    out = jax.block_until_ready(out)
    assert out.shape == (2, 10) and out.dtype == jnp.float32
    assert bool(jnp.all(jnp.isfinite(out)))
    print("KERNEL_OK")
</pallas_src>

<mosaic_0001>
module attributes {stable_mosaic.version = 11 : i64} {
  func.func @lenet_kernel(%arg0: memref<56x160xbf16, #tpu.memory_space<vmem>>, %arg1: memref<160x168xbf16, #tpu.memory_space<vmem>>, %arg2: memref<1x168xf32, #tpu.memory_space<vmem>>, %arg3: memref<1x168xf32, #tpu.memory_space<vmem>>, %arg4: memref<168x168xf32, #tpu.memory_space<vmem>>, %arg5: memref<168x800xbf16, #tpu.memory_space<vmem>>, %arg6: memref<5x20x56xf32, #tpu.memory_space<vmem>>, %arg7: memref<1x160xf32, #tpu.memory_space<vmem>>, %arg8: memref<1x160xf32, #tpu.memory_space<vmem>>, %arg9: memref<160x160xf32, #tpu.memory_space<vmem>>, %arg10: memref<160x600xbf16, #tpu.memory_space<vmem>>, %arg11: memref<5x2x20xf32, #tpu.memory_space<vmem>>, %arg12: memref<1x120xf32, #tpu.memory_space<vmem>>, %arg13: memref<1x120xf32, #tpu.memory_space<vmem>>, %arg14: memref<120x84xbf16, #tpu.memory_space<vmem>>, %arg15: memref<1x84xf32, #tpu.memory_space<vmem>>, %arg16: memref<1x84xf32, #tpu.memory_space<vmem>>, %arg17: memref<84x10xbf16, #tpu.memory_space<vmem>>, %arg18: memref<1x10xf32, #tpu.memory_space<vmem>>, %arg19: memref<2x10xf32, #tpu.memory_space<vmem>>) attributes {dimension_semantics = [], scalar_prefetch = 0 : i64, scratch_operands = 0 : i64, tpu.core_type = #tpu.core_type<tc>} {
    %c0 = arith.constant 0 : index
    %c0_0 = arith.constant 0 : index
    %0 = vector.load %arg0[%c0, %c0_0] : memref<56x160xbf16, #tpu.memory_space<vmem>>, vector<56x160xbf16>
    %c0_1 = arith.constant 0 : index
    %c0_2 = arith.constant 0 : index
    %1 = vector.load %arg1[%c0_1, %c0_2] : memref<160x168xbf16, #tpu.memory_space<vmem>>, vector<160x168xbf16>
    %cst = arith.constant dense<0.000000e+00> : vector<56x168xf32>
    %2 = tpu.matmul %0, %1, %cst {dimension_numbers = #tpu.dot_dimension_numbers<[1], [0], [0], [1], [0, 0, 1, 1], [], []>} : vector<56x160xbf16>, vector<160x168xbf16>, vector<56x168xf32> -> vector<56x168xf32>
    %c0_3 = arith.constant 0 : index
    %c0_4 = arith.constant 0 : index
    %3 = vector.load %arg4[%c0_3, %c0_4] : memref<168x168xf32, #tpu.memory_space<vmem>>, vector<168x168xf32>
    %c0_5 = arith.constant 0 : index
    %c0_6 = arith.constant 0 : index
    %4 = vector.load %arg2[%c0_5, %c0_6] : memref<1x168xf32, #tpu.memory_space<vmem>>, vector<1x168xf32>
    %c0_7 = arith.constant 0 : index
    %c0_8 = arith.constant 0 : index
    %5 = vector.load %arg3[%c0_7, %c0_8] : memref<1x168xf32, #tpu.memory_space<vmem>>, vector<1x168xf32>
    %cst_9 = arith.constant dense<0.000000e+00> : vector<56x168xf32>
    %6 = tpu.matmul %2, %3, %cst_9 {dimension_numbers = #tpu.dot_dimension_numbers<[1], [0], [0], [1], [0, 0, 1, 1], [], []>} : vector<56x168xf32>, vector<168x168xf32>, vector<56x168xf32> -> vector<56x168xf32>
    %cst_10 = arith.constant dense<0.000000e+00> : vector<168xf32>
    %7 = vector.multi_reduction <add>, %6, %cst_10 [0] : vector<56x168xf32> to vector<168xf32>
    %8 = vector.shape_cast %7 : vector<168xf32> to vector<1x168xf32>
    %9 = vector.broadcast %8 : vector<1x168xf32> to vector<56x168xf32>
    %10 = arith.subf %2, %9 : vector<56x168xf32>
    %11 = arith.mulf %10, %10 : vector<56x168xf32>
    %cst_11 = arith.constant dense<0.000000e+00> : vector<56x168xf32>
    %12 = tpu.matmul %11, %3, %cst_11 {dimension_numbers = #tpu.dot_dimension_numbers<[1], [0], [0], [1], [0, 0, 1, 1], [], []>} : vector<56x168xf32>, vector<168x168xf32>, vector<56x168xf32> -> vector<56x168xf32>
    %cst_12 = arith.constant dense<0.000000e+00> : vector<168xf32>
    %13 = vector.multi_reduction <add>, %12, %cst_12 [0] : vector<56x168xf32> to vector<168xf32>
    %14 = vector.shape_cast %13 : vector<168xf32> to vector<1x168xf32>
    %15 = vector.broadcast %4 : vector<1x168xf32> to vector<56x168xf32>
    %16 = arith.mulf %15, %10 : vector<56x168xf32>
    %cst_13 = arith.constant 9.99999974E-6 : f32
    %17 = vector.broadcast %cst_13 : f32 to vector<1x168xf32>
    %18 = arith.addf %14, %17 : vector<1x168xf32>
    %19 = math.rsqrt %18 : vector<1x168xf32>
    %20 = vector.broadcast %19 : vector<1x168xf32> to vector<56x168xf32>
    %21 = arith.mulf %16, %20 : vector<56x168xf32>
    %22 = vector.broadcast %5 : vector<1x168xf32> to vector<56x168xf32>
    %23 = arith.addf %21, %22 : vector<56x168xf32>
    %cst_14 = arith.constant 0.000000e+00 : f32
    %24 = vector.broadcast %cst_14 : f32 to vector<56x168xf32>
    %25 = arith.subf %24, %23 : vector<56x168xf32>
    %26 = math.exp %25 : vector<56x168xf32>
    %cst_15 = arith.constant 1.000000e+00 : f32
    %27 = vector.broadcast %cst_15 : f32 to vector<56x168xf32>
    %28 = arith.addf %27, %26 : vector<56x168xf32>
    %cst_16 = arith.constant 1.000000e+00 : f32
    %29 = vector.broadcast %cst_16 : f32 to vector<56x168xf32>
    %30 = arith.divf %29, %28 : vector<56x168xf32>
    %31 = arith.truncf %30 : vector<56x168xf32> to vector<56x168xbf16>
    %c0_17 = arith.constant 0 : index
    %c0_18 = arith.constant 0 : index
    %32 = vector.load %arg5[%c0_17, %c0_18] : memref<168x800xbf16, #tpu.memory_space<vmem>>, vector<168x800xbf16>
    %cst_19 = arith.constant dense<0.000000e+00> : vector<56x800xf32>
    %33 = tpu.matmul %31, %32, %cst_19 {dimension_numbers = #tpu.dot_dimension_numbers<[1], [0], [0], [1], [0, 0, 1, 1], [], []>} : vector<56x168xbf16>, vector<168x800xbf16>, vector<56x800xf32> -> vector<56x800xf32>
    %c0_20 = arith.constant 0 : index
    %c0_21 = arith.constant 0 : index
    %c0_22 = arith.constant 0 : index
    %34 = vector.load %arg6[%c0_20, %c0_21, %c0_22] : memref<5x20x56xf32, #tpu.memory_space<vmem>>, vector<1x20x56xf32>
    %35 = vector.shape_cast %34 : vector<1x20x56xf32> to vector<20x56xf32>
    %36 = vector.extract_strided_slice %33 {offsets = [0, 0], sizes = [56, 160], strides = [1, 1]} : vector<56x800xf32> to vector<56x160xf32>
    %cst_23 = arith.constant dense<0.000000e+00> : vector<20x160xf32>
    %37 = tpu.matmul %35, %36, %cst_23 {dimension_numbers = #tpu.dot_dimension_numbers<[1], [0], [0], [1], [0, 0, 1, 1], [], []>} : vector<20x56xf32>, vector<56x160xf32>, vector<20x160xf32> -> vector<20x160xf32>
    %c1 = arith.constant 1 : index
    %c0_24 = arith.constant 0 : index
    %c0_25 = arith.constant 0 : index
    %38 = vector.load %arg6[%c1, %c0_24, %c0_25] : memref<5x20x56xf32, #tpu.memory_space<vmem>>, vector<1x20x56xf32>
    %39 = vector.shape_cast %38 : vector<1x20x56xf32> to vector<20x56xf32>
    %40 = vector.extract_strided_slice %33 {offsets = [0, 160], sizes = [56, 160], strides = [1, 1]} : vector<56x800xf32> to vector<56x160xf32>
    %cst_26 = arith.constant dense<0.000000e+00> : vector<20x160xf32>
    %41 = tpu.matmul %39, %40, %cst_26 {dimension_numbers = #tpu.dot_dimension_numbers<[1], [0], [0], [1], [0, 0, 1, 1], [], []>} : vector<20x56xf32>, vector<56x160xf32>, vector<20x160xf32> -> vector<20x160xf32>
    %42 = arith.addf %37, %41 : vector<20x160xf32>
    %c2 = arith.constant 2 : index
    %c0_27 = arith.constant 0 : index
    %c0_28 = arith.constant 0 : index
    %43 = vector.load %arg6[%c2, %c0_27, %c0_28] : memref<5x20x56xf32, #tpu.memory_space<vmem>>, vector<1x20x56xf32>
    %44 = vector.shape_cast %43 : vector<1x20x56xf32> to vector<20x56xf32>
    %45 = vector.extract_strided_slice %33 {offsets = [0, 320], sizes = [56, 160], strides = [1, 1]} : vector<56x800xf32> to vector<56x160xf32>
    %cst_29 = arith.constant dense<0.000000e+00> : vector<20x160xf32>
    %46 = tpu.matmul %44, %45, %cst_29 {dimension_numbers = #tpu.dot_dimension_numbers<[1], [0], [0], [1], [0, 0, 1, 1], [], []>} : vector<20x56xf32>, vector<56x160xf32>, vector<20x160xf32> -> vector<20x160xf32>
    %47 = arith.addf %42, %46 : vector<20x160xf32>
    %c3 = arith.constant 3 : index
    %c0_30 = arith.constant 0 : index
    %c0_31 = arith.constant 0 : index
    %48 = vector.load %arg6[%c3, %c0_30, %c0_31] : memref<5x20x56xf32, #tpu.memory_space<vmem>>, vector<1x20x56xf32>
    %49 = vector.shape_cast %48 : vector<1x20x56xf32> to vector<20x56xf32>
    %50 = vector.extract_strided_slice %33 {offsets = [0, 480], sizes = [56, 160], strides = [1, 1]} : vector<56x800xf32> to vector<56x160xf32>
    %cst_32 = arith.constant dense<0.000000e+00> : vector<20x160xf32>
    %51 = tpu.matmul %49, %50, %cst_32 {dimension_numbers = #tpu.dot_dimension_numbers<[1], [0], [0], [1], [0, 0, 1, 1], [], []>} : vector<20x56xf32>, vector<56x160xf32>, vector<20x160xf32> -> vector<20x160xf32>
    %52 = arith.addf %47, %51 : vector<20x160xf32>
    %c4 = arith.constant 4 : index
    %c0_33 = arith.constant 0 : index
    %c0_34 = arith.constant 0 : index
    %53 = vector.load %arg6[%c4, %c0_33, %c0_34] : memref<5x20x56xf32, #tpu.memory_space<vmem>>, vector<1x20x56xf32>
    %54 = vector.shape_cast %53 : vector<1x20x56xf32> to vector<20x56xf32>
    %55 = vector.extract_strided_slice %33 {offsets = [0, 640], sizes = [56, 160], strides = [1, 1]} : vector<56x800xf32> to vector<56x160xf32>
    %cst_35 = arith.constant dense<0.000000e+00> : vector<20x160xf32>
    %56 = tpu.matmul %54, %55, %cst_35 {dimension_numbers = #tpu.dot_dimension_numbers<[1], [0], [0], [1], [0, 0, 1, 1], [], []>} : vector<20x56xf32>, vector<56x160xf32>, vector<20x160xf32> -> vector<20x160xf32>
    %57 = arith.addf %52, %56 : vector<20x160xf32>
    %c0_36 = arith.constant 0 : index
    %c0_37 = arith.constant 0 : index
    %58 = vector.load %arg9[%c0_36, %c0_37] : memref<160x160xf32, #tpu.memory_space<vmem>>, vector<160x160xf32>
    %c0_38 = arith.constant 0 : index
    %c0_39 = arith.constant 0 : index
    %59 = vector.load %arg7[%c0_38, %c0_39] : memref<1x160xf32, #tpu.memory_space<vmem>>, vector<1x160xf32>
    %c0_40 = arith.constant 0 : index
    %c0_41 = arith.constant 0 : index
    %60 = vector.load %arg8[%c0_40, %c0_41] : memref<1x160xf32, #tpu.memory_space<vmem>>, vector<1x160xf32>
    %cst_42 = arith.constant dense<0.000000e+00> : vector<20x160xf32>
    %61 = tpu.matmul %57, %58, %cst_42 {dimension_numbers = #tpu.dot_dimension_numbers<[1], [0], [0], [1], [0, 0, 1, 1], [], []>} : vector<20x160xf32>, vector<160x160xf32>, vector<20x160xf32> -> vector<20x160xf32>
    %cst_43 = arith.constant dense<0.000000e+00> : vector<160xf32>
    %62 = vector.multi_reduction <add>, %61, %cst_43 [0] : vector<20x160xf32> to vector<160xf32>
    %63 = vector.shape_cast %62 : vector<160xf32> to vector<1x160xf32>
    %64 = vector.broadcast %63 : vector<1x160xf32> to vector<20x160xf32>
    %65 = arith.subf %57, %64 : vector<20x160xf32>
    %66 = arith.mulf %65, %65 : vector<20x160xf32>
    %cst_44 = arith.constant dense<0.000000e+00> : vector<20x160xf32>
    %67 = tpu.matmul %66, %58, %cst_44 {dimension_numbers = #tpu.dot_dimension_numbers<[1], [0], [0], [1], [0, 0, 1, 1], [], []>} : vector<20x160xf32>, vector<160x160xf32>, vector<20x160xf32> -> vector<20x160xf32>
    %cst_45 = arith.constant dense<0.000000e+00> : vector<160xf32>
    %68 = vector.multi_reduction <add>, %67, %cst_45 [0] : vector<20x160xf32> to vector<160xf32>
    %69 = vector.shape_cast %68 : vector<160xf32> to vector<1x160xf32>
    %70 = vector.broadcast %59 : vector<1x160xf32> to vector<20x160xf32>
    %71 = arith.mulf %70, %65 : vector<20x160xf32>
    %cst_46 = arith.constant 9.99999974E-6 : f32
    %72 = vector.broadcast %cst_46 : f32 to vector<1x160xf32>
    %73 = arith.addf %69, %72 : vector<1x160xf32>
    %74 = math.rsqrt %73 : vector<1x160xf32>
    %75 = vector.broadcast %74 : vector<1x160xf32> to vector<20x160xf32>
    %76 = arith.mulf %71, %75 : vector<20x160xf32>
    %77 = vector.broadcast %60 : vector<1x160xf32> to vector<20x160xf32>
    %78 = arith.addf %76, %77 : vector<20x160xf32>
    %cst_47 = arith.constant 0.000000e+00 : f32
    %79 = vector.broadcast %cst_47 : f32 to vector<20x160xf32>
    %80 = arith.subf %79, %78 : vector<20x160xf32>
    %81 = math.exp %80 : vector<20x160xf32>
    %cst_48 = arith.constant 1.000000e+00 : f32
    %82 = vector.broadcast %cst_48 : f32 to vector<20x160xf32>
    %83 = arith.addf %82, %81 : vector<20x160xf32>
    %cst_49 = arith.constant 1.000000e+00 : f32
    %84 = vector.broadcast %cst_49 : f32 to vector<20x160xf32>
    %85 = arith.divf %84, %83 : vector<20x160xf32>
    %86 = arith.truncf %85 : vector<20x160xf32> to vector<20x160xbf16>
    %c0_50 = arith.constant 0 : index
    %c0_51 = arith.constant 0 : index
    %87 = vector.load %arg10[%c0_50, %c0_51] : memref<160x600xbf16, #tpu.memory_space<vmem>>, vector<160x600xbf16>
    %cst_52 = arith.constant dense<0.000000e+00> : vector<20x600xf32>
    %88 = tpu.matmul %86, %87, %cst_52 {dimension_numbers = #tpu.dot_dimension_numbers<[1], [0], [0], [1], [0, 0, 1, 1], [], []>} : vector<20x160xbf16>, vector<160x600xbf16>, vector<20x600xf32> -> vector<20x600xf32>
    %c0_53 = arith.constant 0 : index
    %c0_54 = arith.constant 0 : index
    %c0_55 = arith.constant 0 : index
    %89 = vector.load %arg11[%c0_53, %c0_54, %c0_55] : memref<5x2x20xf32, #tpu.memory_space<vmem>>, vector<1x2x20xf32>
    %90 = vector.shape_cast %89 : vector<1x2x20xf32> to vector<2x20xf32>
    %91 = vector.extract_strided_slice %88 {offsets = [0, 0], sizes = [20, 120], strides = [1, 1]} : vector<20x600xf32> to vector<20x120xf32>
    %cst_56 = arith.constant dense<0.000000e+00> : vector<2x120xf32>
    %92 = tpu.matmul %90, %91, %cst_56 {dimension_numbers = #tpu.dot_dimension_numbers<[1], [0], [0], [1], [0, 0, 1, 1], [], []>} : vector<2x20xf32>, vector<20x120xf32>, vector<2x120xf32> -> vector<2x120xf32>
    %c1_57 = arith.constant 1 : index
    %c0_58 = arith.constant 0 : index
    %c0_59 = arith.constant 0 : index
    %93 = vector.load %arg11[%c1_57, %c0_58, %c0_59] : memref<5x2x20xf32, #tpu.memory_space<vmem>>, vector<1x2x20xf32>
    %94 = vector.shape_cast %93 : vector<1x2x20xf32> to vector<2x20xf32>
    %95 = vector.extract_strided_slice %88 {offsets = [0, 120], sizes = [20, 120], strides = [1, 1]} : vector<20x600xf32> to vector<20x120xf32>
    %cst_60 = arith.constant dense<0.000000e+00> : vector<2x120xf32>
    %96 = tpu.matmul %94, %95, %cst_60 {dimension_numbers = #tpu.dot_dimension_numbers<[1], [0], [0], [1], [0, 0, 1, 1], [], []>} : vector<2x20xf32>, vector<20x120xf32>, vector<2x120xf32> -> vector<2x120xf32>
    %97 = arith.addf %92, %96 : vector<2x120xf32>
    %c2_61 = arith.constant 2 : index
    %c0_62 = arith.constant 0 : index
    %c0_63 = arith.constant 0 : index
    %98 = vector.load %arg11[%c2_61, %c0_62, %c0_63] : memref<5x2x20xf32, #tpu.memory_space<vmem>>, vector<1x2x20xf32>
    %99 = vector.shape_cast %98 : vector<1x2x20xf32> to vector<2x20xf32>
    %100 = vector.extract_strided_slice %88 {offsets = [0, 240], sizes = [20, 120], strides = [1, 1]} : vector<20x600xf32> to vector<20x120xf32>
    %cst_64 = arith.constant dense<0.000000e+00> : vector<2x120xf32>
    %101 = tpu.matmul %99, %100, %cst_64 {dimension_numbers = #tpu.dot_dimension_numbers<[1], [0], [0], [1], [0, 0, 1, 1], [], []>} : vector<2x20xf32>, vector<20x120xf32>, vector<2x120xf32> -> vector<2x120xf32>
    %102 = arith.addf %97, %101 : vector<2x120xf32>
    %c3_65 = arith.constant 3 : index
    %c0_66 = arith.constant 0 : index
    %c0_67 = arith.constant 0 : index
    %103 = vector.load %arg11[%c3_65, %c0_66, %c0_67] : memref<5x2x20xf32, #tpu.memory_space<vmem>>, vector<1x2x20xf32>
    %104 = vector.shape_cast %103 : vector<1x2x20xf32> to vector<2x20xf32>
    %105 = vector.extract_strided_slice %88 {offsets = [0, 360], sizes = [20, 120], strides = [1, 1]} : vector<20x600xf32> to vector<20x120xf32>
    %cst_68 = arith.constant dense<0.000000e+00> : vector<2x120xf32>
    %106 = tpu.matmul %104, %105, %cst_68 {dimension_numbers = #tpu.dot_dimension_numbers<[1], [0], [0], [1], [0, 0, 1, 1], [], []>} : vector<2x20xf32>, vector<20x120xf32>, vector<2x120xf32> -> vector<2x120xf32>
    %107 = arith.addf %102, %106 : vector<2x120xf32>
    %c4_69 = arith.constant 4 : index
    %c0_70 = arith.constant 0 : index
    %c0_71 = arith.constant 0 : index
    %108 = vector.load %arg11[%c4_69, %c0_70, %c0_71] : memref<5x2x20xf32, #tpu.memory_space<vmem>>, vector<1x2x20xf32>
    %109 = vector.shape_cast %108 : vector<1x2x20xf32> to vector<2x20xf32>
    %110 = vector.extract_strided_slice %88 {offsets = [0, 480], sizes = [20, 120], strides = [1, 1]} : vector<20x600xf32> to vector<20x120xf32>
    %cst_72 = arith.constant dense<0.000000e+00> : vector<2x120xf32>
    %111 = tpu.matmul %109, %110, %cst_72 {dimension_numbers = #tpu.dot_dimension_numbers<[1], [0], [0], [1], [0, 0, 1, 1], [], []>} : vector<2x20xf32>, vector<20x120xf32>, vector<2x120xf32> -> vector<2x120xf32>
    %112 = arith.addf %107, %111 : vector<2x120xf32>
    %c0_73 = arith.constant 0 : index
    %c0_74 = arith.constant 0 : index
    %113 = vector.load %arg12[%c0_73, %c0_74] : memref<1x120xf32, #tpu.memory_space<vmem>>, vector<1x120xf32>
    %c0_75 = arith.constant 0 : index
    %c0_76 = arith.constant 0 : index
    %114 = vector.load %arg13[%c0_75, %c0_76] : memref<1x120xf32, #tpu.memory_space<vmem>>, vector<1x120xf32>
    %cst_77 = arith.constant dense<0.000000e+00> : vector<120xf32>
    %115 = vector.multi_reduction <add>, %112, %cst_77 [0] : vector<2x120xf32> to vector<120xf32>
    %116 = vector.shape_cast %115 : vector<120xf32> to vector<1x120xf32>
    %cst_78 = arith.constant 2.000000e+00 : f32
    %117 = vector.broadcast %cst_78 : f32 to vector<1x120xf32>
    %118 = arith.divf %116, %117 : vector<1x120xf32>
    %119 = vector.broadcast %118 : vector<1x120xf32> to vector<2x120xf32>
    %120 = arith.subf %112, %119 : vector<2x120xf32>
    %121 = arith.mulf %120, %120 : vector<2x120xf32>
    %cst_79 = arith.constant dense<0.000000e+00> : vector<120xf32>
    %122 = vector.multi_reduction <add>, %121, %cst_79 [0] : vector<2x120xf32> to vector<120xf32>
    %123 = vector.shape_cast %122 : vector<120xf32> to vector<1x120xf32>
    %cst_80 = arith.constant 2.000000e+00 : f32
    %124 = vector.broadcast %cst_80 : f32 to vector<1x120xf32>
    %125 = arith.divf %123, %124 : vector<1x120xf32>
    %126 = vector.broadcast %113 : vector<1x120xf32> to vector<2x120xf32>
    %127 = arith.mulf %126, %120 : vector<2x120xf32>
    %cst_81 = arith.constant 9.99999974E-6 : f32
    %128 = vector.broadcast %cst_81 : f32 to vector<1x120xf32>
    %129 = arith.addf %125, %128 : vector<1x120xf32>
    %130 = math.rsqrt %129 : vector<1x120xf32>
    %131 = vector.broadcast %130 : vector<1x120xf32> to vector<2x120xf32>
    %132 = arith.mulf %127, %131 : vector<2x120xf32>
    %133 = vector.broadcast %114 : vector<1x120xf32> to vector<2x120xf32>
    %134 = arith.addf %132, %133 : vector<2x120xf32>
    %cst_82 = arith.constant 0.000000e+00 : f32
    %135 = vector.broadcast %cst_82 : f32 to vector<2x120xf32>
    %136 = arith.subf %135, %134 : vector<2x120xf32>
    %137 = math.exp %136 : vector<2x120xf32>
    %cst_83 = arith.constant 1.000000e+00 : f32
    %138 = vector.broadcast %cst_83 : f32 to vector<2x120xf32>
    %139 = arith.addf %138, %137 : vector<2x120xf32>
    %cst_84 = arith.constant 1.000000e+00 : f32
    %140 = vector.broadcast %cst_84 : f32 to vector<2x120xf32>
    %141 = arith.divf %140, %139 : vector<2x120xf32>
    %142 = arith.truncf %141 : vector<2x120xf32> to vector<2x120xbf16>
    %c0_85 = arith.constant 0 : index
    %c0_86 = arith.constant 0 : index
    %143 = vector.load %arg14[%c0_85, %c0_86] : memref<120x84xbf16, #tpu.memory_space<vmem>>, vector<120x84xbf16>
    %cst_87 = arith.constant dense<0.000000e+00> : vector<2x84xf32>
    %144 = tpu.matmul %142, %143, %cst_87 {dimension_numbers = #tpu.dot_dimension_numbers<[1], [0], [0], [1], [0, 0, 1, 1], [], []>} : vector<2x120xbf16>, vector<120x84xbf16>, vector<2x84xf32> -> vector<2x84xf32>
    %c0_88 = arith.constant 0 : index
    %c0_89 = arith.constant 0 : index
    %145 = vector.load %arg15[%c0_88, %c0_89] : memref<1x84xf32, #tpu.memory_space<vmem>>, vector<1x84xf32>
    %c0_90 = arith.constant 0 : index
    %c0_91 = arith.constant 0 : index
    %146 = vector.load %arg16[%c0_90, %c0_91] : memref<1x84xf32, #tpu.memory_space<vmem>>, vector<1x84xf32>
    %cst_92 = arith.constant dense<0.000000e+00> : vector<84xf32>
    %147 = vector.multi_reduction <add>, %144, %cst_92 [0] : vector<2x84xf32> to vector<84xf32>
    %148 = vector.shape_cast %147 : vector<84xf32> to vector<1x84xf32>
    %cst_93 = arith.constant 2.000000e+00 : f32
    %149 = vector.broadcast %cst_93 : f32 to vector<1x84xf32>
    %150 = arith.divf %148, %149 : vector<1x84xf32>
    %151 = vector.broadcast %150 : vector<1x84xf32> to vector<2x84xf32>
    %152 = arith.subf %144, %151 : vector<2x84xf32>
    %153 = arith.mulf %152, %152 : vector<2x84xf32>
    %cst_94 = arith.constant dense<0.000000e+00> : vector<84xf32>
    %154 = vector.multi_reduction <add>, %153, %cst_94 [0] : vector<2x84xf32> to vector<84xf32>
    %155 = vector.shape_cast %154 : vector<84xf32> to vector<1x84xf32>
    %cst_95 = arith.constant 2.000000e+00 : f32
    %156 = vector.broadcast %cst_95 : f32 to vector<1x84xf32>
    %157 = arith.divf %155, %156 : vector<1x84xf32>
    %158 = vector.broadcast %145 : vector<1x84xf32> to vector<2x84xf32>
    %159 = arith.mulf %158, %152 : vector<2x84xf32>
    %cst_96 = arith.constant 9.99999974E-6 : f32
    %160 = vector.broadcast %cst_96 : f32 to vector<1x84xf32>
    %161 = arith.addf %157, %160 : vector<1x84xf32>
    %162 = math.rsqrt %161 : vector<1x84xf32>
    %163 = vector.broadcast %162 : vector<1x84xf32> to vector<2x84xf32>
    %164 = arith.mulf %159, %163 : vector<2x84xf32>
    %165 = vector.broadcast %146 : vector<1x84xf32> to vector<2x84xf32>
    %166 = arith.addf %164, %165 : vector<2x84xf32>
    %cst_97 = arith.constant 0.000000e+00 : f32
    %167 = vector.broadcast %cst_97 : f32 to vector<2x84xf32>
    %168 = arith.subf %167, %166 : vector<2x84xf32>
    %169 = math.exp %168 : vector<2x84xf32>
    %cst_98 = arith.constant 1.000000e+00 : f32
    %170 = vector.broadcast %cst_98 : f32 to vector<2x84xf32>
    %171 = arith.addf %170, %169 : vector<2x84xf32>
    %cst_99 = arith.constant 1.000000e+00 : f32
    %172 = vector.broadcast %cst_99 : f32 to vector<2x84xf32>
    %173 = arith.divf %172, %171 : vector<2x84xf32>
    %174 = arith.truncf %173 : vector<2x84xf32> to vector<2x84xbf16>
    %c0_100 = arith.constant 0 : index
    %c0_101 = arith.constant 0 : index
    %175 = vector.load %arg17[%c0_100, %c0_101] : memref<84x10xbf16, #tpu.memory_space<vmem>>, vector<84x10xbf16>
    %cst_102 = arith.constant dense<0.000000e+00> : vector<2x10xf32>
    %176 = tpu.matmul %174, %175, %cst_102 {dimension_numbers = #tpu.dot_dimension_numbers<[1], [0], [0], [1], [0, 0, 1, 1], [], []>} : vector<2x84xbf16>, vector<84x10xbf16>, vector<2x10xf32> -> vector<2x10xf32>
    %c0_103 = arith.constant 0 : index
    %c0_104 = arith.constant 0 : index
    %177 = vector.load %arg18[%c0_103, %c0_104] : memref<1x10xf32, #tpu.memory_space<vmem>>, vector<1x10xf32>
    %178 = vector.broadcast %177 : vector<1x10xf32> to vector<2x10xf32>
    %179 = arith.addf %176, %178 : vector<2x10xf32>
    %c0_105 = arith.constant 0 : index
    %c0_106 = arith.constant 0 : index
    %180 = vector.load %arg19[%c0_105, %c0_106] : memref<2x10xf32, #tpu.memory_space<vmem>>, vector<2x10xf32>
    tpu.vector_store %arg19[%c0_105, %c0_106], %179 {strides = array<i32>} : memref<2x10xf32, #tpu.memory_space<vmem>>, vector<2x10xf32>,
    return
  }
}

</mosaic_0001>

<llo_original>
// kernel: lenet_forward.1
$region0: #{lenet_forward.1}
  #allocation0 [shape = 'u32[]', space=smem, size = 0x4, offset = 0x4, fixed_abs, tag = 'smem constant byte address 0x4 - core index']
  #allocation1 [shape = 'u32[72,128]{1,0:T(1,128)}', space=vmem, size = 0x9000, scoped, tag = 'internal scratch']
  %s0 = inlined_call_operand.vmem [shape: bf16[56,160], index: 0, kind: input, shape index: {}]
  %s1 = inlined_call_operand.hbm [shape: bf16[160,168], index: 1, kind: input, shape index: {}]
  %s2 = inlined_call_operand.vmem [shape: f32[1,168], index: 2, kind: input, shape index: {}]
  %s3 = inlined_call_operand.vmem [shape: f32[1,168], index: 3, kind: input, shape index: {}]
  %s4 = inlined_call_operand.hbm [shape: f32[168,168], index: 4, kind: input, shape index: {}]
  %s5 = inlined_call_operand.vmem [shape: bf16[168,800], index: 5, kind: input, shape index: {}]
  %s6 = inlined_call_operand.vmem [shape: f32[5,20,56], index: 6, kind: input, shape index: {}]
  %s7 = inlined_call_operand.vmem [shape: f32[1,160], index: 7, kind: input, shape index: {}]
  %s8 = inlined_call_operand.vmem [shape: f32[1,160], index: 8, kind: input, shape index: {}]
  %s9 = inlined_call_operand.hbm [shape: f32[160,160], index: 9, kind: input, shape index: {}]
  %s10 = inlined_call_operand.vmem [shape: bf16[160,600], index: 10, kind: input, shape index: {}]
  %s11 = inlined_call_operand.vmem [shape: f32[5,2,20], index: 11, kind: input, shape index: {}]
  %s12 = inlined_call_operand.vmem [shape: f32[1,120], index: 12, kind: input, shape index: {}]
  %s13 = inlined_call_operand.vmem [shape: f32[1,120], index: 13, kind: input, shape index: {}]
  %s14 = inlined_call_operand.vmem [shape: bf16[120,84], index: 14, kind: input, shape index: {}]
  %s15 = inlined_call_operand.vmem [shape: f32[1,84], index: 15, kind: input, shape index: {}]
  %s16 = inlined_call_operand.vmem [shape: f32[1,84], index: 16, kind: input, shape index: {}]
  %s17 = inlined_call_operand.vmem [shape: bf16[84,10], index: 17, kind: input, shape index: {}]
  %s18 = inlined_call_operand.vmem [shape: f32[1,10], index: 18, kind: input, shape index: {}]
  %s19 = inlined_call_operand.hbm [shape: f32[2,10], index: 19, kind: output, shape index: {}]
  %s20 = sld [smem:[#allocation0]]
  $region98: #{lenet_forward.1} parent=0
    _
  %s22 = ssub.s32 1, %s20
  %s23 = scalar_select 0, %s22, %s20
  $region1: #{lenet_forward.1} parent=0
    #allocation2 [shape = 'u8[81920]{0}', space=vmem, size = 0x14000, scoped, tag = 'input window, operand 1, single buffered']
    #allocation3 [shape = 's32[1]{0}', space=sflag, size = 0x4, scoped, tag = 'scoped memory for lenet_forward.1']
    #allocation4 [shape = 's32[1]{0}', space=sflag, size = 0x4, scoped, tag = 'scoped memory for lenet_forward.1']
    #allocation5 [shape = 'u8[172032]{0}', space=vmem, size = 0x2a000, scoped, tag = 'input window, operand 4, single buffered']
    #allocation6 [shape = 's32[1]{0}', space=sflag, size = 0x4, scoped, tag = 'scoped memory for lenet_forward.1']
    #allocation7 [shape = 'u8[163840]{0}', space=vmem, size = 0x28000, scoped, tag = 'input window, operand 9, single buffered']
    #allocation8 [shape = 'u8[1024]{0}', space=vmem, size = 0x400, scoped, tag = 'output window, operand 0, single buffered']
    %24 = vsyncpa [#allocation3], 0
    %25 = vsyncpa [#allocation6], 0
    %26 = vsyncpa [#allocation4], 0
    // Predicated region
    $region2: #{lenet_forward.1} parent=1 // pred_check
      _
    $region3: #{lenet_forward.1} parent=1 // pred_check_branch
      %28 = sbr.rel (0) target = $region5
    $region4: #{lenet_forward.1} parent=1 // pred_region
      _
    $region5: #{lenet_forward.1} parent=1 // pred_fallthru
      _
    // Predicated region
    $region6: #{lenet_forward.1} parent=1 // pred_check
      _
    $region7: #{lenet_forward.1} parent=1 // pred_check_branch
      %30 = sbr.rel (0) target = $region9
    $region8: #{lenet_forward.1} parent=1 // pred_region
      %32 = vsyncadd [#allocation3], 0
      %s33 = sshll.u32 %s1, 4
      %s34 = int_to_ptr.hbm [resolvable:$true] %s33
      %s35 = sshll.u32 [#allocation2], 4
      %s36 = int_to_ptr.vmem [resolvable:$true] %s35
      %41 = dma.hbm_to_vmem [thread:$0]  %s34, 2560, %s36, [#allocation3], 128, 128, 8
    $region9: #{lenet_forward.1} parent=1 // pred_fallthru
      _
    // Predicated region
    $region10: #{lenet_forward.1} parent=1 // pred_check
      _
    $region11: #{lenet_forward.1} parent=1 // pred_check_branch
      %43 = sbr.rel (0) target = $region13
    $region12: #{lenet_forward.1} parent=1 // pred_region
      _
    $region13: #{lenet_forward.1} parent=1 // pred_fallthru
      _
    // Predicated region
    $region14: #{lenet_forward.1} parent=1 // pred_check
      _
    $region15: #{lenet_forward.1} parent=1 // pred_check_branch
      %45 = sbr.rel (0) target = $region17
    $region16: #{lenet_forward.1} parent=1 // pred_region
      _
    $region17: #{lenet_forward.1} parent=1 // pred_fallthru
      _
    // Predicated region
    $region18: #{lenet_forward.1} parent=1 // pred_check
      _
    $region19: #{lenet_forward.1} parent=1 // pred_check_branch
      %47 = sbr.rel (0) target = $region21
    $region20: #{lenet_forward.1} parent=1 // pred_region
      %49 = vsyncadd [#allocation6], 0
      %s50 = sshll.u32 %s4, 4
      %s51 = int_to_ptr.hbm [resolvable:$true] %s50
      %s52 = sshll.u32 [#allocation5], 4
      %s53 = int_to_ptr.vmem [resolvable:$true] %s52
      %58 = dma.hbm_to_vmem [thread:$0]  %s51, 5376, %s53, [#allocation6], 256, 256, 16
    $region21: #{lenet_forward.1} parent=1 // pred_fallthru
      _
    // Predicated region
    $region22: #{lenet_forward.1} parent=1 // pred_check
      _
    $region23: #{lenet_forward.1} parent=1 // pred_check_branch
      %60 = sbr.rel (0) target = $region25
    $region24: #{lenet_forward.1} parent=1 // pred_region
      _
    $region25: #{lenet_forward.1} parent=1 // pred_fallthru
      _
    // Predicated region
    $region26: #{lenet_forward.1} parent=1 // pred_check
      _
    $region27: #{lenet_forward.1} parent=1 // pred_check_branch
      %62 = sbr.rel (0) target = $region29
    $region28: #{lenet_forward.1} parent=1 // pred_region
      _
    $region29: #{lenet_forward.1} parent=1 // pred_fallthru
      _
    // Predicated region
    $region30: #{lenet_forward.1} parent=1 // pred_check
      _
    $region31: #{lenet_forward.1} parent=1 // pred_check_branch
      %64 = sbr.rel (0) target = $region33
    $region32: #{lenet_forward.1} parent=1 // pred_region
      _
    $region33: #{lenet_forward.1} parent=1 // pred_fallthru
      _
    // Predicated region
    $region34: #{lenet_forward.1} parent=1 // pred_check
      _
    $region35: #{lenet_forward.1} parent=1 // pred_check_branch
      %66 = sbr.rel (0) target = $region37
    $region36: #{lenet_forward.1} parent=1 // pred_region
      _
    $region37: #{lenet_forward.1} parent=1 // pred_fallthru
      _
    // Predicated region
    $region38: #{lenet_forward.1} parent=1 // pred_check
      _
    $region39: #{lenet_forward.1} parent=1 // pred_check_branch
      %68 = sbr.rel (0) target = $region41
    $region40: #{lenet_forward.1} parent=1 // pred_region
      %70 = vsyncadd [#allocation6], 0
      %s71 = sshll.u32 %s9, 4
      %s72 = int_to_ptr.hbm [resolvable:$true] %s71
      %s73 = sshll.u32 [#allocation7], 4
      %s74 = int_to_ptr.vmem [resolvable:$true] %s73
      %79 = dma.hbm_to_vmem [thread:$0]  %s72, 5120, %s74, [#allocation6], 256, 256, 16
    $region41: #{lenet_forward.1} parent=1 // pred_fallthru
      _
    // Predicated region
    $region42: #{lenet_forward.1} parent=1 // pred_check
      _
    $region43: #{lenet_forward.1} parent=1 // pred_check_branch
      %81 = sbr.rel (0) target = $region45
    $region44: #{lenet_forward.1} parent=1 // pred_region
      _
    $region45: #{lenet_forward.1} parent=1 // pred_fallthru
      _
    // Predicated region
    $region46: #{lenet_forward.1} parent=1 // pred_check
      _
    $region47: #{lenet_forward.1} parent=1 // pred_check_branch
      %83 = sbr.rel (0) target = $region49
    $region48: #{lenet_forward.1} parent=1 // pred_region
      _
    $region49: #{lenet_forward.1} parent=1 // pred_fallthru
      _
    // Predicated region
    $region50: #{lenet_forward.1} parent=1 // pred_check
      _
    $region51: #{lenet_forward.1} parent=1 // pred_check_branch
      %85 = sbr.rel (0) target = $region53
    $region52: #{lenet_forward.1} parent=1 // pred_region
      _
    $region53: #{lenet_forward.1} parent=1 // pred_fallthru
      _
    // Predicated region
    $region54: #{lenet_forward.1} parent=1 // pred_check
      _
    $region55: #{lenet_forward.1} parent=1 // pred_check_branch
      %87 = sbr.rel (0) target = $region57
    $region56: #{lenet_forward.1} parent=1 // pred_region
      _
    $region57: #{lenet_forward.1} parent=1 // pred_fallthru
      _
    // Predicated region
    $region58: #{lenet_forward.1} parent=1 // pred_check
      _
    $region59: #{lenet_forward.1} parent=1 // pred_check_branch
      %89 = sbr.rel (0) target = $region61
    $region60: #{lenet_forward.1} parent=1 // pred_region
      _
    $region61: #{lenet_forward.1} parent=1 // pred_fallthru
      _
    // Predicated region
    $region62: #{lenet_forward.1} parent=1 // pred_check
      _
    $region63: #{lenet_forward.1} parent=1 // pred_check_branch
      %91 = sbr.rel (0) target = $region65
    $region64: #{lenet_forward.1} parent=1 // pred_region
      _
    $region65: #{lenet_forward.1} parent=1 // pred_fallthru
      _
    // Predicated region
    $region66: #{lenet_forward.1} parent=1 // pred_check
      _
    $region67: #{lenet_forward.1} parent=1 // pred_check_branch
      %93 = sbr.rel (0) target = $region69
    $region68: #{lenet_forward.1} parent=1 // pred_region
      _
    $region69: #{lenet_forward.1} parent=1 // pred_fallthru
      _
    // Predicated region
    $region70: #{lenet_forward.1} parent=1 // pred_check
      _
    $region71: #{lenet_forward.1} parent=1 // pred_check_branch
      %95 = sbr.rel (0) target = $region73
    $region72: #{lenet_forward.1} parent=1 // pred_region
      _
    $region73: #{lenet_forward.1} parent=1 // pred_fallthru
      _
    // Predicated region
    $region74: #{lenet_forward.1} parent=1 // pred_check
      _
    $region75: #{lenet_forward.1} parent=1 // pred_check_branch
      %97 = sbr.rel (0) target = $region77
    $region76: #{lenet_forward.1} parent=1 // pred_region
      _
    $region77: #{lenet_forward.1} parent=1 // pred_fallthru
      _
    // Predicated region
    $region78: #{lenet_forward.1} parent=1 // pred_check
      _
    $region79: #{lenet_forward.1} parent=1 // pred_check_branch
      %99 = sbr.rel (0) target = $region81
    $region80: #{lenet_forward.1} parent=1 // pred_region
      %101 = dma.done [#allocation3], 2560
    $region81: #{lenet_forward.1} parent=1 // pred_fallthru
      _
    // Predicated region
    $region82: #{lenet_forward.1} parent=1 // pred_check
      _
    $region83: #{lenet_forward.1} parent=1 // pred_check_branch
      %103 = sbr.rel (0) target = $region85
    $region84: #{lenet_forward.1} parent=1 // pred_region
      %105 = dma.done [#allocation6], 5376
    $region85: #{lenet_forward.1} parent=1 // pred_fallthru
      _
    // Predicated region
    $region86: #{lenet_forward.1} parent=1 // pred_check
      _
    $region87: #{lenet_forward.1} parent=1 // pred_check_branch
      %107 = sbr.rel (0) target = $region89
    $region88: #{lenet_forward.1} parent=1 // pred_region
      %109 = dma.done [#allocation6], 5120
    $region89: #{lenet_forward.1} parent=1 // pred_fallthru
      _
    %v111 = vld [vmem:[%s0] sm:$0xff]
    %v112 = vld [vmem:[%s0 + $0x8] sm:$0xff]
    %v113 = vld [vmem:[%s0 + $0x10] sm:$0xff]
    %v114 = vld [vmem:[%s0 + $0x18] sm:$0xff]
    %v115 = vld [vmem:[%s0 + $0x20] sm:$0xff]
    %v116 = vld [vmem:[%s0 + $0x28] sm:$0xff]
    %v117 = vld [vmem:[%s0 + $0x30] sm:$0xff]
    %v118 = vld [vmem:[#allocation2] sm:$0xff]
    %v119 = vld [vmem:[#allocation2 + $0x8] sm:$0xff]
    %v120 = vld [vmem:[#allocation2 + $0x10] sm:$0xff]
    %v121 = vld [vmem:[#allocation2 + $0x18] sm:$0xff]
    %v122 = vld [vmem:[#allocation2 + $0x20] sm:$0xff]
    %v123 = vld [vmem:[#allocation2 + $0x28] sm:$0xff]
    %v124 = vld [vmem:[#allocation2 + $0x30] sm:$0xff]
    %v125 = vld [vmem:[#allocation2 + $0x38] sm:$0xff]
    %v126 = vld [vmem:[#allocation2 + $0x40] sm:$0xff]
    %v127 = vld [vmem:[#allocation2 + $0x48] sm:$0xff]
    %v128 = vld [vmem:[#allocation2 + $0x50] sm:$0xff]
    %v129 = vld [vmem:[#allocation2 + $0x58] sm:$0xff]
    %v130 = vld [vmem:[#allocation2 + $0x60] sm:$0xff]
    %v131 = vld [vmem:[#allocation2 + $0x68] sm:$0xff]
    %v132 = vld [vmem:[#allocation2 + $0x70] sm:$0xff]
    %v133 = vld [vmem:[#allocation2 + $0x78] sm:$0xff]
    %v134 = vld [vmem:[#allocation2 + $0x80] sm:$0xff]
    %v135 = vld [vmem:[#allocation2 + $0x88] sm:$0xff]
    %v136 = vld [vmem:[#allocation2 + $0x90] sm:$0xff]
    %v137 = vld [vmem:[#allocation2 + $0x98] sm:$0xff]
    %v145 = vunpack.c.l.b16 %v111
    %v146 = vunpack.c.h.b16 %v111
    %v147 = vunpack.c.l.b16 %v112
    %v148 = vunpack.c.h.b16 %v112
    %v149 = vunpack.c.l.b16 %v113
    %v150 = vunpack.c.h.b16 %v113
    %v151 = vunpack.c.l.b16 %v114
    %v152 = vunpack.c.h.b16 %v114
    %v153 = vunpack.c.l.b16 %v115
    %v154 = vunpack.c.h.b16 %v115
    %v155 = vunpack.c.l.b16 %v116
    %v156 = vunpack.c.h.b16 %v116
    %v157 = vunpack.c.l.b16 %v117
    %v158 = vunpack.c.h.b16 %v117
    %v159 = vpack.c.b16 %v147, %v145
    %v160 = vpack.c.b16 %v148, %v146
    %v161 = vpack.c.b16 %v151, %v149
    %v162 = vpack.c.b16 %v152, %v150
    %v163 = vpack.c.b16 %v155, %v153
    %v164 = vpack.c.b16 %v156, %v154
    %v165 = vpack.c.b16 %v157, %v157
    %v166 = vpack.c.b16 %v158, %v158
    %v191 = vunpack.c.l.b16 %v118
    %v192 = vunpack.c.h.b16 %v118
    %v193 = vunpack.c.l.b16 %v119
    %v194 = vunpack.c.h.b16 %v119
    %v195 = vunpack.c.l.b16 %v120
    %v196 = vunpack.c.h.b16 %v120
    %v197 = vunpack.c.l.b16 %v121
    %v198 = vunpack.c.h.b16 %v121
    %v199 = vunpack.c.l.b16 %v122
    %v200 = vunpack.c.h.b16 %v122
    %v201 = vunpack.c.l.b16 %v123
    %v202 = vunpack.c.h.b16 %v123
    %v203 = vunpack.c.l.b16 %v124
    %v204 = vunpack.c.h.b16 %v124
    %v205 = vunpack.c.l.b16 %v125
    %v206 = vunpack.c.h.b16 %v125
    %v207 = vunpack.c.l.b16 %v126
    %v208 = vunpack.c.h.b16 %v126
    %v209 = vunpack.c.l.b16 %v127
    %v210 = vunpack.c.h.b16 %v127
    %v211 = vunpack.c.l.b16 %v128
    %v212 = vunpack.c.h.b16 %v128
    %v213 = vunpack.c.l.b16 %v129
    %v214 = vunpack.c.h.b16 %v129
    %v215 = vunpack.c.l.b16 %v130
    %v216 = vunpack.c.h.b16 %v130
    %v217 = vunpack.c.l.b16 %v131
    %v218 = vunpack.c.h.b16 %v131
    %v219 = vunpack.c.l.b16 %v132
    %v220 = vunpack.c.h.b16 %v132
    %v221 = vunpack.c.l.b16 %v133
    %v222 = vunpack.c.h.b16 %v133
    %v223 = vunpack.c.l.b16 %v134
    %v224 = vunpack.c.h.b16 %v134
    %v225 = vunpack.c.l.b16 %v135
    %v226 = vunpack.c.h.b16 %v135
    %v227 = vunpack.c.l.b16 %v136
    %v228 = vunpack.c.h.b16 %v136
    %v229 = vunpack.c.l.b16 %v137
    %v230 = vunpack.c.h.b16 %v137
    %v231 = vpack.c.b16 %v193, %v191
    %v232 = vpack.c.b16 %v194, %v192
    %v233 = vpack.c.b16 %v197, %v195
    %v234 = vpack.c.b16 %v198, %v196
    %v235 = vpack.c.b16 %v201, %v199
    %v236 = vpack.c.b16 %v202, %v200
    %v237 = vpack.c.b16 %v205, %v203
    %v238 = vpack.c.b16 %v206, %v204
    %v239 = vpack.c.b16 %v209, %v207
    %v240 = vpack.c.b16 %v210, %v208
    %v241 = vpack.c.b16 %v213, %v211
    %v242 = vpack.c.b16 %v214, %v212
    %v243 = vpack.c.b16 %v217, %v215
    %v244 = vpack.c.b16 %v218, %v216
    %v245 = vpack.c.b16 %v221, %v219
    %v246 = vpack.c.b16 %v222, %v220
    %v247 = vpack.c.b16 %v225, %v223
    %v248 = vpack.c.b16 %v226, %v224
    %v249 = vpack.c.b16 %v229, %v227
    %v250 = vpack.c.b16 %v230, %v228
    %vm271 = vcmask 261120
    %v273 = vsel %vm271, %v160, 0
    %v276 = vsel %vm271, %v162, 0
    %v279 = vsel %vm271, %v164, 0
    %v282 = vsel %vm271, %v166, 0
    %284 = vmatpush.bf16.msra.mxu0 %v245
    %285 = vmatpush.bf16.msra.mxu0 %v243
    %286 = vmatpush.bf16.msra.mxu0 %v241
    %287 = vmatpush.bf16.msra.mxu0 %v239
    %288 = vmatpush.bf16.msra.mxu0 %v237
    %289 = vmatpush.bf16.msra.mxu0 %v235
    %290 = vmatpush.bf16.msra.mxu0 %v233
    %291 = vmatpush.bf16.msra.mxu0 %v231
    %292 = vmatmul.bf16.gmra.mxu0 %v159
    %v293 = vpop.f32.mrf.mxu0
    %v294 = vadd.f32 0.0, %v293
    %v295 = vpop.f32.mrf.mxu0
    %v296 = vadd.f32 0.0, %v295
    %297 = vmatmul.bf16.gmra.mxu0 %v161
    %v298 = vpop.f32.mrf.mxu0
    %v299 = vadd.f32 0.0, %v298
    %v300 = vpop.f32.mrf.mxu0
    %v301 = vadd.f32 0.0, %v300
    %302 = vmatmul.bf16.gmra.mxu0 %v163
    %v303 = vpop.f32.mrf.mxu0
    %v304 = vadd.f32 0.0, %v303
    %v305 = vpop.f32.mrf.mxu0
    %v306 = vadd.f32 0.0, %v305
    %307 = vmatmul.bf16.gmra.mxu0 %v165
    %v308 = vpop.f32.mrf.mxu0
    %v309 = vadd.f32 0.0, %v308
    %v310 = vpop.f32.mrf.mxu0
    %311 = vdwg.mxu0
    %312 = vmatpush.bf16.msra.mxu0 0
    %313 = vmatpush.bf16.msra.mxu0 0
    %314 = vmatpush.bf16.msra.mxu0 0
    %315 = vmatpush.bf16.msra.mxu0 0
    %316 = vmatpush.bf16.msra.mxu0 0
    %317 = vmatpush.bf16.msra.mxu0 0
    %318 = vmatpush.bf16.msra.mxu0 %v249
    %319 = vmatpush.bf16.msra.mxu0 %v247
    %320 = vmatmul.bf16.gmra.mxu0 %v273
    %v321 = vpop.f32.mrf.mxu0
    %v322 = vadd.f32 %v294, %v321
    %v323 = vpop.f32.mrf.mxu0
    %v324 = vadd.f32 %v296, %v323
    %325 = vmatmul.bf16.gmra.mxu0 %v276
    %v326 = vpop.f32.mrf.mxu0
    %v327 = vadd.f32 %v299, %v326
    %v328 = vpop.f32.mrf.mxu0
    %v329 = vadd.f32 %v301, %v328
    %330 = vmatmul.bf16.gmra.mxu0 %v279
    %v331 = vpop.f32.mrf.mxu0
    %v332 = vadd.f32 %v304, %v331
    %v333 = vpop.f32.mrf.mxu0
    %v334 = vadd.f32 %v306, %v333
    %335 = vmatmul.bf16.gmra.mxu0 %v282
    %v336 = vpop.f32.mrf.mxu0
    %v337 = vadd.f32 %v309, %v336
    %v338 = vpop.f32.mrf.mxu0
    %339 = vdwg.mxu0
    %340 = vmatpush.bf16.msra.mxu0 %v246
    %341 = vmatpush.bf16.msra.mxu0 %v244
    %342 = vmatpush.bf16.msra.mxu0 %v242
    %343 = vmatpush.bf16.msra.mxu0 %v240
    %344 = vmatpush.bf16.msra.mxu0 %v238
    %345 = vmatpush.bf16.msra.mxu0 %v236
    %346 = vmatpush.bf16.msra.mxu0 %v234
    %347 = vmatpush.bf16.msra.mxu0 %v232
    %348 = vmatmul.bf16.gmra.mxu0 %v159
    %v349 = vpop.f32.mrf.mxu0
    %v350 = vadd.f32 0.0, %v349
    %v351 = vpop.f32.mrf.mxu0
    %v352 = vadd.f32 0.0, %v351
    %353 = vmatmul.bf16.gmra.mxu0 %v161
    %v354 = vpop.f32.mrf.mxu0
    %v355 = vadd.f32 0.0, %v354
    %v356 = vpop.f32.mrf.mxu0
    %v357 = vadd.f32 0.0, %v356
    %358 = vmatmul.bf16.gmra.mxu0 %v163
    %v359 = vpop.f32.mrf.mxu0
    %v360 = vadd.f32 0.0, %v359
    %v361 = vpop.f32.mrf.mxu0
    %v362 = vadd.f32 0.0, %v361
    %363 = vmatmul.bf16.gmra.mxu0 %v165
    %v364 = vpop.f32.mrf.mxu0
    %v365 = vadd.f32 0.0, %v364
    %v366 = vpop.f32.mrf.mxu0
    %367 = vdwg.mxu0
    %368 = vmatpush.bf16.msra.mxu0 0
    %369 = vmatpush.bf16.msra.mxu0 0
    %370 = vmatpush.bf16.msra.mxu0 0
    %371 = vmatpush.bf16.msra.mxu0 0
    %372 = vmatpush.bf16.msra.mxu0 0
    %373 = vmatpush.bf16.msra.mxu0 0
    %374 = vmatpush.bf16.msra.mxu0 %v250
    %375 = vmatpush.bf16.msra.mxu0 %v248
    %376 = vmatmul.bf16.gmra.mxu0 %v273
    %v377 = vpop.f32.mrf.mxu0
    %v378 = vadd.f32 %v350, %v377
    %v379 = vpop.f32.mrf.mxu0
    %v380 = vadd.f32 %v352, %v379
    %381 = vmatmul.bf16.gmra.mxu0 %v276
    %v382 = vpop.f32.mrf.mxu0
    %v383 = vadd.f32 %v355, %v382
    %v384 = vpop.f32.mrf.mxu0
    %v385 = vadd.f32 %v357, %v384
    %386 = vmatmul.bf16.gmra.mxu0 %v279
    %v387 = vpop.f32.mrf.mxu0
    %v388 = vadd.f32 %v360, %v387
    %v389 = vpop.f32.mrf.mxu0
    %v390 = vadd.f32 %v362, %v389
    %391 = vmatmul.bf16.gmra.mxu0 %v282
    %v392 = vpop.f32.mrf.mxu0
    %v393 = vadd.f32 %v365, %v392
    %v394 = vpop.f32.mrf.mxu0
    %395 = vdwg.mxu0
    %v396 = vld [vmem:[#allocation5] sm:$0xff]
    %v397 = vld [vmem:[#allocation5 + $0x8] sm:$0xff]
    %v398 = vld [vmem:[#allocation5 + $0x10] sm:$0xff]
    %v399 = vld [vmem:[#allocation5 + $0x18] sm:$0xff]
    %v400 = vld [vmem:[#allocation5 + $0x20] sm:$0xff]
    %v401 = vld [vmem:[#allocation5 + $0x28] sm:$0xff]
    %v402 = vld [vmem:[#allocation5 + $0x30] sm:$0xff]
    %v403 = vld [vmem:[#allocation5 + $0x38] sm:$0xff]
    %v404 = vld [vmem:[#allocation5 + $0x40] sm:$0xff]
    %v405 = vld [vmem:[#allocation5 + $0x48] sm:$0xff]
    %v406 = vld [vmem:[#allocation5 + $0x50] sm:$0xff]
    %v407 = vld [vmem:[#allocation5 + $0x58] sm:$0xff]
    %v408 = vld [vmem:[#allocation5 + $0x60] sm:$0xff]
    %v409 = vld [vmem:[#allocation5 + $0x68] sm:$0xff]
    %v410 = vld [vmem:[#allocation5 + $0x70] sm:$0xff]
    %v411 = vld [vmem:[#allocation5 + $0x78] sm:$0xff]
    %v412 = vld [vmem:[#allocation5 + $0x80] sm:$0xff]
    %v413 = vld [vmem:[#allocation5 + $0x88] sm:$0xff]
    %v414 = vld [vmem:[#allocation5 + $0x90] sm:$0xff]
    %v415 = vld [vmem:[#allocation5 + $0x98] sm:$0xff]
    %v416 = vld [vmem:[#allocation5 + $0xa0] sm:$0xff]
    %v417 = vld [vmem:[#allocation5 + $0xa8] sm:$0xff]
    %v418 = vld [vmem:[#allocation5 + $0xb0] sm:$0xff]
    %v419 = vld [vmem:[#allocation5 + $0xb8] sm:$0xff]
    %v420 = vld [vmem:[#allocation5 + $0xc0] sm:$0xff]
    %v421 = vld [vmem:[#allocation5 + $0xc8] sm:$0xff]
    %v422 = vld [vmem:[#allocation5 + $0xd0] sm:$0xff]
    %v423 = vld [vmem:[#allocation5 + $0xd8] sm:$0xff]
    %v424 = vld [vmem:[#allocation5 + $0xe0] sm:$0xff]
    %v425 = vld [vmem:[#allocation5 + $0xe8] sm:$0xff]
    %v426 = vld [vmem:[#allocation5 + $0xf0] sm:$0xff]
    %v427 = vld [vmem:[#allocation5 + $0xf8] sm:$0xff]
    %v428 = vld [vmem:[#allocation5 + $0x100] sm:$0xff]
    %v429 = vld [vmem:[#allocation5 + $0x108] sm:$0xff]
    %v430 = vld [vmem:[#allocation5 + $0x110] sm:$0xff]
    %v431 = vld [vmem:[#allocation5 + $0x118] sm:$0xff]
    %v432 = vld [vmem:[#allocation5 + $0x120] sm:$0xff]
    %v433 = vld [vmem:[#allocation5 + $0x128] sm:$0xff]
    %v434 = vld [vmem:[#allocation5 + $0x130] sm:$0xff]
    %v435 = vld [vmem:[#allocation5 + $0x138] sm:$0xff]
    %v436 = vld [vmem:[#allocation5 + $0x140] sm:$0xff]
    %v437 = vld [vmem:[#allocation5 + $0x148] sm:$0xff]
    %v438 = vld [vmem:[%s2] sm:$0x3]
    %v439 = vld [vmem:[%s3] sm:$0x3]
    %vm440 = vcmask 326656
    %v442 = vsel %vm440, %v378, 0
    %v445 = vsel %vm440, %v380, 0
    %v448 = vsel %vm440, %v383, 0
    %v451 = vsel %vm440, %v385, 0
    %v454 = vsel %vm440, %v388, 0
    %v457 = vsel %vm440, %v390, 0
    %v460 = vsel %vm440, %v393, 0
    %462 = vmatpush.msra.mxu0 %v426
    %463 = vmatpush.msra.mxu0 %v424
    %464 = vmatpush.msra.mxu0 %v422
    %465 = vmatpush.msra.mxu0 %v420
    %466 = vmatpush.msra.mxu0 %v418
    %467 = vmatpush.msra.mxu0 %v416
    %468 = vmatpush.msra.mxu0 %v414
    %469 = vmatpush.msra.mxu0 %v412
    %470 = vmatpush.msra.mxu0 %v410
    %471 = vmatpush.msra.mxu0 %v408
    %472 = vmatpush.msra.mxu0 %v406
    %473 = vmatpush.msra.mxu0 %v404
    %474 = vmatpush.msra.mxu0 %v402
    %475 = vmatpush.msra.mxu0 %v400
    %476 = vmatpush.msra.mxu0 %v398
    %477 = vmatpush.msra.mxu0 %v396
    %478 = vmatmul.f32.gmra.mxu0 %v322
    %v479 = vpop.f32.mrf.mxu0
    %v480 = vadd.f32 0.0, %v479
    %481 = vmatmul.f32.gmra.mxu0 %v324
    %v482 = vpop.f32.mrf.mxu0
    %v483 = vadd.f32 0.0, %v482
    %484 = vmatmul.f32.gmra.mxu0 %v327
    %v485 = vpop.f32.mrf.mxu0
    %v486 = vadd.f32 0.0, %v485
    %487 = vmatmul.f32.gmra.mxu0 %v329
    %v488 = vpop.f32.mrf.mxu0
    %v489 = vadd.f32 0.0, %v488
    %490 = vmatmul.f32.gmra.mxu0 %v332
    %v491 = vpop.f32.mrf.mxu0
    %v492 = vadd.f32 0.0, %v491
    %493 = vmatmul.f32.gmra.mxu0 %v334
    %v494 = vpop.f32.mrf.mxu0
    %v495 = vadd.f32 0.0, %v494
    %496 = vmatmul.f32.gmra.mxu0 %v337
    %v497 = vpop.f32.mrf.mxu0
    %v498 = vadd.f32 0.0, %v497
    %499 = vdwg.mxu0
    %500 = vmatpush.msra.mxu0 0.0
    %501 = vmatpush.msra.mxu0 0.0
    %502 = vmatpush.msra.mxu0 0.0
    %503 = vmatpush.msra.mxu0 0.0
    %504 = vmatpush.msra.mxu0 0.0
    %505 = vmatpush.msra.mxu0 0.0
    %506 = vmatpush.msra.mxu0 0.0
    %507 = vmatpush.msra.mxu0 0.0
    %508 = vmatpush.msra.mxu0 0.0
    %509 = vmatpush.msra.mxu0 0.0
    %510 = vmatpush.msra.mxu0 0.0
    %511 = vmatpush.msra.mxu0 %v436
    %512 = vmatpush.msra.mxu0 %v434
    %513 = vmatpush.msra.mxu0 %v432
    %514 = vmatpush.msra.mxu0 %v430
    %515 = vmatpush.msra.mxu0 %v428
    %516 = vmatmul.f32.gmra.mxu0 %v442
    %v517 = vpop.f32.mrf.mxu0
    %v518 = vadd.f32 %v480, %v517
    %519 = vmatmul.f32.gmra.mxu0 %v445
    %v520 = vpop.f32.mrf.mxu0
    %v521 = vadd.f32 %v483, %v520
    %522 = vmatmul.f32.gmra.mxu0 %v448
    %v523 = vpop.f32.mrf.mxu0
    %v524 = vadd.f32 %v486, %v523
    %525 = vmatmul.f32.gmra.mxu0 %v451
    %v526 = vpop.f32.mrf.mxu0
    %v527 = vadd.f32 %v489, %v526
    %528 = vmatmul.f32.gmra.mxu0 %v454
    %v529 = vpop.f32.mrf.mxu0
    %v530 = vadd.f32 %v492, %v529
    %531 = vmatmul.f32.gmra.mxu0 %v457
    %v532 = vpop.f32.mrf.mxu0
    %v533 = vadd.f32 %v495, %v532
    %534 = vmatmul.f32.gmra.mxu0 %v460
    %v535 = vpop.f32.mrf.mxu0
    %v536 = vadd.f32 %v498, %v535
    %537 = vdwg.mxu0
    %538 = vmatpush.msra.mxu0 %v427
    %539 = vmatpush.msra.mxu0 %v425
    %540 = vmatpush.msra.mxu0 %v423
    %541 = vmatpush.msra.mxu0 %v421
    %542 = vmatpush.msra.mxu0 %v419
    %543 = vmatpush.msra.mxu0 %v417
    %544 = vmatpush.msra.mxu0 %v415
    %545 = vmatpush.msra.mxu0 %v413
    %546 = vmatpush.msra.mxu0 %v411
    %547 = vmatpush.msra.mxu0 %v409
    %548 = vmatpush.msra.mxu0 %v407
    %549 = vmatpush.msra.mxu0 %v405
    %550 = vmatpush.msra.mxu0 %v403
    %551 = vmatpush.msra.mxu0 %v401
    %552 = vmatpush.msra.mxu0 %v399
    %553 = vmatpush.msra.mxu0 %v397
    %554 = vmatmul.f32.gmra.mxu0 %v322
    %v555 = vpop.f32.mrf.mxu0
    %v556 = vadd.f32 0.0, %v555
    %557 = vmatmul.f32.gmra.mxu0 %v324
    %v558 = vpop.f32.mrf.mxu0
    %v559 = vadd.f32 0.0, %v558
    %560 = vmatmul.f32.gmra.mxu0 %v327
    %v561 = vpop.f32.mrf.mxu0
    %v562 = vadd.f32 0.0, %v561
    %563 = vmatmul.f32.gmra.mxu0 %v329
    %v564 = vpop.f32.mrf.mxu0
    %v565 = vadd.f32 0.0, %v564
    %566 = vmatmul.f32.gmra.mxu0 %v332
    %v567 = vpop.f32.mrf.mxu0
    %v568 = vadd.f32 0.0, %v567
    %569 = vmatmul.f32.gmra.mxu0 %v334
    %v570 = vpop.f32.mrf.mxu0
    %v571 = vadd.f32 0.0, %v570
    %572 = vmatmul.f32.gmra.mxu0 %v337
    %v573 = vpop.f32.mrf.mxu0
    %v574 = vadd.f32 0.0, %v573
    %575 = vdwg.mxu0
    %576 = vmatpush.msra.mxu0 0.0
    %577 = vmatpush.msra.mxu0 0.0
    %578 = vmatpush.msra.mxu0 0.0
    %579 = vmatpush.msra.mxu0 0.0
    %580 = vmatpush.msra.mxu0 0.0
    %581 = vmatpush.msra.mxu0 0.0
    %582 = vmatpush.msra.mxu0 0.0
    %583 = vmatpush.msra.mxu0 0.0
    %584 = vmatpush.msra.mxu0 0.0
    %585 = vmatpush.msra.mxu0 0.0
    %586 = vmatpush.msra.mxu0 0.0
    %587 = vmatpush.msra.mxu0 %v437
    %588 = vmatpush.msra.mxu0 %v435
    %589 = vmatpush.msra.mxu0 %v433
    %590 = vmatpush.msra.mxu0 %v431
    %591 = vmatpush.msra.mxu0 %v429
    %592 = vmatmul.f32.gmra.mxu0 %v442
    %v593 = vpop.f32.mrf.mxu0
    %v594 = vadd.f32 %v556, %v593
    %595 = vmatmul.f32.gmra.mxu0 %v445
    %v596 = vpop.f32.mrf.mxu0
    %v597 = vadd.f32 %v559, %v596
    %598 = vmatmul.f32.gmra.mxu0 %v448
    %v599 = vpop.f32.mrf.mxu0
    %v600 = vadd.f32 %v562, %v599
    %601 = vmatmul.f32.gmra.mxu0 %v451
    %v602 = vpop.f32.mrf.mxu0
    %v603 = vadd.f32 %v565, %v602
    %604 = vmatmul.f32.gmra.mxu0 %v454
    %v605 = vpop.f32.mrf.mxu0
    %v606 = vadd.f32 %v568, %v605
    %607 = vmatmul.f32.gmra.mxu0 %v457
    %v608 = vpop.f32.mrf.mxu0
    %v609 = vadd.f32 %v571, %v608
    %610 = vmatmul.f32.gmra.mxu0 %v460
    %v611 = vpop.f32.mrf.mxu0
    %v612 = vadd.f32 %v574, %v611
    %613 = vdwg.mxu0
    %v614 = vadd.f32 %v518, %v521
    %v615 = vadd.f32 %v614, %v524
    %v616 = vadd.f32 %v615, %v527
    %v617 = vadd.f32 %v616, %v530
    %v618 = vadd.f32 %v617, %v533
    %v619 = vadd.f32 %v618, %v536
    %v620 = vrot.slane %v619, 4
    %v621 = vadd.f32 %v619, %v620
    %v622 = vrot.slane %v621, 2
    %v623 = vadd.f32 %v621, %v622
    %v624 = vrot.slane %v623, 1
    %v625 = vadd.f32 %v623, %v624
    %v626 = vsel %vm440, %v594, 0.0
    %v627 = vsel %vm440, %v597, 0.0
    %v628 = vadd.f32 %v626, %v627
    %v629 = vsel %vm440, %v600, 0.0
    %v630 = vadd.f32 %v628, %v629
    %v631 = vsel %vm440, %v603, 0.0
    %v632 = vadd.f32 %v630, %v631
    %v633 = vsel %vm440, %v606, 0.0
    %v634 = vadd.f32 %v632, %v633
    %v635 = vsel %vm440, %v609, 0.0
    %v636 = vadd.f32 %v634, %v635
    %v637 = vsel %vm440, %v612, 0.0
    %v638 = vadd.f32 %v636, %v637
    %v639 = vrot.slane %v638, 4
    %v640 = vadd.f32 %v638, %v639
    %v641 = vrot.slane %v640, 2
    %v642 = vadd.f32 %v640, %v641
    %v643 = vrot.slane %v642, 1
    %v644 = vadd.f32 %v642, %v643
    %v645 = vsub.f32 %v322, %v625
    %v646 = vsub.f32 %v378, %v644
    %v647 = vsub.f32 %v324, %v625
    %v648 = vsub.f32 %v380, %v644
    %v649 = vsub.f32 %v327, %v625
    %v650 = vsub.f32 %v383, %v644
    %v651 = vsub.f32 %v329, %v625
    %v652 = vsub.f32 %v385, %v644
    %v653 = vsub.f32 %v332, %v625
    %v654 = vsub.f32 %v388, %v644
    %v655 = vsub.f32 %v334, %v625
    %v656 = vsub.f32 %v390, %v644
    %v657 = vsub.f32 %v337, %v625
    %v658 = vsub.f32 %v393, %v644
    %v659 = vmul.f32 %v645, %v645
    %v660 = vmul.f32 %v646, %v646
    %v661 = vmul.f32 %v647, %v647
    %v662 = vmul.f32 %v648, %v648
    %v663 = vmul.f32 %v649, %v649
    %v664 = vmul.f32 %v650, %v650
    %v665 = vmul.f32 %v651, %v651
    %v666 = vmul.f32 %v652, %v652
    %v667 = vmul.f32 %v653, %v653
    %v668 = vmul.f32 %v654, %v654
    %v669 = vmul.f32 %v655, %v655
    %v670 = vmul.f32 %v656, %v656
    %v671 = vmul.f32 %v657, %v657
    %v672 = vmul.f32 %v658, %v658
    %v674 = vsel %vm440, %v660, 0
    %v677 = vsel %vm440, %v662, 0
    %v680 = vsel %vm440, %v664, 0
    %v683 = vsel %vm440, %v666, 0
    %v686 = vsel %vm440, %v668, 0
    %v689 = vsel %vm440, %v670, 0
    %v692 = vsel %vm440, %v672, 0
    %694 = vmatpush.msra.mxu0 %v426
    %695 = vmatpush.msra.mxu0 %v424
    %696 = vmatpush.msra.mxu0 %v422
    %697 = vmatpush.msra.mxu0 %v420
    %698 = vmatpush.msra.mxu0 %v418
    %699 = vmatpush.msra.mxu0 %v416
    %700 = vmatpush.msra.mxu0 %v414
    %701 = vmatpush.msra.mxu0 %v412
    %702 = vmatpush.msra.mxu0 %v410
    %703 = vmatpush.msra.mxu0 %v408
    %704 = vmatpush.msra.mxu0 %v406
    %705 = vmatpush.msra.mxu0 %v404
    %706 = vmatpush.msra.mxu0 %v402
    %707 = vmatpush.msra.mxu0 %v400
    %708 = vmatpush.msra.mxu0 %v398
    %709 = vmatpush.msra.mxu0 %v396
    %710 = vmatmul.f32.gmra.mxu0 %v659
    %v711 = vpop.f32.mrf.mxu0
    %v712 = vadd.f32 0.0, %v711
    %713 = vmatmul.f32.gmra.mxu0 %v661
    %v714 = vpop.f32.mrf.mxu0
    %v715 = vadd.f32 0.0, %v714
    %716 = vmatmul.f32.gmra.mxu0 %v663
    %v717 = vpop.f32.mrf.mxu0
    %v718 = vadd.f32 0.0, %v717
    %719 = vmatmul.f32.gmra.mxu0 %v665
    %v720 = vpop.f32.mrf.mxu0
    %v721 = vadd.f32 0.0, %v720
    %722 = vmatmul.f32.gmra.mxu0 %v667
    %v723 = vpop.f32.mrf.mxu0
    %v724 = vadd.f32 0.0, %v723
    %725 = vmatmul.f32.gmra.mxu0 %v669
    %v726 = vpop.f32.mrf.mxu0
    %v727 = vadd.f32 0.0, %v726
    %728 = vmatmul.f32.gmra.mxu0 %v671
    %v729 = vpop.f32.mrf.mxu0
    %v730 = vadd.f32 0.0, %v729
    %731 = vdwg.mxu0
    %732 = vmatpush.msra.mxu0 0.0
    %733 = vmatpush.msra.mxu0 0.0
    %734 = vmatpush.msra.mxu0 0.0
    %735 = vmatpush.msra.mxu0 0.0
    %736 = vmatpush.msra.mxu0 0.0
    %737 = vmatpush.msra.mxu0 0.0
    %738 = vmatpush.msra.mxu0 0.0
    %739 = vmatpush.msra.mxu0 0.0
    %740 = vmatpush.msra.mxu0 0.0
    %741 = vmatpush.msra.mxu0 0.0
    %742 = vmatpush.msra.mxu0 0.0
    %743 = vmatpush.msra.mxu0 %v436
    %744 = vmatpush.msra.mxu0 %v434
    %745 = vmatpush.msra.mxu0 %v432
    %746 = vmatpush.msra.mxu0 %v430
    %747 = vmatpush.msra.mxu0 %v428
    %748 = vmatmul.f32.gmra.mxu0 %v674
    %v749 = vpop.f32.mrf.mxu0
    %v750 = vadd.f32 %v712, %v749
    %751 = vmatmul.f32.gmra.mxu0 %v677
    %v752 = vpop.f32.mrf.mxu0
    %v753 = vadd.f32 %v715, %v752
    %754 = vmatmul.f32.gmra.mxu0 %v680
    %v755 = vpop.f32.mrf.mxu0
    %v756 = vadd.f32 %v718, %v755
    %757 = vmatmul.f32.gmra.mxu0 %v683
    %v758 = vpop.f32.mrf.mxu0
    %v759 = vadd.f32 %v721, %v758
    %760 = vmatmul.f32.gmra.mxu0 %v686
    %v761 = vpop.f32.mrf.mxu0
    %v762 = vadd.f32 %v724, %v761
    %763 = vmatmul.f32.gmra.mxu0 %v689
    %v764 = vpop.f32.mrf.mxu0
    %v765 = vadd.f32 %v727, %v764
    %766 = vmatmul.f32.gmra.mxu0 %v692
    %v767 = vpop.f32.mrf.mxu0
    %v768 = vadd.f32 %v730, %v767
    %769 = vdwg.mxu0
    %770 = vmatpush.msra.mxu0 %v427
    %771 = vmatpush.msra.mxu0 %v425
    %772 = vmatpush.msra.mxu0 %v423
    %773 = vmatpush.msra.mxu0 %v421
    %774 = vmatpush.msra.mxu0 %v419
    %775 = vmatpush.msra.mxu0 %v417
    %776 = vmatpush.msra.mxu0 %v415
    %777 = vmatpush.msra.mxu0 %v413
    %778 = vmatpush.msra.mxu0 %v411
    %779 = vmatpush.msra.mxu0 %v409
    %780 = vmatpush.msra.mxu0 %v407
    %781 = vmatpush.msra.mxu0 %v405
    %782 = vmatpush.msra.mxu0 %v403
    %783 = vmatpush.msra.mxu0 %v401
    %784 = vmatpush.msra.mxu0 %v399
    %785 = vmatpush.msra.mxu0 %v397
    %786 = vmatmul.f32.gmra.mxu0 %v659
    %v787 = vpop.f32.mrf.mxu0
    %v788 = vadd.f32 0.0, %v787
    %789 = vmatmul.f32.gmra.mxu0 %v661
    %v790 = vpop.f32.mrf.mxu0
    %v791 = vadd.f32 0.0, %v790
    %792 = vmatmul.f32.gmra.mxu0 %v663
    %v793 = vpop.f32.mrf.mxu0
    %v794 = vadd.f32 0.0, %v793
    %795 = vmatmul.f32.gmra.mxu0 %v665
    %v796 = vpop.f32.mrf.mxu0
    %v797 = vadd.f32 0.0, %v796
    %798 = vmatmul.f32.gmra.mxu0 %v667
    %v799 = vpop.f32.mrf.mxu0
    %v800 = vadd.f32 0.0, %v799
    %801 = vmatmul.f32.gmra.mxu0 %v669
    %v802 = vpop.f32.mrf.mxu0
    %v803 = vadd.f32 0.0, %v802
    %804 = vmatmul.f32.gmra.mxu0 %v671
    %v805 = vpop.f32.mrf.mxu0
    %v806 = vadd.f32 0.0, %v805
    %807 = vdwg.mxu0
    %808 = vmatpush.msra.mxu0 0.0
    %809 = vmatpush.msra.mxu0 0.0
    %810 = vmatpush.msra.mxu0 0.0
    %811 = vmatpush.msra.mxu0 0.0
    %812 = vmatpush.msra.mxu0 0.0
    %813 = vmatpush.msra.mxu0 0.0
    %814 = vmatpush.msra.mxu0 0.0
    %815 = vmatpush.msra.mxu0 0.0
    %816 = vmatpush.msra.mxu0 0.0
    %817 = vmatpush.msra.mxu0 0.0
    %818 = vmatpush.msra.mxu0 0.0
    %819 = vmatpush.msra.mxu0 %v437
    %820 = vmatpush.msra.mxu0 %v435
    %821 = vmatpush.msra.mxu0 %v433
    %822 = vmatpush.msra.mxu0 %v431
    %823 = vmatpush.msra.mxu0 %v429
    %824 = vmatmul.f32.gmra.mxu0 %v674
    %v825 = vpop.f32.mrf.mxu0
    %v826 = vadd.f32 %v788, %v825
    %827 = vmatmul.f32.gmra.mxu0 %v677
    %v828 = vpop.f32.mrf.mxu0
    %v829 = vadd.f32 %v791, %v828
    %830 = vmatmul.f32.gmra.mxu0 %v680
    %v831 = vpop.f32.mrf.mxu0
    %v832 = vadd.f32 %v794, %v831
    %833 = vmatmul.f32.gmra.mxu0 %v683
    %v834 = vpop.f32.mrf.mxu0
    %v835 = vadd.f32 %v797, %v834
    %836 = vmatmul.f32.gmra.mxu0 %v686
    %v837 = vpop.f32.mrf.mxu0
    %v838 = vadd.f32 %v800, %v837
    %839 = vmatmul.f32.gmra.mxu0 %v689
    %v840 = vpop.f32.mrf.mxu0
    %v841 = vadd.f32 %v803, %v840
    %842 = vmatmul.f32.gmra.mxu0 %v692
    %v843 = vpop.f32.mrf.mxu0
    %v844 = vadd.f32 %v806, %v843
    %845 = vdwg.mxu0
    %v846 = vadd.f32 %v750, %v753
    %v847 = vadd.f32 %v846, %v756
    %v848 = vadd.f32 %v847, %v759
    %v849 = vadd.f32 %v848, %v762
    %v850 = vadd.f32 %v849, %v765
    %v851 = vadd.f32 %v850, %v768
    %v852 = vrot.slane %v851, 4
    %v853 = vadd.f32 %v851, %v852
    %v854 = vrot.slane %v853, 2
    %v855 = vadd.f32 %v853, %v854
    %v856 = vrot.slane %v855, 1
    %v857 = vadd.f32 %v855, %v856
    %v858 = vsel %vm440, %v826, 0.0
    %v859 = vsel %vm440, %v829, 0.0
    %v860 = vadd.f32 %v858, %v859
    %v861 = vsel %vm440, %v832, 0.0
    %v862 = vadd.f32 %v860, %v861
    %v863 = vsel %vm440, %v835, 0.0
    %v864 = vadd.f32 %v862, %v863
    %v865 = vsel %vm440, %v838, 0.0
    %v866 = vadd.f32 %v864, %v865
    %v867 = vsel %vm440, %v841, 0.0
    %v868 = vadd.f32 %v866, %v867
    %v869 = vsel %vm440, %v844, 0.0
    %v870 = vadd.f32 %v868, %v869
    %v871 = vrot.slane %v870, 4
    %v872 = vadd.f32 %v870, %v871
    %v873 = vrot.slane %v872, 2
    %v874 = vadd.f32 %v872, %v873
    %v875 = vrot.slane %v874, 1
    %v876 = vadd.f32 %v874, %v875
    %v878 = vperm.slane %v438, 0
    %v879 = vperm.slane %v438, 1
    %v882 = vmul.f32 %v878, %v645
    %v883 = vmul.f32 %v879, %v646
    %v884 = vmul.f32 %v878, %v647
    %v885 = vmul.f32 %v879, %v648
    %v886 = vmul.f32 %v878, %v649
    %v887 = vmul.f32 %v879, %v650
    %v888 = vmul.f32 %v878, %v651
    %v889 = vmul.f32 %v879, %v652
    %v890 = vmul.f32 %v878, %v653
    %v891 = vmul.f32 %v879, %v654
    %v892 = vmul.f32 %v878, %v655
    %v893 = vmul.f32 %v879, %v656
    %v894 = vmul.f32 %v878, %v657
    %v895 = vmul.f32 %v879, %v658
    %v896 = vadd.f32 %v857, 1e-05
    %v897 = vadd.f32 %v876, 1e-05
    %v898 = vrsqrt.pop %v896
    %v899 = vmul.f32 %v898, %v896
    %v900 = vmul.f32 %v899, %v898
    %v901 = vmul.f32 0.5, %v900
    %v902 = vsub.f32 1.5, %v901
    %v903 = vmul.f32 %v898, %v902
    %vm904 = vweird.f32 %v896
    %vm905 = vweird.f32 %v898
    %vm906 = vmor %vm904, %vm905
    %v907 = vsel %vm906, %v898, %v903
    %v908 = vrsqrt.pop %v897
    %v909 = vmul.f32 %v908, %v897
    %v910 = vmul.f32 %v909, %v908
    %v911 = vmul.f32 0.5, %v910
    %v912 = vsub.f32 1.5, %v911
    %v913 = vmul.f32 %v908, %v912
    %vm914 = vweird.f32 %v897
    %vm915 = vweird.f32 %v908
    %vm916 = vmor %vm914, %vm915
    %v917 = vsel %vm916, %v908, %v913
    %v918 = vmul.f32 %v882, %v907
    %v919 = vmul.f32 %v883, %v917
    %v920 = vmul.f32 %v884, %v907
    %v921 = vmul.f32 %v885, %v917
    %v922 = vmul.f32 %v886, %v907
    %v923 = vmul.f32 %v887, %v917
    %v924 = vmul.f32 %v888, %v907
    %v925 = vmul.f32 %v889, %v917
    %v926 = vmul.f32 %v890, %v907
    %v927 = vmul.f32 %v891, %v917
    %v928 = vmul.f32 %v892, %v907
    %v929 = vmul.f32 %v893, %v917
    %v930 = vmul.f32 %v894, %v907
    %v931 = vmul.f32 %v895, %v917
    %v933 = vperm.slane %v439, 0
    %v934 = vperm.slane %v439, 1
    %v937 = vadd.f32 %v918, %v933
    %v938 = vadd.f32 %v919, %v934
    %v939 = vadd.f32 %v920, %v933
    %v940 = vadd.f32 %v921, %v934
    %v941 = vadd.f32 %v922, %v933
    %v942 = vadd.f32 %v923, %v934
    %v943 = vadd.f32 %v924, %v933
    %v944 = vadd.f32 %v925, %v934
    %v945 = vadd.f32 %v926, %v933
    %v946 = vadd.f32 %v927, %v934
    %v947 = vadd.f32 %v928, %v933
    %v948 = vadd.f32 %v929, %v934
    %v949 = vadd.f32 %v930, %v933
    %v950 = vadd.f32 %v931, %v934
    %v951 = vsub.f32 0.0, %v937
    %v952 = vsub.f32 0.0, %v938
    %v953 = vsub.f32 0.0, %v939
    %v954 = vsub.f32 0.0, %v940
    %v955 = vsub.f32 0.0, %v941
    %v956 = vsub.f32 0.0, %v942
    %v957 = vsub.f32 0.0, %v943
    %v958 = vsub.f32 0.0, %v944
    %v959 = vsub.f32 0.0, %v945
    %v960 = vsub.f32 0.0, %v946
    %v961 = vsub.f32 0.0, %v947
    %v962 = vsub.f32 0.0, %v948
    %v963 = vsub.f32 0.0, %v949
    %v964 = vsub.f32 0.0, %v950
    %v965 = vmul.f32 %v951, 1.442695
    %v966 = vpow.pop %v965
    %v967 = vmul.f32 %v952, 1.442695
    %v968 = vpow.pop %v967
    %v969 = vmul.f32 %v953, 1.442695
    %v970 = vpow.pop %v969
    %v971 = vmul.f32 %v954, 1.442695
    %v972 = vpow.pop %v971
    %v973 = vmul.f32 %v955, 1.442695
    %v974 = vpow.pop %v973
    %v975 = vmul.f32 %v956, 1.442695
    %v976 = vpow.pop %v975
    %v977 = vmul.f32 %v957, 1.442695
    %v978 = vpow.pop %v977
    %v979 = vmul.f32 %v958, 1.442695
    %v980 = vpow.pop %v979
    %v981 = vmul.f32 %v959, 1.442695
    %v982 = vpow.pop %v981
    %v983 = vmul.f32 %v960, 1.442695
    %v984 = vpow.pop %v983
    %v985 = vmul.f32 %v961, 1.442695
    %v986 = vpow.pop %v985
    %v987 = vmul.f32 %v962, 1.442695
    %v988 = vpow.pop %v987
    %v989 = vmul.f32 %v963, 1.442695
    %v990 = vpow.pop %v989
    %v991 = vmul.f32 %v964, 1.442695
    %v992 = vpow.pop %v991
    %v993 = vadd.f32 %v966, 1.0
    %v994 = vadd.f32 %v968, 1.0
    %v995 = vadd.f32 %v970, 1.0
    %v996 = vadd.f32 %v972, 1.0
    %v997 = vadd.f32 %v974, 1.0
    %v998 = vadd.f32 %v976, 1.0
    %v999 = vadd.f32 %v978, 1.0
    %v1000 = vadd.f32 %v980, 1.0
    %v1001 = vadd.f32 %v982, 1.0
    %v1002 = vadd.f32 %v984, 1.0
    %v1003 = vadd.f32 %v986, 1.0
    %v1004 = vadd.f32 %v988, 1.0
    %v1005 = vadd.f32 %v990, 1.0
    %v1006 = vadd.f32 %v992, 1.0
    %v1007 = vrcp.pop %v993
    %v1008 = vmul.f32 %v993, %v1007
    %v1009 = vsub.f32 1.0, %v1008
    %v1010 = vmul.f32 %v1007, %v1009
    %v1011 = vadd.f32 %v1007, %v1010
    %vm1012 = vweird.f32 %v993
    %vm1013 = vweird.f32 %v1007
    %vm1014 = vmor %vm1012, %vm1013
    %v1015 = vsel %vm1014, %v1007, %v1011
    %v1016 = vand.u32 2147483647, %v993
    %vm1017 = vcmp.eq.f32.partialorder %v1016, 8.507059e+37
    %v1018 = vand.u32 %v993, 2147483648
    %v1019 = vor.u32 1.1754944e-38, %v1018
    %v1020 = vsel %vm1017, %v1019, %v1015
    %v1021 = vmul.f32 1.0, %v1020
    %v1022 = vrcp.pop %v994
    %v1023 = vmul.f32 %v994, %v1022
    %v1024 = vsub.f32 1.0, %v1023
    %v1025 = vmul.f32 %v1022, %v1024
    %v1026 = vadd.f32 %v1022, %v1025
    %vm1027 = vweird.f32 %v994
    %vm1028 = vweird.f32 %v1022
    %vm1029 = vmor %vm1027, %vm1028
    %v1030 = vsel %vm1029, %v1022, %v1026
    %v1031 = vand.u32 2147483647, %v994
    %vm1032 = vcmp.eq.f32.partialorder %v1031, 8.507059e+37
    %v1033 = vand.u32 %v994, 2147483648
    %v1034 = vor.u32 1.1754944e-38, %v1033
    %v1035 = vsel %vm1032, %v1034, %v1030
    %v1036 = vmul.f32 1.0, %v1035
    %v1037 = vrcp.pop %v995
    %v1038 = vmul.f32 %v995, %v1037
    %v1039 = vsub.f32 1.0, %v1038
    %v1040 = vmul.f32 %v1037, %v1039
    %v1041 = vadd.f32 %v1037, %v1040
    %vm1042 = vweird.f32 %v995
    %vm1043 = vweird.f32 %v1037
    %vm1044 = vmor %vm1042, %vm1043
    %v1045 = vsel %vm1044, %v1037, %v1041
    %v1046 = vand.u32 2147483647, %v995
    %vm1047 = vcmp.eq.f32.partialorder %v1046, 8.507059e+37
    %v1048 = vand.u32 %v995, 2147483648
    %v1049 = vor.u32 1.1754944e-38, %v1048
    %v1050 = vsel %vm1047, %v1049, %v1045
    %v1051 = vmul.f32 1.0, %v1050
    %v1052 = vrcp.pop %v996
    %v1053 = vmul.f32 %v996, %v1052
    %v1054 = vsub.f32 1.0, %v1053
    %v1055 = vmul.f32 %v1052, %v1054
    %v1056 = vadd.f32 %v1052, %v1055
    %vm1057 = vweird.f32 %v996
    %vm1058 = vweird.f32 %v1052
    %vm1059 = vmor %vm1057, %vm1058
    %v1060 = vsel %vm1059, %v1052, %v1056
    %v1061 = vand.u32 2147483647, %v996
    %vm1062 = vcmp.eq.f32.partialorder %v1061, 8.507059e+37
    %v1063 = vand.u32 %v996, 2147483648
    %v1064 = vor.u32 1.1754944e-38, %v1063
    %v1065 = vsel %vm1062, %v1064, %v1060
    %v1066 = vmul.f32 1.0, %v1065
    %v1067 = vrcp.pop %v997
    %v1068 = vmul.f32 %v997, %v1067
    %v1069 = vsub.f32 1.0, %v1068
    %v1070 = vmul.f32 %v1067, %v1069
    %v1071 = vadd.f32 %v1067, %v1070
    %vm1072 = vweird.f32 %v997
    %vm1073 = vweird.f32 %v1067
    %vm1074 = vmor %vm1072, %vm1073
    %v1075 = vsel %vm1074, %v1067, %v1071
    %v1076 = vand.u32 2147483647, %v997
    %vm1077 = vcmp.eq.f32.partialorder %v1076, 8.507059e+37
    %v1078 = vand.u32 %v997, 2147483648
    %v1079 = vor.u32 1.1754944e-38, %v1078
    %v1080 = vsel %vm1077, %v1079, %v1075
    %v1081 = vmul.f32 1.0, %v1080
    %v1082 = vrcp.pop %v998
    %v1083 = vmul.f32 %v998, %v1082
    %v1084 = vsub.f32 1.0, %v1083
    %v1085 = vmul.f32 %v1082, %v1084
    %v1086 = vadd.f32 %v1082, %v1085
    %vm1087 = vweird.f32 %v998
    %vm1088 = vweird.f32 %v1082
    %vm1089 = vmor %vm1087, %vm1088
    %v1090 = vsel %vm1089, %v1082, %v1086
    %v1091 = vand.u32 2147483647, %v998
    %vm1092 = vcmp.eq.f32.partialorder %v1091, 8.507059e+37
    %v1093 = vand.u32 %v998, 2147483648
    %v1094 = vor.u32 1.1754944e-38, %v1093
    %v1095 = vsel %vm1092, %v1094, %v1090
    %v1096 = vmul.f32 1.0, %v1095
    %v1097 = vrcp.pop %v999
    %v1098 = vmul.f32 %v999, %v1097
    %v1099 = vsub.f32 1.0, %v1098
    %v1100 = vmul.f32 %v1097, %v1099
    %v1101 = vadd.f32 %v1097, %v1100
    %vm1102 = vweird.f32 %v999
    %vm1103 = vweird.f32 %v1097
    %vm1104 = vmor %vm1102, %vm1103
    %v1105 = vsel %vm1104, %v1097, %v1101
    %v1106 = vand.u32 2147483647, %v999
    %vm1107 = vcmp.eq.f32.partialorder %v1106, 8.507059e+37
    %v1108 = vand.u32 %v999, 2147483648
    %v1109 = vor.u32 1.1754944e-38, %v1108
    %v1110 = vsel %vm1107, %v1109, %v1105
    %v1111 = vmul.f32 1.0, %v1110
    %v1112 = vrcp.pop %v1000
    %v1113 = vmul.f32 %v1000, %v1112
    %v1114 = vsub.f32 1.0, %v1113
    %v1115 = vmul.f32 %v1112, %v1114
    %v1116 = vadd.f32 %v1112, %v1115
    %vm1117 = vweird.f32 %v1000
    %vm1118 = vweird.f32 %v1112
    %vm1119 = vmor %vm1117, %vm1118
    %v1120 = vsel %vm1119, %v1112, %v1116
    %v1121 = vand.u32 2147483647, %v1000
    %vm1122 = vcmp.eq.f32.partialorder %v1121, 8.507059e+37
    %v1123 = vand.u32 %v1000, 2147483648
    %v1124 = vor.u32 1.1754944e-38, %v1123
    %v1125 = vsel %vm1122, %v1124, %v1120
    %v1126 = vmul.f32 1.0, %v1125
    %v1127 = vrcp.pop %v1001
    %v1128 = vmul.f32 %v1001, %v1127
    %v1129 = vsub.f32 1.0, %v1128
    %v1130 = vmul.f32 %v1127, %v1129
    %v1131 = vadd.f32 %v1127, %v1130
    %vm1132 = vweird.f32 %v1001
    %vm1133 = vweird.f32 %v1127
    %vm1134 = vmor %vm1132, %vm1133
    %v1135 = vsel %vm1134, %v1127, %v1131
    %v1136 = vand.u32 2147483647, %v1001
    %vm1137 = vcmp.eq.f32.partialorder %v1136, 8.507059e+37
    %v1138 = vand.u32 %v1001, 2147483648
    %v1139 = vor.u32 1.1754944e-38, %v1138
    %v1140 = vsel %vm1137, %v1139, %v1135
    %v1141 = vmul.f32 1.0, %v1140
    %v1142 = vrcp.pop %v1002
    %v1143 = vmul.f32 %v1002, %v1142
    %v1144 = vsub.f32 1.0, %v1143
    %v1145 = vmul.f32 %v1142, %v1144
    %v1146 = vadd.f32 %v1142, %v1145
    %vm1147 = vweird.f32 %v1002
    %vm1148 = vweird.f32 %v1142
    %vm1149 = vmor %vm1147, %vm1148
    %v1150 = vsel %vm1149, %v1142, %v1146
    %v1151 = vand.u32 2147483647, %v1002
    %vm1152 = vcmp.eq.f32.partialorder %v1151, 8.507059e+37
    %v1153 = vand.u32 %v1002, 2147483648
    %v1154 = vor.u32 1.1754944e-38, %v1153
    %v1155 = vsel %vm1152, %v1154, %v1150
    %v1156 = vmul.f32 1.0, %v1155
    %v1157 = vrcp.pop %v1003
    %v1158 = vmul.f32 %v1003, %v1157
    %v1159 = vsub.f32 1.0, %v1158
    %v1160 = vmul.f32 %v1157, %v1159
    %v1161 = vadd.f32 %v1157, %v1160
    %vm1162 = vweird.f32 %v1003
    %vm1163 = vweird.f32 %v1157
    %vm1164 = vmor %vm1162, %vm1163
    %v1165 = vsel %vm1164, %v1157, %v1161
    %v1166 = vand.u32 2147483647, %v1003
    %vm1167 = vcmp.eq.f32.partialorder %v1166, 8.507059e+37
    %v1168 = vand.u32 %v1003, 2147483648
    %v1169 = vor.u32 1.1754944e-38, %v1168
    %v1170 = vsel %vm1167, %v1169, %v1165
    %v1171 = vmul.f32 1.0, %v1170
    %v1172 = vrcp.pop %v1004
    %v1173 = vmul.f32 %v1004, %v1172
    %v1174 = vsub.f32 1.0, %v1173
    %v1175 = vmul.f32 %v1172, %v1174
    %v1176 = vadd.f32 %v1172, %v1175
    %vm1177 = vweird.f32 %v1004
    %vm1178 = vweird.f32 %v1172
    %vm1179 = vmor %vm1177, %vm1178
    %v1180 = vsel %vm1179, %v1172, %v1176
    %v1181 = vand.u32 2147483647, %v1004
    %vm1182 = vcmp.eq.f32.partialorder %v1181, 8.507059e+37
    %v1183 = vand.u32 %v1004, 2147483648
    %v1184 = vor.u32 1.1754944e-38, %v1183
    %v1185 = vsel %vm1182, %v1184, %v1180
    %v1186 = vmul.f32 1.0, %v1185
    %v1187 = vrcp.pop %v1005
    %v1188 = vmul.f32 %v1005, %v1187
    %v1189 = vsub.f32 1.0, %v1188
    %v1190 = vmul.f32 %v1187, %v1189
    %v1191 = vadd.f32 %v1187, %v1190
    %vm1192 = vweird.f32 %v1005
    %vm1193 = vweird.f32 %v1187
    %vm1194 = vmor %vm1192, %vm1193
    %v1195 = vsel %vm1194, %v1187, %v1191
    %v1196 = vand.u32 2147483647, %v1005
    %vm1197 = vcmp.eq.f32.partialorder %v1196, 8.507059e+37
    %v1198 = vand.u32 %v1005, 2147483648
    %v1199 = vor.u32 1.1754944e-38, %v1198
    %v1200 = vsel %vm1197, %v1199, %v1195
    %v1201 = vmul.f32 1.0, %v1200
    %v1202 = vrcp.pop %v1006
    %v1203 = vmul.f32 %v1006, %v1202
    %v1204 = vsub.f32 1.0, %v1203
    %v1205 = vmul.f32 %v1202, %v1204
    %v1206 = vadd.f32 %v1202, %v1205
    %vm1207 = vweird.f32 %v1006
    %vm1208 = vweird.f32 %v1202
    %vm1209 = vmor %vm1207, %vm1208
    %v1210 = vsel %vm1209, %v1202, %v1206
    %v1211 = vand.u32 2147483647, %v1006
    %vm1212 = vcmp.eq.f32.partialorder %v1211, 8.507059e+37
    %v1213 = vand.u32 %v1006, 2147483648
    %v1214 = vor.u32 1.1754944e-38, %v1213
    %v1215 = vsel %vm1212, %v1214, %v1210
    %v1216 = vmul.f32 1.0, %v1215
    %v1217 = vpack.c.bf16 %v1051, %v1021
    %v1218 = vpack.c.bf16 %v1066, %v1036
    %v1219 = vpack.c.bf16 %v1111, %v1081
    %v1220 = vpack.c.bf16 %v1126, %v1096
    %v1221 = vpack.c.bf16 %v1171, %v1141
    %v1222 = vpack.c.bf16 %v1186, %v1156
    %v1223 = vpack.c.bf16 %v1201, %v1201
    %v1224 = vpack.c.bf16 %v1216, %v1216
    %v1225 = vld [vmem:[%s5] sm:$0xff]
    %v1226 = vld [vmem:[%s5 + $0x8] sm:$0xff]
    %v1227 = vld [vmem:[%s5 + $0x10] sm:$0xff]
    %v1228 = vld [vmem:[%s5 + $0x18] sm:$0xf]
    %v1229 = vld [vmem:[%s5 + $0x1c] sm:$0xff]
    %v1230 = vld [vmem:[%s5 + $0x24] sm:$0xff]
    %v1231 = vld [vmem:[%s5 + $0x2c] sm:$0xff]
    %v1232 = vld [vmem:[%s5 + $0x34] sm:$0xf]
    %v1233 = vld [vmem:[%s5 + $0x38] sm:$0xff]
    %v1234 = vld [vmem:[%s5 + $0x40] sm:$0xff]
    %v1235 = vld [vmem:[%s5 + $0x48] sm:$0xff]
    %v1236 = vld [vmem:[%s5 + $0x50] sm:$0xf]
    %v1237 = vld [vmem:[%s5 + $0x54] sm:$0xff]
    %v1238 = vld [vmem:[%s5 + $0x5c] sm:$0xff]
    %v1239 = vld [vmem:[%s5 + $0x64] sm:$0xff]
    %v1240 = vld [vmem:[%s5 + $0x6c] sm:$0xf]
    %v1241 = vld [vmem:[%s5 + $0x70] sm:$0xff]
    %v1242 = vld [vmem:[%s5 + $0x78] sm:$0xff]
    %v1243 = vld [vmem:[%s5 + $0x80] sm:$0xff]
    %v1244 = vld [vmem:[%s5 + $0x88] sm:$0xf]
    %v1245 = vld [vmem:[%s5 + $0x8c] sm:$0xff]
    %v1246 = vld [vmem:[%s5 + $0x94] sm:$0xff]
    %v1247 = vld [vmem:[%s5 + $0x9c] sm:$0xff]
    %v1248 = vld [vmem:[%s5 + $0xa4] sm:$0xf]
    %v1249 = vld [vmem:[%s5 + $0xa8] sm:$0xff]
    %v1250 = vld [vmem:[%s5 + $0xb0] sm:$0xff]
    %v1251 = vld [vmem:[%s5 + $0xb8] sm:$0xff]
    %v1252 = vld [vmem:[%s5 + $0xc0] sm:$0xf]
    %v1253 = vld [vmem:[%s5 + $0xc4] sm:$0xff]
    %v1254 = vld [vmem:[%s5 + $0xcc] sm:$0xff]
    %v1255 = vld [vmem:[%s5 + $0xd4] sm:$0xff]
    %v1256 = vld [vmem:[%s5 + $0xdc] sm:$0xf]
    %v1257 = vld [vmem:[%s5 + $0xe0] sm:$0xff]
    %v1258 = vld [vmem:[%s5 + $0xe8] sm:$0xff]
    %v1259 = vld [vmem:[%s5 + $0xf0] sm:$0xff]
    %v1260 = vld [vmem:[%s5 + $0xf8] sm:$0xf]
    %v1261 = vld [vmem:[%s5 + $0xfc] sm:$0xff]
    %v1262 = vld [vmem:[%s5 + $0x104] sm:$0xff]
    %v1263 = vld [vmem:[%s5 + $0x10c] sm:$0xff]
    %v1264 = vld [vmem:[%s5 + $0x114] sm:$0xf]
    %v1265 = vld [vmem:[%s5 + $0x118] sm:$0xff]
    %v1266 = vld [vmem:[%s5 + $0x120] sm:$0xff]
    %v1267 = vld [vmem:[%s5 + $0x128] sm:$0xff]
    %v1268 = vld [vmem:[%s5 + $0x130] sm:$0xf]
    %v1269 = vld [vmem:[%s5 + $0x134] sm:$0xff]
    %v1270 = vld [vmem:[%s5 + $0x13c] sm:$0xff]
    %v1271 = vld [vmem:[%s5 + $0x144] sm:$0xff]
    %v1272 = vld [vmem:[%s5 + $0x14c] sm:$0xf]
    %v1273 = vld [vmem:[%s5 + $0x150] sm:$0xff]
    %v1274 = vld [vmem:[%s5 + $0x158] sm:$0xff]
    %v1275 = vld [vmem:[%s5 + $0x160] sm:$0xff]
    %v1276 = vld [vmem:[%s5 + $0x168] sm:$0xf]
    %v1277 = vld [vmem:[%s5 + $0x16c] sm:$0xff]
    %v1278 = vld [vmem:[%s5 + $0x174] sm:$0xff]
    %v1279 = vld [vmem:[%s5 + $0x17c] sm:$0xff]
    %v1280 = vld [vmem:[%s5 + $0x184] sm:$0xf]
    %v1281 = vld [vmem:[%s5 + $0x188] sm:$0xff]
    %v1282 = vld [vmem:[%s5 + $0x190] sm:$0xff]
    %v1283 = vld [vmem:[%s5 + $0x198] sm:$0xff]
    %v1284 = vld [vmem:[%s5 + $0x1a0] sm:$0xf]
    %v1285 = vld [vmem:[%s5 + $0x1a4] sm:$0xff]
    %v1286 = vld [vmem:[%s5 + $0x1ac] sm:$0xff]
    %v1287 = vld [vmem:[%s5 + $0x1b4] sm:$0xff]
    %v1288 = vld [vmem:[%s5 + $0x1bc] sm:$0xf]
    %v1289 = vld [vmem:[%s5 + $0x1c0] sm:$0xff]
    %v1290 = vld [vmem:[%s5 + $0x1c8] sm:$0xff]
    %v1291 = vld [vmem:[%s5 + $0x1d0] sm:$0xff]
    %v1292 = vld [vmem:[%s5 + $0x1d8] sm:$0xf]
    %v1293 = vld [vmem:[%s5 + $0x1dc] sm:$0xff]
    %v1294 = vld [vmem:[%s5 + $0x1e4] sm:$0xff]
    %v1295 = vld [vmem:[%s5 + $0x1ec] sm:$0xff]
    %v1296 = vld [vmem:[%s5 + $0x1f4] sm:$0xf]
    %v1297 = vld [vmem:[%s5 + $0x1f8] sm:$0xff]
    %v1298 = vld [vmem:[%s5 + $0x200] sm:$0xff]
    %v1299 = vld [vmem:[%s5 + $0x208] sm:$0xff]
    %v1300 = vld [vmem:[%s5 + $0x210] sm:$0xf]
    %v1301 = vld [vmem:[%s5 + $0x214] sm:$0xff]
    %v1302 = vld [vmem:[%s5 + $0x21c] sm:$0xff]
    %v1303 = vld [vmem:[%s5 + $0x224] sm:$0xff]
    %v1304 = vld [vmem:[%s5 + $0x22c] sm:$0xf]
    %v1305 = vld [vmem:[%s5 + $0x230] sm:$0xff]
    %v1306 = vld [vmem:[%s5 + $0x238] sm:$0xff]
    %v1307 = vld [vmem:[%s5 + $0x240] sm:$0xff]
    %v1308 = vld [vmem:[%s5 + $0x248] sm:$0xf]
    %v1393 = vunpack.c.l.b16 %v1225
    %v1394 = vunpack.c.h.b16 %v1225
    %v1395 = vunpack.c.l.b16 %v1226
    %v1396 = vunpack.c.h.b16 %v1226
    %v1397 = vunpack.c.l.b16 %v1227
    %v1398 = vunpack.c.h.b16 %v1227
    %v1399 = vunpack.c.l.b16 %v1228
    %v1400 = vunpack.c.l.b16 %v1229
    %v1401 = vunpack.c.h.b16 %v1229
    %v1402 = vunpack.c.l.b16 %v1230
    %v1403 = vunpack.c.h.b16 %v1230
    %v1404 = vunpack.c.l.b16 %v1231
    %v1405 = vunpack.c.h.b16 %v1231
    %v1406 = vunpack.c.l.b16 %v1232
    %v1407 = vunpack.c.l.b16 %v1233
    %v1408 = vunpack.c.h.b16 %v1233
    %v1409 = vunpack.c.l.b16 %v1234
    %v1410 = vunpack.c.h.b16 %v1234
    %v1411 = vunpack.c.l.b16 %v1235
    %v1412 = vunpack.c.h.b16 %v1235
    %v1413 = vunpack.c.l.b16 %v1236
    %v1414 = vunpack.c.l.b16 %v1237
    %v1415 = vunpack.c.h.b16 %v1237
    %v1416 = vunpack.c.l.b16 %v1238
    %v1417 = vunpack.c.h.b16 %v1238
    %v1418 = vunpack.c.l.b16 %v1239
    %v1419 = vunpack.c.h.b16 %v1239
    %v1420 = vunpack.c.l.b16 %v1240
    %v1421 = vunpack.c.l.b16 %v1241
    %v1422 = vunpack.c.h.b16 %v1241
    %v1423 = vunpack.c.l.b16 %v1242
    %v1424 = vunpack.c.h.b16 %v1242
    %v1425 = vunpack.c.l.b16 %v1243
    %v1426 = vunpack.c.h.b16 %v1243
    %v1427 = vunpack.c.l.b16 %v1244
    %v1428 = vunpack.c.l.b16 %v1245
    %v1429 = vunpack.c.h.b16 %v1245
    %v1430 = vunpack.c.l.b16 %v1246
    %v1431 = vunpack.c.h.b16 %v1246
    %v1432 = vunpack.c.l.b16 %v1247
    %v1433 = vunpack.c.h.b16 %v1247
    %v1434 = vunpack.c.l.b16 %v1248
    %v1435 = vunpack.c.l.b16 %v1249
    %v1436 = vunpack.c.h.b16 %v1249
    %v1437 = vunpack.c.l.b16 %v1250
    %v1438 = vunpack.c.h.b16 %v1250
    %v1439 = vunpack.c.l.b16 %v1251
    %v1440 = vunpack.c.h.b16 %v1251
    %v1441 = vunpack.c.l.b16 %v1252
    %v1442 = vunpack.c.l.b16 %v1253
    %v1443 = vunpack.c.h.b16 %v1253
    %v1444 = vunpack.c.l.b16 %v1254
    %v1445 = vunpack.c.h.b16 %v1254
    %v1446 = vunpack.c.l.b16 %v1255
    %v1447 = vunpack.c.h.b16 %v1255
    %v1448 = vunpack.c.l.b16 %v1256
    %v1449 = vunpack.c.l.b16 %v1257
    %v1450 = vunpack.c.h.b16 %v1257
    %v1451 = vunpack.c.l.b16 %v1258
    %v1452 = vunpack.c.h.b16 %v1258
    %v1453 = vunpack.c.l.b16 %v1259
    %v1454 = vunpack.c.h.b16 %v1259
    %v1455 = vunpack.c.l.b16 %v1260
    %v1456 = vunpack.c.l.b16 %v1261
    %v1457 = vunpack.c.h.b16 %v1261
    %v1458 = vunpack.c.l.b16 %v1262
    %v1459 = vunpack.c.h.b16 %v1262
    %v1460 = vunpack.c.l.b16 %v1263
    %v1461 = vunpack.c.h.b16 %v1263
    %v1462 = vunpack.c.l.b16 %v1264
    %v1463 = vunpack.c.l.b16 %v1265
    %v1464 = vunpack.c.h.b16 %v1265
    %v1465 = vunpack.c.l.b16 %v1266
    %v1466 = vunpack.c.h.b16 %v1266
    %v1467 = vunpack.c.l.b16 %v1267
    %v1468 = vunpack.c.h.b16 %v1267
    %v1469 = vunpack.c.l.b16 %v1268
    %v1470 = vunpack.c.l.b16 %v1269
    %v1471 = vunpack.c.h.b16 %v1269
    %v1472 = vunpack.c.l.b16 %v1270
    %v1473 = vunpack.c.h.b16 %v1270
    %v1474 = vunpack.c.l.b16 %v1271
    %v1475 = vunpack.c.h.b16 %v1271
    %v1476 = vunpack.c.l.b16 %v1272
    %v1477 = vunpack.c.l.b16 %v1273
    %v1478 = vunpack.c.h.b16 %v1273
    %v1479 = vunpack.c.l.b16 %v1274
    %v1480 = vunpack.c.h.b16 %v1274
    %v1481 = vunpack.c.l.b16 %v1275
    %v1482 = vunpack.c.h.b16 %v1275
    %v1483 = vunpack.c.l.b16 %v1276
    %v1484 = vunpack.c.l.b16 %v1277
    %v1485 = vunpack.c.h.b16 %v1277
    %v1486 = vunpack.c.l.b16 %v1278
    %v1487 = vunpack.c.h.b16 %v1278
    %v1488 = vunpack.c.l.b16 %v1279
    %v1489 = vunpack.c.h.b16 %v1279
    %v1490 = vunpack.c.l.b16 %v1280
    %v1491 = vunpack.c.l.b16 %v1281
    %v1492 = vunpack.c.h.b16 %v1281
    %v1493 = vunpack.c.l.b16 %v1282
    %v1494 = vunpack.c.h.b16 %v1282
    %v1495 = vunpack.c.l.b16 %v1283
    %v1496 = vunpack.c.h.b16 %v1283
    %v1497 = vunpack.c.l.b16 %v1284
    %v1498 = vunpack.c.l.b16 %v1285
    %v1499 = vunpack.c.h.b16 %v1285
    %v1500 = vunpack.c.l.b16 %v1286
    %v1501 = vunpack.c.h.b16 %v1286
    %v1502 = vunpack.c.l.b16 %v1287
    %v1503 = vunpack.c.h.b16 %v1287
    %v1504 = vunpack.c.l.b16 %v1288
    %v1505 = vunpack.c.l.b16 %v1289
    %v1506 = vunpack.c.h.b16 %v1289
    %v1507 = vunpack.c.l.b16 %v1290
    %v1508 = vunpack.c.h.b16 %v1290
    %v1509 = vunpack.c.l.b16 %v1291
    %v1510 = vunpack.c.h.b16 %v1291
    %v1511 = vunpack.c.l.b16 %v1292
    %v1512 = vunpack.c.l.b16 %v1293
    %v1513 = vunpack.c.h.b16 %v1293
    %v1514 = vunpack.c.l.b16 %v1294
    %v1515 = vunpack.c.h.b16 %v1294
    %v1516 = vunpack.c.l.b16 %v1295
    %v1517 = vunpack.c.h.b16 %v1295
    %v1518 = vunpack.c.l.b16 %v1296
    %v1519 = vunpack.c.l.b16 %v1297
    %v1520 = vunpack.c.h.b16 %v1297
    %v1521 = vunpack.c.l.b16 %v1298
    %v1522 = vunpack.c.h.b16 %v1298
    %v1523 = vunpack.c.l.b16 %v1299
    %v1524 = vunpack.c.h.b16 %v1299
    %v1525 = vunpack.c.l.b16 %v1300
    %v1526 = vunpack.c.l.b16 %v1301
    %v1527 = vunpack.c.h.b16 %v1301
    %v1528 = vunpack.c.l.b16 %v1302
    %v1529 = vunpack.c.h.b16 %v1302
    %v1530 = vunpack.c.l.b16 %v1303
    %v1531 = vunpack.c.h.b16 %v1303
    %v1532 = vunpack.c.l.b16 %v1304
    %v1533 = vunpack.c.l.b16 %v1305
    %v1534 = vunpack.c.h.b16 %v1305
    %v1535 = vunpack.c.l.b16 %v1306
    %v1536 = vunpack.c.h.b16 %v1306
    %v1537 = vunpack.c.l.b16 %v1307
    %v1538 = vunpack.c.h.b16 %v1307
    %v1539 = vunpack.c.l.b16 %v1308
    %v1540 = vpack.c.b16 %v1400, %v1393
    %v1541 = vpack.c.b16 %v1401, %v1394
    %v1542 = vpack.c.b16 %v1402, %v1395
    %v1543 = vpack.c.b16 %v1403, %v1396
    %v1544 = vpack.c.b16 %v1404, %v1397
    %v1545 = vpack.c.b16 %v1405, %v1398
    %v1546 = vpack.c.b16 %v1406, %v1399
    %v1547 = vpack.c.b16 %v1414, %v1407
    %v1548 = vpack.c.b16 %v1415, %v1408
    %v1549 = vpack.c.b16 %v1416, %v1409
    %v1550 = vpack.c.b16 %v1417, %v1410
    %v1551 = vpack.c.b16 %v1418, %v1411
    %v1552 = vpack.c.b16 %v1419, %v1412
    %v1553 = vpack.c.b16 %v1420, %v1413
    %v1554 = vpack.c.b16 %v1428, %v1421
    %v1555 = vpack.c.b16 %v1429, %v1422
    %v1556 = vpack.c.b16 %v1430, %v1423
    %v1557 = vpack.c.b16 %v1431, %v1424
    %v1558 = vpack.c.b16 %v1432, %v1425
    %v1559 = vpack.c.b16 %v1433, %v1426
    %v1560 = vpack.c.b16 %v1434, %v1427
    %v1561 = vpack.c.b16 %v1442, %v1435
    %v1562 = vpack.c.b16 %v1443, %v1436
    %v1563 = vpack.c.b16 %v1444, %v1437
    %v1564 = vpack.c.b16 %v1445, %v1438
    %v1565 = vpack.c.b16 %v1446, %v1439
    %v1566 = vpack.c.b16 %v1447, %v1440
    %v1567 = vpack.c.b16 %v1448, %v1441
    %v1568 = vpack.c.b16 %v1456, %v1449
    %v1569 = vpack.c.b16 %v1457, %v1450
    %v1570 = vpack.c.b16 %v1458, %v1451
    %v1571 = vpack.c.b16 %v1459, %v1452
    %v1572 = vpack.c.b16 %v1460, %v1453
    %v1573 = vpack.c.b16 %v1461, %v1454
    %v1574 = vpack.c.b16 %v1462, %v1455
    %v1575 = vpack.c.b16 %v1470, %v1463
    %v1576 = vpack.c.b16 %v1471, %v1464
    %v1577 = vpack.c.b16 %v1472, %v1465
    %v1578 = vpack.c.b16 %v1473, %v1466
    %v1579 = vpack.c.b16 %v1474, %v1467
    %v1580 = vpack.c.b16 %v1475, %v1468
    %v1581 = vpack.c.b16 %v1476, %v1469
    %v1582 = vpack.c.b16 %v1484, %v1477
    %v1583 = vpack.c.b16 %v1485, %v1478
    %v1584 = vpack.c.b16 %v1486, %v1479
    %v1585 = vpack.c.b16 %v1487, %v1480
    %v1586 = vpack.c.b16 %v1488, %v1481
    %v1587 = vpack.c.b16 %v1489, %v1482
    %v1588 = vpack.c.b16 %v1490, %v1483
    %v1589 = vpack.c.b16 %v1498, %v1491
    %v1590 = vpack.c.b16 %v1499, %v1492
    %v1591 = vpack.c.b16 %v1500, %v1493
    %v1592 = vpack.c.b16 %v1501, %v1494
    %v1593 = vpack.c.b16 %v1502, %v1495
    %v1594 = vpack.c.b16 %v1503, %v1496
    %v1595 = vpack.c.b16 %v1504, %v1497
    %v1596 = vpack.c.b16 %v1512, %v1505
    %v1597 = vpack.c.b16 %v1513, %v1506
    %v1598 = vpack.c.b16 %v1514, %v1507
    %v1599 = vpack.c.b16 %v1515, %v1508
    %v1600 = vpack.c.b16 %v1516, %v1509
    %v1601 = vpack.c.b16 %v1517, %v1510
    %v1602 = vpack.c.b16 %v1518, %v1511
    %v1603 = vpack.c.b16 %v1526, %v1519
    %v1604 = vpack.c.b16 %v1527, %v1520
    %v1605 = vpack.c.b16 %v1528, %v1521
    %v1606 = vpack.c.b16 %v1529, %v1522
    %v1607 = vpack.c.b16 %v1530, %v1523
    %v1608 = vpack.c.b16 %v1531, %v1524
    %v1609 = vpack.c.b16 %v1532, %v1525
    %v1610 = vpack.c.b16 %v1533, %v1533
    %v1611 = vpack.c.b16 %v1534, %v1534
    %v1612 = vpack.c.b16 %v1535, %v1535
    %v1613 = vpack.c.b16 %v1536, %v1536
    %v1614 = vpack.c.b16 %v1537, %v1537
    %v1615 = vpack.c.b16 %v1538, %v1538
    %v1616 = vpack.c.b16 %v1539, %v1539
    %v1688 = vsel %vm440, %v1218, 0
    %v1691 = vsel %vm440, %v1220, 0
    %v1694 = vsel %vm440, %v1222, 0
    %v1697 = vsel %vm440, %v1224, 0
    %vm1699 = vcmask 1043456
    %v1701 = vsel %vm1699, %v1610, 0
    %v1704 = vsel %vm1699, %v1611, 0
    %v1707 = vsel %vm1699, %v1612, 0
    %v1710 = vsel %vm1699, %v1613, 0
    %v1713 = vsel %vm1699, %v1614, 0
    %v1716 = vsel %vm1699, %v1615, 0
    %v1719 = vsel %vm1699, %v1616, 0
    %1721 = vmatpush.bf16.msra.mxu0 %v1589
    %1722 = vmatpush.bf16.msra.mxu0 %v1582
    %1723 = vmatpush.bf16.msra.mxu0 %v1575
    %1724 = vmatpush.bf16.msra.mxu0 %v1568
    %1725 = vmatpush.bf16.msra.mxu0 %v1561
    %1726 = vmatpush.bf16.msra.mxu0 %v1554
    %1727 = vmatpush.bf16.msra.mxu0 %v1547
    %1728 = vmatpush.bf16.msra.mxu0 %v1540
    %1729 = vmatmul.bf16.gmra.mxu0 %v1217
    %v1730 = vpop.f32.mrf.mxu0
    %v1731 = vadd.f32 0.0, %v1730
    %v1732 = vpop.f32.mrf.mxu0
    %v1733 = vadd.f32 0.0, %v1732
    %1734 = vmatmul.bf16.gmra.mxu0 %v1219
    %v1735 = vpop.f32.mrf.mxu0
    %v1736 = vadd.f32 0.0, %v1735
    %v1737 = vpop.f32.mrf.mxu0
    %v1738 = vadd.f32 0.0, %v1737
    %1739 = vmatmul.bf16.gmra.mxu0 %v1221
    %v1740 = vpop.f32.mrf.mxu0
    %v1741 = vadd.f32 0.0, %v1740
    %v1742 = vpop.f32.mrf.mxu0
    %v1743 = vadd.f32 0.0, %v1742
    %1744 = vmatmul.bf16.gmra.mxu0 %v1223
    %v1745 = vpop.f32.mrf.mxu0
    %v1746 = vadd.f32 0.0, %v1745
    %v1747 = vpop.f32.mrf.mxu0
    %1748 = vdwg.mxu0
    %1749 = vmatpush.bf16.msra.mxu0 0
    %1750 = vmatpush.bf16.msra.mxu0 0
    %1751 = vmatpush.bf16.msra.mxu0 0
    %1752 = vmatpush.bf16.msra.mxu0 0
    %1753 = vmatpush.bf16.msra.mxu0 0
    %1754 = vmatpush.bf16.msra.mxu0 %v1701
    %1755 = vmatpush.bf16.msra.mxu0 %v1603
    %1756 = vmatpush.bf16.msra.mxu0 %v1596
    %1757 = vmatmul.bf16.gmra.mxu0 %v1688
    %v1758 = vpop.f32.mrf.mxu0
    %v1759 = vadd.f32 %v1731, %v1758
    %v1760 = vpop.f32.mrf.mxu0
    %v1761 = vadd.f32 %v1733, %v1760
    %1762 = vmatmul.bf16.gmra.mxu0 %v1691
    %v1763 = vpop.f32.mrf.mxu0
    %v1764 = vadd.f32 %v1736, %v1763
    %v1765 = vpop.f32.mrf.mxu0
    %v1766 = vadd.f32 %v1738, %v1765
    %1767 = vmatmul.bf16.gmra.mxu0 %v1694
    %v1768 = vpop.f32.mrf.mxu0
    %v1769 = vadd.f32 %v1741, %v1768
    %v1770 = vpop.f32.mrf.mxu0
    %v1771 = vadd.f32 %v1743, %v1770
    %1772 = vmatmul.bf16.gmra.mxu0 %v1697
    %v1773 = vpop.f32.mrf.mxu0
    %v1774 = vadd.f32 %v1746, %v1773
    %v1775 = vpop.f32.mrf.mxu0
    %1776 = vdwg.mxu0
    %1777 = vmatpush.bf16.msra.mxu0 %v1590
    %1778 = vmatpush.bf16.msra.mxu0 %v1583
    %1779 = vmatpush.bf16.msra.mxu0 %v1576
    %1780 = vmatpush.bf16.msra.mxu0 %v1569
    %1781 = vmatpush.bf16.msra.mxu0 %v1562
    %1782 = vmatpush.bf16.msra.mxu0 %v1555
    %1783 = vmatpush.bf16.msra.mxu0 %v1548
    %1784 = vmatpush.bf16.msra.mxu0 %v1541
    %1785 = vmatmul.bf16.gmra.mxu0 %v1217
    %v1786 = vpop.f32.mrf.mxu0
    %v1787 = vadd.f32 0.0, %v1786
    %v1788 = vpop.f32.mrf.mxu0
    %v1789 = vadd.f32 0.0, %v1788
    %1790 = vmatmul.bf16.gmra.mxu0 %v1219
    %v1791 = vpop.f32.mrf.mxu0
    %v1792 = vadd.f32 0.0, %v1791
    %v1793 = vpop.f32.mrf.mxu0
    %v1794 = vadd.f32 0.0, %v1793
    %1795 = vmatmul.bf16.gmra.mxu0 %v1221
    %v1796 = vpop.f32.mrf.mxu0
    %v1797 = vadd.f32 0.0, %v1796
    %v1798 = vpop.f32.mrf.mxu0
    %v1799 = vadd.f32 0.0, %v1798
    %1800 = vmatmul.bf16.gmra.mxu0 %v1223
    %v1801 = vpop.f32.mrf.mxu0
    %v1802 = vadd.f32 0.0, %v1801
    %v1803 = vpop.f32.mrf.mxu0
    %1804 = vdwg.mxu0
    %1805 = vmatpush.bf16.msra.mxu0 0
    %1806 = vmatpush.bf16.msra.mxu0 0
    %1807 = vmatpush.bf16.msra.mxu0 0
    %1808 = vmatpush.bf16.msra.mxu0 0
    %1809 = vmatpush.bf16.msra.mxu0 0
    %1810 = vmatpush.bf16.msra.mxu0 %v1704
    %1811 = vmatpush.bf16.msra.mxu0 %v1604
    %1812 = vmatpush.bf16.msra.mxu0 %v1597
    %1813 = vmatmul.bf16.gmra.mxu0 %v1688
    %v1814 = vpop.f32.mrf.mxu0
    %v1815 = vadd.f32 %v1787, %v1814
    %v1816 = vpop.f32.mrf.mxu0
    %v1817 = vadd.f32 %v1789, %v1816
    %1818 = vmatmul.bf16.gmra.mxu0 %v1691
    %v1819 = vpop.f32.mrf.mxu0
    %v1820 = vadd.f32 %v1792, %v1819
    %v1821 = vpop.f32.mrf.mxu0
    %v1822 = vadd.f32 %v1794, %v1821
    %1823 = vmatmul.bf16.gmra.mxu0 %v1694
    %v1824 = vpop.f32.mrf.mxu0
    %v1825 = vadd.f32 %v1797, %v1824
    %v1826 = vpop.f32.mrf.mxu0
    %v1827 = vadd.f32 %v1799, %v1826
    %1828 = vmatmul.bf16.gmra.mxu0 %v1697
    %v1829 = vpop.f32.mrf.mxu0
    %v1830 = vadd.f32 %v1802, %v1829
    %v1831 = vpop.f32.mrf.mxu0
    %1832 = vdwg.mxu0
    %1833 = vmatpush.bf16.msra.mxu0 %v1591
    %1834 = vmatpush.bf16.msra.mxu0 %v1584
    %1835 = vmatpush.bf16.msra.mxu0 %v1577
    %1836 = vmatpush.bf16.msra.mxu0 %v1570
    %1837 = vmatpush.bf16.msra.mxu0 %v1563
    %1838 = vmatpush.bf16.msra.mxu0 %v1556
    %1839 = vmatpush.bf16.msra.mxu0 %v1549
    %1840 = vmatpush.bf16.msra.mxu0 %v1542
    %1841 = vmatmul.bf16.gmra.mxu0 %v1217
    %v1842 = vpop.f32.mrf.mxu0
    %v1843 = vadd.f32 0.0, %v1842
    %v1844 = vpop.f32.mrf.mxu0
    %v1845 = vadd.f32 0.0, %v1844
    %1846 = vmatmul.bf16.gmra.mxu0 %v1219
    %v1847 = vpop.f32.mrf.mxu0
    %v1848 = vadd.f32 0.0, %v1847
    %v1849 = vpop.f32.mrf.mxu0
    %v1850 = vadd.f32 0.0, %v1849
    %1851 = vmatmul.bf16.gmra.mxu0 %v1221
    %v1852 = vpop.f32.mrf.mxu0
    %v1853 = vadd.f32 0.0, %v1852
    %v1854 = vpop.f32.mrf.mxu0
    %v1855 = vadd.f32 0.0, %v1854
    %1856 = vmatmul.bf16.gmra.mxu0 %v1223
    %v1857 = vpop.f32.mrf.mxu0
    %v1858 = vadd.f32 0.0, %v1857
    %v1859 = vpop.f32.mrf.mxu0
    %1860 = vdwg.mxu0
    %1861 = vmatpush.bf16.msra.mxu0 0
    %1862 = vmatpush.bf16.msra.mxu0 0
    %1863 = vmatpush.bf16.msra.mxu0 0
    %1864 = vmatpush.bf16.msra.mxu0 0
    %1865 = vmatpush.bf16.msra.mxu0 0
    %1866 = vmatpush.bf16.msra.mxu0 %v1707
    %1867 = vmatpush.bf16.msra.mxu0 %v1605
    %1868 = vmatpush.bf16.msra.mxu0 %v1598
    %1869 = vmatmul.bf16.gmra.mxu0 %v1688
    %v1870 = vpop.f32.mrf.mxu0
    %v1871 = vadd.f32 %v1843, %v1870
    %v1872 = vpop.f32.mrf.mxu0
    %v1873 = vadd.f32 %v1845, %v1872
    %1874 = vmatmul.bf16.gmra.mxu0 %v1691
    %v1875 = vpop.f32.mrf.mxu0
    %v1876 = vadd.f32 %v1848, %v1875
    %v1877 = vpop.f32.mrf.mxu0
    %v1878 = vadd.f32 %v1850, %v1877
    %1879 = vmatmul.bf16.gmra.mxu0 %v1694
    %v1880 = vpop.f32.mrf.mxu0
    %v1881 = vadd.f32 %v1853, %v1880
    %v1882 = vpop.f32.mrf.mxu0
    %v1883 = vadd.f32 %v1855, %v1882
    %1884 = vmatmul.bf16.gmra.mxu0 %v1697
    %v1885 = vpop.f32.mrf.mxu0
    %v1886 = vadd.f32 %v1858, %v1885
    %v1887 = vpop.f32.mrf.mxu0
    %1888 = vdwg.mxu0
    %1889 = vmatpush.bf16.msra.mxu0 %v1592
    %1890 = vmatpush.bf16.msra.mxu0 %v1585
    %1891 = vmatpush.bf16.msra.mxu0 %v1578
    %1892 = vmatpush.bf16.msra.mxu0 %v1571
    %1893 = vmatpush.bf16.msra.mxu0 %v1564
    %1894 = vmatpush.bf16.msra.mxu0 %v1557
    %1895 = vmatpush.bf16.msra.mxu0 %v1550
    %1896 = vmatpush.bf16.msra.mxu0 %v1543
    %1897 = vmatmul.bf16.gmra.mxu0 %v1217
    %v1898 = vpop.f32.mrf.mxu0
    %v1899 = vadd.f32 0.0, %v1898
    %v1900 = vpop.f32.mrf.mxu0
    %v1901 = vadd.f32 0.0, %v1900
    %1902 = vmatmul.bf16.gmra.mxu0 %v1219
    %v1903 = vpop.f32.mrf.mxu0
    %v1904 = vadd.f32 0.0, %v1903
    %v1905 = vpop.f32.mrf.mxu0
    %v1906 = vadd.f32 0.0, %v1905
    %1907 = vmatmul.bf16.gmra.mxu0 %v1221
    %v1908 = vpop.f32.mrf.mxu0
    %v1909 = vadd.f32 0.0, %v1908
    %v1910 = vpop.f32.mrf.mxu0
    %v1911 = vadd.f32 0.0, %v1910
    %1912 = vmatmul.bf16.gmra.mxu0 %v1223
    %v1913 = vpop.f32.mrf.mxu0
    %v1914 = vadd.f32 0.0, %v1913
    %v1915 = vpop.f32.mrf.mxu0
    %1916 = vdwg.mxu0
    %1917 = vmatpush.bf16.msra.mxu0 0
    %1918 = vmatpush.bf16.msra.mxu0 0
    %1919 = vmatpush.bf16.msra.mxu0 0
    %1920 = vmatpush.bf16.msra.mxu0 0
    %1921 = vmatpush.bf16.msra.mxu0 0
    %1922 = vmatpush.bf16.msra.mxu0 %v1710
    %1923 = vmatpush.bf16.msra.mxu0 %v1606
    %1924 = vmatpush.bf16.msra.mxu0 %v1599
    %1925 = vmatmul.bf16.gmra.mxu0 %v1688
    %v1926 = vpop.f32.mrf.mxu0
    %v1927 = vadd.f32 %v1899, %v1926
    %v1928 = vpop.f32.mrf.mxu0
    %v1929 = vadd.f32 %v1901, %v1928
    %1930 = vmatmul.bf16.gmra.mxu0 %v1691
    %v1931 = vpop.f32.mrf.mxu0
    %v1932 = vadd.f32 %v1904, %v1931
    %v1933 = vpop.f32.mrf.mxu0
    %v1934 = vadd.f32 %v1906, %v1933
    %1935 = vmatmul.bf16.gmra.mxu0 %v1694
    %v1936 = vpop.f32.mrf.mxu0
    %v1937 = vadd.f32 %v1909, %v1936
    %v1938 = vpop.f32.mrf.mxu0
    %v1939 = vadd.f32 %v1911, %v1938
    %1940 = vmatmul.bf16.gmra.mxu0 %v1697
    %v1941 = vpop.f32.mrf.mxu0
    %v1942 = vadd.f32 %v1914, %v1941
    %v1943 = vpop.f32.mrf.mxu0
    %1944 = vdwg.mxu0
    %1945 = vmatpush.bf16.msra.mxu0 %v1593
    %1946 = vmatpush.bf16.msra.mxu0 %v1586
    %1947 = vmatpush.bf16.msra.mxu0 %v1579
    %1948 = vmatpush.bf16.msra.mxu0 %v1572
    %1949 = vmatpush.bf16.msra.mxu0 %v1565
    %1950 = vmatpush.bf16.msra.mxu0 %v1558
    %1951 = vmatpush.bf16.msra.mxu0 %v1551
    %1952 = vmatpush.bf16.msra.mxu0 %v1544
    %1953 = vmatmul.bf16.gmra.mxu0 %v1217
    %v1954 = vpop.f32.mrf.mxu0
    %v1955 = vadd.f32 0.0, %v1954
    %v1956 = vpop.f32.mrf.mxu0
    %v1957 = vadd.f32 0.0, %v1956
    %1958 = vmatmul.bf16.gmra.mxu0 %v1219
    %v1959 = vpop.f32.mrf.mxu0
    %v1960 = vadd.f32 0.0, %v1959
    %v1961 = vpop.f32.mrf.mxu0
    %v1962 = vadd.f32 0.0, %v1961
    %1963 = vmatmul.bf16.gmra.mxu0 %v1221
    %v1964 = vpop.f32.mrf.mxu0
    %v1965 = vadd.f32 0.0, %v1964
    %v1966 = vpop.f32.mrf.mxu0
    %v1967 = vadd.f32 0.0, %v1966
    %1968 = vmatmul.bf16.gmra.mxu0 %v1223
    %v1969 = vpop.f32.mrf.mxu0
    %v1970 = vadd.f32 0.0, %v1969
    %v1971 = vpop.f32.mrf.mxu0
    %1972 = vdwg.mxu0
    %1973 = vmatpush.bf16.msra.mxu0 0
    %1974 = vmatpush.bf16.msra.mxu0 0
    %1975 = vmatpush.bf16.msra.mxu0 0
    %1976 = vmatpush.bf16.msra.mxu0 0
    %1977 = vmatpush.bf16.msra.mxu0 0
    %1978 = vmatpush.bf16.msra.mxu0 %v1713
    %1979 = vmatpush.bf16.msra.mxu0 %v1607
    %1980 = vmatpush.bf16.msra.mxu0 %v1600
    %1981 = vmatmul.bf16.gmra.mxu0 %v1688
    %v1982 = vpop.f32.mrf.mxu0
    %v1983 = vadd.f32 %v1955, %v1982
    %v1984 = vpop.f32.mrf.mxu0
    %v1985 = vadd.f32 %v1957, %v1984
    %1986 = vmatmul.bf16.gmra.mxu0 %v1691
    %v1987 = vpop.f32.mrf.mxu0
    %v1988 = vadd.f32 %v1960, %v1987
    %v1989 = vpop.f32.mrf.mxu0
    %v1990 = vadd.f32 %v1962, %v1989
    %1991 = vmatmul.bf16.gmra.mxu0 %v1694
    %v1992 = vpop.f32.mrf.mxu0
    %v1993 = vadd.f32 %v1965, %v1992
    %v1994 = vpop.f32.mrf.mxu0
    %v1995 = vadd.f32 %v1967, %v1994
    %1996 = vmatmul.bf16.gmra.mxu0 %v1697
    %v1997 = vpop.f32.mrf.mxu0
    %v1998 = vadd.f32 %v1970, %v1997
    %v1999 = vpop.f32.mrf.mxu0
    %2000 = vdwg.mxu0
    %2001 = vmatpush.bf16.msra.mxu0 %v1594
    %2002 = vmatpush.bf16.msra.mxu0 %v1587
    %2003 = vmatpush.bf16.msra.mxu0 %v1580
    %2004 = vmatpush.bf16.msra.mxu0 %v1573
    %2005 = vmatpush.bf16.msra.mxu0 %v1566
    %2006 = vmatpush.bf16.msra.mxu0 %v1559
    %2007 = vmatpush.bf16.msra.mxu0 %v1552
    %2008 = vmatpush.bf16.msra.mxu0 %v1545
    %2009 = vmatmul.bf16.gmra.mxu0 %v1217
    %v2010 = vpop.f32.mrf.mxu0
    %v2011 = vadd.f32 0.0, %v2010
    %v2012 = vpop.f32.mrf.mxu0
    %v2013 = vadd.f32 0.0, %v2012
    %2014 = vmatmul.bf16.gmra.mxu0 %v1219
    %v2015 = vpop.f32.mrf.mxu0
    %v2016 = vadd.f32 0.0, %v2015
    %v2017 = vpop.f32.mrf.mxu0
    %v2018 = vadd.f32 0.0, %v2017
    %2019 = vmatmul.bf16.gmra.mxu0 %v1221
    %v2020 = vpop.f32.mrf.mxu0
    %v2021 = vadd.f32 0.0, %v2020
    %v2022 = vpop.f32.mrf.mxu0
    %v2023 = vadd.f32 0.0, %v2022
    %2024 = vmatmul.bf16.gmra.mxu0 %v1223
    %v2025 = vpop.f32.mrf.mxu0
    %v2026 = vadd.f32 0.0, %v2025
    %v2027 = vpop.f32.mrf.mxu0
    %2028 = vdwg.mxu0
    %2029 = vmatpush.bf16.msra.mxu0 0
    %2030 = vmatpush.bf16.msra.mxu0 0
    %2031 = vmatpush.bf16.msra.mxu0 0
    %2032 = vmatpush.bf16.msra.mxu0 0
    %2033 = vmatpush.bf16.msra.mxu0 0
    %2034 = vmatpush.bf16.msra.mxu0 %v1716
    %2035 = vmatpush.bf16.msra.mxu0 %v1608
    %2036 = vmatpush.bf16.msra.mxu0 %v1601
    %2037 = vmatmul.bf16.gmra.mxu0 %v1688
    %v2038 = vpop.f32.mrf.mxu0
    %v2039 = vadd.f32 %v2011, %v2038
    %v2040 = vpop.f32.mrf.mxu0
    %v2041 = vadd.f32 %v2013, %v2040
    %2042 = vmatmul.bf16.gmra.mxu0 %v1691
    %v2043 = vpop.f32.mrf.mxu0
    %v2044 = vadd.f32 %v2016, %v2043
    %v2045 = vpop.f32.mrf.mxu0
    %v2046 = vadd.f32 %v2018, %v2045
    %2047 = vmatmul.bf16.gmra.mxu0 %v1694
    %v2048 = vpop.f32.mrf.mxu0
    %v2049 = vadd.f32 %v2021, %v2048
    %v2050 = vpop.f32.mrf.mxu0
    %v2051 = vadd.f32 %v2023, %v2050
    %2052 = vmatmul.bf16.gmra.mxu0 %v1697
    %v2053 = vpop.f32.mrf.mxu0
    %v2054 = vadd.f32 %v2026, %v2053
    %v2055 = vpop.f32.mrf.mxu0
    %2056 = vdwg.mxu0
    %2057 = vmatpush.bf16.msra.mxu0 %v1595
    %2058 = vmatpush.bf16.msra.mxu0 %v1588
    %2059 = vmatpush.bf16.msra.mxu0 %v1581
    %2060 = vmatpush.bf16.msra.mxu0 %v1574
    %2061 = vmatpush.bf16.msra.mxu0 %v1567
    %2062 = vmatpush.bf16.msra.mxu0 %v1560
    %2063 = vmatpush.bf16.msra.mxu0 %v1553
    %2064 = vmatpush.bf16.msra.mxu0 %v1546
    %2065 = vmatmul.bf16.gmra.mxu0 %v1217
    %v2066 = vpop.f32.mrf.mxu0
    %v2067 = vadd.f32 0.0, %v2066
    %v2068 = vpop.f32.mrf.mxu0
    %v2069 = vadd.f32 0.0, %v2068
    %2070 = vmatmul.bf16.gmra.mxu0 %v1219
    %v2071 = vpop.f32.mrf.mxu0
    %v2072 = vadd.f32 0.0, %v2071
    %v2073 = vpop.f32.mrf.mxu0
    %v2074 = vadd.f32 0.0, %v2073
    %2075 = vmatmul.bf16.gmra.mxu0 %v1221
    %v2076 = vpop.f32.mrf.mxu0
    %v2077 = vadd.f32 0.0, %v2076
    %v2078 = vpop.f32.mrf.mxu0
    %v2079 = vadd.f32 0.0, %v2078
    %2080 = vmatmul.bf16.gmra.mxu0 %v1223
    %v2081 = vpop.f32.mrf.mxu0
    %v2082 = vadd.f32 0.0, %v2081
    %v2083 = vpop.f32.mrf.mxu0
    %2084 = vdwg.mxu0
    %2085 = vmatpush.bf16.msra.mxu0 0
    %2086 = vmatpush.bf16.msra.mxu0 0
    %2087 = vmatpush.bf16.msra.mxu0 0
    %2088 = vmatpush.bf16.msra.mxu0 0
    %2089 = vmatpush.bf16.msra.mxu0 0
    %2090 = vmatpush.bf16.msra.mxu0 %v1719
    %2091 = vmatpush.bf16.msra.mxu0 %v1609
    %2092 = vmatpush.bf16.msra.mxu0 %v1602
    %2093 = vmatmul.bf16.gmra.mxu0 %v1688
    %v2094 = vpop.f32.mrf.mxu0
    %v2095 = vadd.f32 %v2067, %v2094
    %v2096 = vpop.f32.mrf.mxu0
    %v2097 = vadd.f32 %v2069, %v2096
    %2098 = vmatmul.bf16.gmra.mxu0 %v1691
    %v2099 = vpop.f32.mrf.mxu0
    %v2100 = vadd.f32 %v2072, %v2099
    %v2101 = vpop.f32.mrf.mxu0
    %v2102 = vadd.f32 %v2074, %v2101
    %2103 = vmatmul.bf16.gmra.mxu0 %v1694
    %v2104 = vpop.f32.mrf.mxu0
    %v2105 = vadd.f32 %v2077, %v2104
    %v2106 = vpop.f32.mrf.mxu0
    %v2107 = vadd.f32 %v2079, %v2106
    %2108 = vmatmul.bf16.gmra.mxu0 %v1697
    %v2109 = vpop.f32.mrf.mxu0
    %v2110 = vadd.f32 %v2082, %v2109
    %v2111 = vpop.f32.mrf.mxu0
    %2112 = vdwg.mxu0
    %v2113 = vld [vmem:[%s6] sm:$0xff]
    %v2114 = vld [vmem:[%s6 + $0x8] sm:$0xff]
    %v2115 = vld [vmem:[%s6 + $0x10] sm:$0xf]
    %s2116 = scalar_lea.vmem %s6, 24
    %v2117 = vld [vmem:[%s2116] sm:$0xff]
    %v2118 = vld [vmem:[%s2116 + $0x8] sm:$0xff]
    %v2119 = vld [vmem:[%s2116 + $0x10] sm:$0xf]
    %2134 = vrot.lane.b32.xlu0 %v1815, 96
    %v2135 = vpop.permute.xlu0 %2134
    %2136 = vrot.lane.b32.xlu0 %v1871, 96
    %v2137 = vpop.permute.xlu0 %2136
    %2138 = vrot.lane.b32.xlu0 %v1817, 96
    %v2139 = vpop.permute.xlu0 %2138
    %2140 = vrot.lane.b32.xlu0 %v1873, 96
    %v2141 = vpop.permute.xlu0 %2140
    %2142 = vrot.lane.b32.xlu0 %v1820, 96
    %v2143 = vpop.permute.xlu0 %2142
    %2144 = vrot.lane.b32.xlu0 %v1876, 96
    %v2145 = vpop.permute.xlu0 %2144
    %2146 = vrot.lane.b32.xlu0 %v1822, 96
    %v2147 = vpop.permute.xlu0 %2146
    %2148 = vrot.lane.b32.xlu0 %v1878, 96
    %v2149 = vpop.permute.xlu0 %2148
    %2150 = vrot.lane.b32.xlu0 %v1825, 96
    %v2151 = vpop.permute.xlu0 %2150
    %2152 = vrot.lane.b32.xlu0 %v1881, 96
    %v2153 = vpop.permute.xlu0 %2152
    %2154 = vrot.lane.b32.xlu0 %v1827, 96
    %v2155 = vpop.permute.xlu0 %2154
    %2156 = vrot.lane.b32.xlu0 %v1883, 96
    %v2157 = vpop.permute.xlu0 %2156
    %2158 = vrot.lane.b32.xlu0 %v1830, 96
    %v2159 = vpop.permute.xlu0 %2158
    %2160 = vrot.lane.b32.xlu0 %v1886, 96
    %v2161 = vpop.permute.xlu0 %2160
    %vm2162 = vcmask 785408
    %v2163 = vsel %vm2162, %v2135, %v2137
    %v2164 = vsel %vm2162, %v2139, %v2141
    %v2165 = vsel %vm2162, %v2143, %v2145
    %v2166 = vsel %vm2162, %v2147, %v2149
    %v2167 = vsel %vm2162, %v2151, %v2153
    %v2168 = vsel %vm2162, %v2155, %v2157
    %v2169 = vsel %vm2162, %v2159, %v2161
    %vm2184 = vcmask 457728
    %v2186 = vsel %vm2184, %v2117, 0
    %v2189 = vsel %vm2184, %v2118, 0
    %v2192 = vsel %vm2184, %v2119, 0
    %2194 = vmatpush.msra.mxu0 0.0
    %2195 = vmatpush.msra.mxu0 0.0
    %2196 = vmatpush.msra.mxu0 0.0
    %2197 = vmatpush.msra.mxu0 0.0
    %2198 = vmatpush.msra.mxu0 0.0
    %2199 = vmatpush.msra.mxu0 0.0
    %2200 = vmatpush.msra.mxu0 0.0
    %2201 = vmatpush.msra.mxu0 0.0
    %2202 = vmatpush.msra.mxu0 0.0
    %2203 = vmatpush.msra.mxu0 %v2169
    %2204 = vmatpush.msra.mxu0 %v2168
    %2205 = vmatpush.msra.mxu0 %v2167
    %2206 = vmatpush.msra.mxu0 %v2166
    %2207 = vmatpush.msra.mxu0 %v2165
    %2208 = vmatpush.msra.mxu0 %v2164
    %2209 = vmatpush.msra.mxu0 %v2163
    %2210 = vmatmul.f32.gmra.mxu0 %v2186
    %v2211 = vpop.f32.mrf.mxu0
    %v2212 = vadd.f32 0.0, %v2211
    %2213 = vmatmul.f32.gmra.mxu0 %v2189
    %v2214 = vpop.f32.mrf.mxu0
    %v2215 = vadd.f32 0.0, %v2214
    %2216 = vmatmul.f32.gmra.mxu0 %v2192
    %v2217 = vpop.f32.mrf.mxu0
    %v2218 = vadd.f32 0.0, %v2217
    %2219 = vdwg.mxu0
    %2220 = vmatpush.msra.mxu0 0.0
    %2221 = vmatpush.msra.mxu0 0.0
    %2222 = vmatpush.msra.mxu0 0.0
    %2223 = vmatpush.msra.mxu0 0.0
    %2224 = vmatpush.msra.mxu0 0.0
    %2225 = vmatpush.msra.mxu0 0.0
    %2226 = vmatpush.msra.mxu0 0.0
    %2227 = vmatpush.msra.mxu0 0.0
    %2228 = vmatpush.msra.mxu0 0.0
    %2229 = vmatpush.msra.mxu0 %v2161
    %2230 = vmatpush.msra.mxu0 %v2157
    %2231 = vmatpush.msra.mxu0 %v2153
    %2232 = vmatpush.msra.mxu0 %v2149
    %2233 = vmatpush.msra.mxu0 %v2145
    %2234 = vmatpush.msra.mxu0 %v2141
    %2235 = vmatpush.msra.mxu0 %v2137
    %2236 = vmatmul.f32.gmra.mxu0 %v2186
    %v2237 = vpop.f32.mrf.mxu0
    %v2238 = vadd.f32 0.0, %v2237
    %2239 = vmatmul.f32.gmra.mxu0 %v2189
    %v2240 = vpop.f32.mrf.mxu0
    %v2241 = vadd.f32 0.0, %v2240
    %2242 = vmatmul.f32.gmra.mxu0 %v2192
    %v2243 = vpop.f32.mrf.mxu0
    %v2244 = vadd.f32 0.0, %v2243
    %2245 = vdwg.mxu0
    %v2247 = vsel %vm2184, %v2113, 0
    %v2250 = vsel %vm2184, %v2114, 0
    %v2253 = vsel %vm2184, %v2115, 0
    %2255 = vmatpush.msra.mxu0 0.0
    %2256 = vmatpush.msra.mxu0 0.0
    %2257 = vmatpush.msra.mxu0 0.0
    %2258 = vmatpush.msra.mxu0 0.0
    %2259 = vmatpush.msra.mxu0 0.0
    %2260 = vmatpush.msra.mxu0 0.0
    %2261 = vmatpush.msra.mxu0 0.0
    %2262 = vmatpush.msra.mxu0 0.0
    %2263 = vmatpush.msra.mxu0 0.0
    %2264 = vmatpush.msra.mxu0 %v1774
    %2265 = vmatpush.msra.mxu0 %v1771
    %2266 = vmatpush.msra.mxu0 %v1769
    %2267 = vmatpush.msra.mxu0 %v1766
    %2268 = vmatpush.msra.mxu0 %v1764
    %2269 = vmatpush.msra.mxu0 %v1761
    %2270 = vmatpush.msra.mxu0 %v1759
    %2271 = vmatmul.f32.gmra.mxu0 %v2247
    %v2272 = vpop.f32.mrf.mxu0
    %v2273 = vadd.f32 %v2212, %v2272
    %2274 = vmatmul.f32.gmra.mxu0 %v2250
    %v2275 = vpop.f32.mrf.mxu0
    %v2276 = vadd.f32 %v2215, %v2275
    %2277 = vmatmul.f32.gmra.mxu0 %v2253
    %v2278 = vpop.f32.mrf.mxu0
    %v2279 = vadd.f32 %v2218, %v2278
    %2280 = vdwg.mxu0
    %2281 = vmatpush.msra.mxu0 0.0
    %2282 = vmatpush.msra.mxu0 0.0
    %2283 = vmatpush.msra.mxu0 0.0
    %2284 = vmatpush.msra.mxu0 0.0
    %2285 = vmatpush.msra.mxu0 0.0
    %2286 = vmatpush.msra.mxu0 0.0
    %2287 = vmatpush.msra.mxu0 0.0
    %2288 = vmatpush.msra.mxu0 0.0
    %2289 = vmatpush.msra.mxu0 0.0
    %2290 = vmatpush.msra.mxu0 %v1830
    %2291 = vmatpush.msra.mxu0 %v1827
    %2292 = vmatpush.msra.mxu0 %v1825
    %2293 = vmatpush.msra.mxu0 %v1822
    %2294 = vmatpush.msra.mxu0 %v1820
    %2295 = vmatpush.msra.mxu0 %v1817
    %2296 = vmatpush.msra.mxu0 %v1815
    %2297 = vmatmul.f32.gmra.mxu0 %v2247
    %v2298 = vpop.f32.mrf.mxu0
    %v2299 = vadd.f32 %v2238, %v2298
    %2300 = vmatmul.f32.gmra.mxu0 %v2250
    %v2301 = vpop.f32.mrf.mxu0
    %v2302 = vadd.f32 %v2241, %v2301
    %2303 = vmatmul.f32.gmra.mxu0 %v2253
    %v2304 = vpop.f32.mrf.mxu0
    %v2305 = vadd.f32 %v2244, %v2304
    %2306 = vdwg.mxu0
    %s2307 = scalar_lea.vmem %s6, 48
    %v2308 = vld [vmem:[%s2307] sm:$0xff]
    %v2309 = vld [vmem:[%s2307 + $0x8] sm:$0xff]
    %v2310 = vld [vmem:[%s2307 + $0x10] sm:$0xf]
    %2318 = vrot.lane.b32.xlu0 %v1871, 64
    %v2319 = vpop.permute.xlu0 %2318
    %2320 = vrot.lane.b32.xlu0 %v1927, 64
    %v2321 = vpop.permute.xlu0 %2320
    %2322 = vrot.lane.b32.xlu0 %v1873, 64
    %v2323 = vpop.permute.xlu0 %2322
    %2324 = vrot.lane.b32.xlu0 %v1929, 64
    %v2325 = vpop.permute.xlu0 %2324
    %2326 = vrot.lane.b32.xlu0 %v1876, 64
    %v2327 = vpop.permute.xlu0 %2326
    %2328 = vrot.lane.b32.xlu0 %v1932, 64
    %v2329 = vpop.permute.xlu0 %2328
    %2330 = vrot.lane.b32.xlu0 %v1878, 64
    %v2331 = vpop.permute.xlu0 %2330
    %2332 = vrot.lane.b32.xlu0 %v1934, 64
    %v2333 = vpop.permute.xlu0 %2332
    %2334 = vrot.lane.b32.xlu0 %v1881, 64
    %v2335 = vpop.permute.xlu0 %2334
    %2336 = vrot.lane.b32.xlu0 %v1937, 64
    %v2337 = vpop.permute.xlu0 %2336
    %2338 = vrot.lane.b32.xlu0 %v1883, 64
    %v2339 = vpop.permute.xlu0 %2338
    %2340 = vrot.lane.b32.xlu0 %v1939, 64
    %v2341 = vpop.permute.xlu0 %2340
    %2342 = vrot.lane.b32.xlu0 %v1886, 64
    %v2343 = vpop.permute.xlu0 %2342
    %2344 = vrot.lane.b32.xlu0 %v1942, 64
    %v2345 = vpop.permute.xlu0 %2344
    %vm2346 = vcmask 523264
    %v2347 = vsel %vm2346, %v2319, %v2321
    %v2348 = vsel %vm2346, %v2323, %v2325
    %v2349 = vsel %vm2346, %v2327, %v2329
    %v2350 = vsel %vm2346, %v2331, %v2333
    %v2351 = vsel %vm2346, %v2335, %v2337
    %v2352 = vsel %vm2346, %v2339, %v2341
    %v2353 = vsel %vm2346, %v2343, %v2345
    %v2369 = vsel %vm2184, %v2308, 0
    %v2372 = vsel %vm2184, %v2309, 0
    %v2375 = vsel %vm2184, %v2310, 0
    %2377 = vmatpush.msra.mxu0 0.0
    %2378 = vmatpush.msra.mxu0 0.0
    %2379 = vmatpush.msra.mxu0 0.0
    %2380 = vmatpush.msra.mxu0 0.0
    %2381 = vmatpush.msra.mxu0 0.0
    %2382 = vmatpush.msra.mxu0 0.0
    %2383 = vmatpush.msra.mxu0 0.0
    %2384 = vmatpush.msra.mxu0 0.0
    %2385 = vmatpush.msra.mxu0 0.0
    %2386 = vmatpush.msra.mxu0 %v2353
    %2387 = vmatpush.msra.mxu0 %v2352
    %2388 = vmatpush.msra.mxu0 %v2351
    %2389 = vmatpush.msra.mxu0 %v2350
    %2390 = vmatpush.msra.mxu0 %v2349
    %2391 = vmatpush.msra.mxu0 %v2348
    %2392 = vmatpush.msra.mxu0 %v2347
    %2393 = vmatmul.f32.gmra.mxu0 %v2369
    %v2394 = vpop.f32.mrf.mxu0
    %v2395 = vadd.f32 0.0, %v2394
    %2396 = vmatmul.f32.gmra.mxu0 %v2372
    %v2397 = vpop.f32.mrf.mxu0
    %v2398 = vadd.f32 0.0, %v2397
    %2399 = vmatmul.f32.gmra.mxu0 %v2375
    %v2400 = vpop.f32.mrf.mxu0
    %v2401 = vadd.f32 0.0, %v2400
    %2402 = vdwg.mxu0
    %2403 = vmatpush.msra.mxu0 0.0
    %2404 = vmatpush.msra.mxu0 0.0
    %2405 = vmatpush.msra.mxu0 0.0
    %2406 = vmatpush.msra.mxu0 0.0
    %2407 = vmatpush.msra.mxu0 0.0
    %2408 = vmatpush.msra.mxu0 0.0
    %2409 = vmatpush.msra.mxu0 0.0
    %2410 = vmatpush.msra.mxu0 0.0
    %2411 = vmatpush.msra.mxu0 0.0
    %2412 = vmatpush.msra.mxu0 %v2345
    %2413 = vmatpush.msra.mxu0 %v2341
    %2414 = vmatpush.msra.mxu0 %v2337
    %2415 = vmatpush.msra.mxu0 %v2333
    %2416 = vmatpush.msra.mxu0 %v2329
    %2417 = vmatpush.msra.mxu0 %v2325
    %2418 = vmatpush.msra.mxu0 %v2321
    %2419 = vmatmul.f32.gmra.mxu0 %v2369
    %v2420 = vpop.f32.mrf.mxu0
    %v2421 = vadd.f32 0.0, %v2420
    %2422 = vmatmul.f32.gmra.mxu0 %v2372
    %v2423 = vpop.f32.mrf.mxu0
    %v2424 = vadd.f32 0.0, %v2423
    %2425 = vmatmul.f32.gmra.mxu0 %v2375
    %v2426 = vpop.f32.mrf.mxu0
    %v2427 = vadd.f32 0.0, %v2426
    %2428 = vdwg.mxu0
    %v2429 = vadd.f32 %v2273, %v2395
    %v2430 = vadd.f32 %v2299, %v2421
    %v2431 = vadd.f32 %v2276, %v2398
    %v2432 = vadd.f32 %v2302, %v2424
    %v2433 = vadd.f32 %v2279, %v2401
    %v2434 = vadd.f32 %v2305, %v2427
    %s2435 = scalar_lea.vmem %s6, 72
    %v2436 = vld [vmem:[%s2435] sm:$0xff]
    %v2437 = vld [vmem:[%s2435 + $0x8] sm:$0xff]
    %v2438 = vld [vmem:[%s2435 + $0x10] sm:$0xf]
    %2446 = vrot.lane.b32.xlu0 %v1927, 32
    %v2447 = vpop.permute.xlu0 %2446
    %2448 = vrot.lane.b32.xlu0 %v1983, 32
    %v2449 = vpop.permute.xlu0 %2448
    %2450 = vrot.lane.b32.xlu0 %v1929, 32
    %v2451 = vpop.permute.xlu0 %2450
    %2452 = vrot.lane.b32.xlu0 %v1985, 32
    %v2453 = vpop.permute.xlu0 %2452
    %2454 = vrot.lane.b32.xlu0 %v1932, 32
    %v2455 = vpop.permute.xlu0 %2454
    %2456 = vrot.lane.b32.xlu0 %v1988, 32
    %v2457 = vpop.permute.xlu0 %2456
    %2458 = vrot.lane.b32.xlu0 %v1934, 32
    %v2459 = vpop.permute.xlu0 %2458
    %2460 = vrot.lane.b32.xlu0 %v1990, 32
    %v2461 = vpop.permute.xlu0 %2460
    %2462 = vrot.lane.b32.xlu0 %v1937, 32
    %v2463 = vpop.permute.xlu0 %2462
    %2464 = vrot.lane.b32.xlu0 %v1993, 32
    %v2465 = vpop.permute.xlu0 %2464
    %2466 = vrot.lane.b32.xlu0 %v1939, 32
    %v2467 = vpop.permute.xlu0 %2466
    %2468 = vrot.lane.b32.xlu0 %v1995, 32
    %v2469 = vpop.permute.xlu0 %2468
    %2470 = vrot.lane.b32.xlu0 %v1942, 32
    %v2471 = vpop.permute.xlu0 %2470
    %2472 = vrot.lane.b32.xlu0 %v1998, 32
    %v2473 = vpop.permute.xlu0 %2472
    %v2474 = vsel %vm271, %v2447, %v2449
    %v2475 = vsel %vm271, %v2451, %v2453
    %v2476 = vsel %vm271, %v2455, %v2457
    %v2477 = vsel %vm271, %v2459, %v2461
    %v2478 = vsel %vm271, %v2463, %v2465
    %v2479 = vsel %vm271, %v2467, %v2469
    %v2480 = vsel %vm271, %v2471, %v2473
    %v2496 = vsel %vm2184, %v2436, 0
    %v2499 = vsel %vm2184, %v2437, 0
    %v2502 = vsel %vm2184, %v2438, 0
    %2504 = vmatpush.msra.mxu0 0.0
    %2505 = vmatpush.msra.mxu0 0.0
    %2506 = vmatpush.msra.mxu0 0.0
    %2507 = vmatpush.msra.mxu0 0.0
    %2508 = vmatpush.msra.mxu0 0.0
    %2509 = vmatpush.msra.mxu0 0.0
    %2510 = vmatpush.msra.mxu0 0.0
    %2511 = vmatpush.msra.mxu0 0.0
    %2512 = vmatpush.msra.mxu0 0.0
    %2513 = vmatpush.msra.mxu0 %v2480
    %2514 = vmatpush.msra.mxu0 %v2479
    %2515 = vmatpush.msra.mxu0 %v2478
    %2516 = vmatpush.msra.mxu0 %v2477
    %2517 = vmatpush.msra.mxu0 %v2476
    %2518 = vmatpush.msra.mxu0 %v2475
    %2519 = vmatpush.msra.mxu0 %v2474
    %2520 = vmatmul.f32.gmra.mxu0 %v2496
    %v2521 = vpop.f32.mrf.mxu0
    %v2522 = vadd.f32 0.0, %v2521
    %2523 = vmatmul.f32.gmra.mxu0 %v2499
    %v2524 = vpop.f32.mrf.mxu0
    %v2525 = vadd.f32 0.0, %v2524
    %2526 = vmatmul.f32.gmra.mxu0 %v2502
    %v2527 = vpop.f32.mrf.mxu0
    %v2528 = vadd.f32 0.0, %v2527
    %2529 = vdwg.mxu0
    %2530 = vmatpush.msra.mxu0 0.0
    %2531 = vmatpush.msra.mxu0 0.0
    %2532 = vmatpush.msra.mxu0 0.0
    %2533 = vmatpush.msra.mxu0 0.0
    %2534 = vmatpush.msra.mxu0 0.0
    %2535 = vmatpush.msra.mxu0 0.0
    %2536 = vmatpush.msra.mxu0 0.0
    %2537 = vmatpush.msra.mxu0 0.0
    %2538 = vmatpush.msra.mxu0 0.0
    %2539 = vmatpush.msra.mxu0 %v2473
    %2540 = vmatpush.msra.mxu0 %v2469
    %2541 = vmatpush.msra.mxu0 %v2465
    %2542 = vmatpush.msra.mxu0 %v2461
    %2543 = vmatpush.msra.mxu0 %v2457
    %2544 = vmatpush.msra.mxu0 %v2453
    %2545 = vmatpush.msra.mxu0 %v2449
    %2546 = vmatmul.f32.gmra.mxu0 %v2496
    %v2547 = vpop.f32.mrf.mxu0
    %v2548 = vadd.f32 0.0, %v2547
    %2549 = vmatmul.f32.gmra.mxu0 %v2499
    %v2550 = vpop.f32.mrf.mxu0
    %v2551 = vadd.f32 0.0, %v2550
    %2552 = vmatmul.f32.gmra.mxu0 %v2502
    %v2553 = vpop.f32.mrf.mxu0
    %v2554 = vadd.f32 0.0, %v2553
    %2555 = vdwg.mxu0
    %v2556 = vadd.f32 %v2429, %v2522
    %v2557 = vadd.f32 %v2430, %v2548
    %v2558 = vadd.f32 %v2431, %v2525
    %v2559 = vadd.f32 %v2432, %v2551
    %v2560 = vadd.f32 %v2433, %v2528
    %v2561 = vadd.f32 %v2434, %v2554
    %s2562 = scalar_lea.vmem %s6, 96
    %v2563 = vld [vmem:[%s2562] sm:$0xff]
    %v2564 = vld [vmem:[%s2562 + $0x8] sm:$0xff]
    %v2565 = vld [vmem:[%s2562 + $0x10] sm:$0xf]
    %v2567 = vsel %vm2184, %v2563, 0
    %v2570 = vsel %vm2184, %v2564, 0
    %v2573 = vsel %vm2184, %v2565, 0
    %2575 = vmatpush.msra.mxu0 0.0
    %2576 = vmatpush.msra.mxu0 0.0
    %2577 = vmatpush.msra.mxu0 0.0
    %2578 = vmatpush.msra.mxu0 0.0
    %2579 = vmatpush.msra.mxu0 0.0
    %2580 = vmatpush.msra.mxu0 0.0
    %2581 = vmatpush.msra.mxu0 0.0
    %2582 = vmatpush.msra.mxu0 0.0
    %2583 = vmatpush.msra.mxu0 0.0
    %2584 = vmatpush.msra.mxu0 %v2054
    %2585 = vmatpush.msra.mxu0 %v2051
    %2586 = vmatpush.msra.mxu0 %v2049
    %2587 = vmatpush.msra.mxu0 %v2046
    %2588 = vmatpush.msra.mxu0 %v2044
    %2589 = vmatpush.msra.mxu0 %v2041
    %2590 = vmatpush.msra.mxu0 %v2039
    %2591 = vmatmul.f32.gmra.mxu0 %v2567
    %v2592 = vpop.f32.mrf.mxu0
    %v2593 = vadd.f32 0.0, %v2592
    %2594 = vmatmul.f32.gmra.mxu0 %v2570
    %v2595 = vpop.f32.mrf.mxu0
    %v2596 = vadd.f32 0.0, %v2595
    %2597 = vmatmul.f32.gmra.mxu0 %v2573
    %v2598 = vpop.f32.mrf.mxu0
    %v2599 = vadd.f32 0.0, %v2598
    %2600 = vdwg.mxu0
    %2601 = vmatpush.msra.mxu0 0.0
    %2602 = vmatpush.msra.mxu0 0.0
    %2603 = vmatpush.msra.mxu0 0.0
    %2604 = vmatpush.msra.mxu0 0.0
    %2605 = vmatpush.msra.mxu0 0.0
    %2606 = vmatpush.msra.mxu0 0.0
    %2607 = vmatpush.msra.mxu0 0.0
    %2608 = vmatpush.msra.mxu0 0.0
    %2609 = vmatpush.msra.mxu0 0.0
    %2610 = vmatpush.msra.mxu0 %v2110
    %2611 = vmatpush.msra.mxu0 %v2107
    %2612 = vmatpush.msra.mxu0 %v2105
    %2613 = vmatpush.msra.mxu0 %v2102
    %2614 = vmatpush.msra.mxu0 %v2100
    %2615 = vmatpush.msra.mxu0 %v2097
    %2616 = vmatpush.msra.mxu0 %v2095
    %2617 = vmatmul.f32.gmra.mxu0 %v2567
    %v2618 = vpop.f32.mrf.mxu0
    %v2619 = vadd.f32 0.0, %v2618
    %2620 = vmatmul.f32.gmra.mxu0 %v2570
    %v2621 = vpop.f32.mrf.mxu0
    %v2622 = vadd.f32 0.0, %v2621
    %2623 = vmatmul.f32.gmra.mxu0 %v2573
    %v2624 = vpop.f32.mrf.mxu0
    %v2625 = vadd.f32 0.0, %v2624
    %2626 = vdwg.mxu0
    %v2627 = vadd.f32 %v2556, %v2593
    %v2628 = vadd.f32 %v2557, %v2619
    %v2629 = vadd.f32 %v2558, %v2596
    %v2630 = vadd.f32 %v2559, %v2622
    %v2631 = vadd.f32 %v2560, %v2599
    %v2632 = vadd.f32 %v2561, %v2625
    %v2633 = vld [vmem:[#allocation7] sm:$0xff]
    %v2634 = vld [vmem:[#allocation7 + $0x8] sm:$0xff]
    %v2635 = vld [vmem:[#allocation7 + $0x10] sm:$0xff]
    %v2636 = vld [vmem:[#allocation7 + $0x18] sm:$0xff]
    %v2637 = vld [vmem:[#allocation7 + $0x20] sm:$0xff]
    %v2638 = vld [vmem:[#allocation7 + $0x28] sm:$0xff]
    %v2639 = vld [vmem:[#allocation7 + $0x30] sm:$0xff]
    %v2640 = vld [vmem:[#allocation7 + $0x38] sm:$0xff]
    %v2641 = vld [vmem:[#allocation7 + $0x40] sm:$0xff]
    %v2642 = vld [vmem:[#allocation7 + $0x48] sm:$0xff]
    %v2643 = vld [vmem:[#allocation7 + $0x50] sm:$0xff]
    %v2644 = vld [vmem:[#allocation7 + $0x58] sm:$0xff]
    %v2645 = vld [vmem:[#allocation7 + $0x60] sm:$0xff]
    %v2646 = vld [vmem:[#allocation7 + $0x68] sm:$0xff]
    %v2647 = vld [vmem:[#allocation7 + $0x70] sm:$0xff]
    %v2648 = vld [vmem:[#allocation7 + $0x78] sm:$0xff]
    %v2649 = vld [vmem:[#allocation7 + $0x80] sm:$0xff]
    %v2650 = vld [vmem:[#allocation7 + $0x88] sm:$0xff]
    %v2651 = vld [vmem:[#allocation7 + $0x90] sm:$0xff]
    %v2652 = vld [vmem:[#allocation7 + $0x98] sm:$0xff]
    %v2653 = vld [vmem:[#allocation7 + $0xa0] sm:$0xff]
    %v2654 = vld [vmem:[#allocation7 + $0xa8] sm:$0xff]
    %v2655 = vld [vmem:[#allocation7 + $0xb0] sm:$0xff]
    %v2656 = vld [vmem:[#allocation7 + $0xb8] sm:$0xff]
    %v2657 = vld [vmem:[#allocation7 + $0xc0] sm:$0xff]
    %v2658 = vld [vmem:[#allocation7 + $0xc8] sm:$0xff]
    %v2659 = vld [vmem:[#allocation7 + $0xd0] sm:$0xff]
    %v2660 = vld [vmem:[#allocation7 + $0xd8] sm:$0xff]
    %v2661 = vld [vmem:[#allocation7 + $0xe0] sm:$0xff]
    %v2662 = vld [vmem:[#allocation7 + $0xe8] sm:$0xff]
    %v2663 = vld [vmem:[#allocation7 + $0xf0] sm:$0xff]
    %v2664 = vld [vmem:[#allocation7 + $0xf8] sm:$0xff]
    %v2665 = vld [vmem:[#allocation7 + $0x100] sm:$0xff]
    %v2666 = vld [vmem:[#allocation7 + $0x108] sm:$0xff]
    %v2667 = vld [vmem:[#allocation7 + $0x110] sm:$0xff]
    %v2668 = vld [vmem:[#allocation7 + $0x118] sm:$0xff]
    %v2669 = vld [vmem:[#allocation7 + $0x120] sm:$0xff]
    %v2670 = vld [vmem:[#allocation7 + $0x128] sm:$0xff]
    %v2671 = vld [vmem:[#allocation7 + $0x130] sm:$0xff]
    %v2672 = vld [vmem:[#allocation7 + $0x138] sm:$0xff]
    %v2673 = vld [vmem:[%s7] sm:$0x3]
    %v2674 = vld [vmem:[%s8] sm:$0x3]
    %v2676 = vsel %vm271, %v2628, 0
    %v2679 = vsel %vm271, %v2630, 0
    %v2682 = vsel %vm271, %v2632, 0
    %2684 = vmatpush.msra.mxu0 %v2663
    %2685 = vmatpush.msra.mxu0 %v2661
    %2686 = vmatpush.msra.mxu0 %v2659
    %2687 = vmatpush.msra.mxu0 %v2657
    %2688 = vmatpush.msra.mxu0 %v2655
    %2689 = vmatpush.msra.mxu0 %v2653
    %2690 = vmatpush.msra.mxu0 %v2651
    %2691 = vmatpush.msra.mxu0 %v2649
    %2692 = vmatpush.msra.mxu0 %v2647
    %2693 = vmatpush.msra.mxu0 %v2645
    %2694 = vmatpush.msra.mxu0 %v2643
    %2695 = vmatpush.msra.mxu0 %v2641
    %2696 = vmatpush.msra.mxu0 %v2639
    %2697 = vmatpush.msra.mxu0 %v2637
    %2698 = vmatpush.msra.mxu0 %v2635
    %2699 = vmatpush.msra.mxu0 %v2633
    %2700 = vmatmul.f32.gmra.mxu0 %v2627
    %v2701 = vpop.f32.mrf.mxu0
    %v2702 = vadd.f32 0.0, %v2701
    %2703 = vmatmul.f32.gmra.mxu0 %v2629
    %v2704 = vpop.f32.mrf.mxu0
    %v2705 = vadd.f32 0.0, %v2704
    %2706 = vmatmul.f32.gmra.mxu0 %v2631
    %v2707 = vpop.f32.mrf.mxu0
    %v2708 = vadd.f32 0.0, %v2707
    %2709 = vdwg.mxu0
    %2710 = vmatpush.msra.mxu0 0.0
    %2711 = vmatpush.msra.mxu0 0.0
    %2712 = vmatpush.msra.mxu0 0.0
    %2713 = vmatpush.msra.mxu0 0.0
    %2714 = vmatpush.msra.mxu0 0.0
    %2715 = vmatpush.msra.mxu0 0.0
    %2716 = vmatpush.msra.mxu0 0.0
    %2717 = vmatpush.msra.mxu0 0.0
    %2718 = vmatpush.msra.mxu0 0.0
    %2719 = vmatpush.msra.mxu0 0.0
    %2720 = vmatpush.msra.mxu0 0.0
    %2721 = vmatpush.msra.mxu0 0.0
    %2722 = vmatpush.msra.mxu0 %v2671
    %2723 = vmatpush.msra.mxu0 %v2669
    %2724 = vmatpush.msra.mxu0 %v2667
    %2725 = vmatpush.msra.mxu0 %v2665
    %2726 = vmatmul.f32.gmra.mxu0 %v2676
    %v2727 = vpop.f32.mrf.mxu0
    %v2728 = vadd.f32 %v2702, %v2727
    %2729 = vmatmul.f32.gmra.mxu0 %v2679
    %v2730 = vpop.f32.mrf.mxu0
    %v2731 = vadd.f32 %v2705, %v2730
    %2732 = vmatmul.f32.gmra.mxu0 %v2682
    %v2733 = vpop.f32.mrf.mxu0
    %v2734 = vadd.f32 %v2708, %v2733
    %2735 = vdwg.mxu0
    %2736 = vmatpush.msra.mxu0 %v2664
    %2737 = vmatpush.msra.mxu0 %v2662
    %2738 = vmatpush.msra.mxu0 %v2660
    %2739 = vmatpush.msra.mxu0 %v2658
    %2740 = vmatpush.msra.mxu0 %v2656
    %2741 = vmatpush.msra.mxu0 %v2654
    %2742 = vmatpush.msra.mxu0 %v2652
    %2743 = vmatpush.msra.mxu0 %v2650
    %2744 = vmatpush.msra.mxu0 %v2648
    %2745 = vmatpush.msra.mxu0 %v2646
    %2746 = vmatpush.msra.mxu0 %v2644
    %2747 = vmatpush.msra.mxu0 %v2642
    %2748 = vmatpush.msra.mxu0 %v2640
    %2749 = vmatpush.msra.mxu0 %v2638
    %2750 = vmatpush.msra.mxu0 %v2636
    %2751 = vmatpush.msra.mxu0 %v2634
    %2752 = vmatmul.f32.gmra.mxu0 %v2627
    %v2753 = vpop.f32.mrf.mxu0
    %v2754 = vadd.f32 0.0, %v2753
    %2755 = vmatmul.f32.gmra.mxu0 %v2629
    %v2756 = vpop.f32.mrf.mxu0
    %v2757 = vadd.f32 0.0, %v2756
    %2758 = vmatmul.f32.gmra.mxu0 %v2631
    %v2759 = vpop.f32.mrf.mxu0
    %v2760 = vadd.f32 0.0, %v2759
    %2761 = vdwg.mxu0
    %2762 = vmatpush.msra.mxu0 0.0
    %2763 = vmatpush.msra.mxu0 0.0
    %2764 = vmatpush.msra.mxu0 0.0
    %2765 = vmatpush.msra.mxu0 0.0
    %2766 = vmatpush.msra.mxu0 0.0
    %2767 = vmatpush.msra.mxu0 0.0
    %2768 = vmatpush.msra.mxu0 0.0
    %2769 = vmatpush.msra.mxu0 0.0
    %2770 = vmatpush.msra.mxu0 0.0
    %2771 = vmatpush.msra.mxu0 0.0
    %2772 = vmatpush.msra.mxu0 0.0
    %2773 = vmatpush.msra.mxu0 0.0
    %2774 = vmatpush.msra.mxu0 %v2672
    %2775 = vmatpush.msra.mxu0 %v2670
    %2776 = vmatpush.msra.mxu0 %v2668
    %2777 = vmatpush.msra.mxu0 %v2666
    %2778 = vmatmul.f32.gmra.mxu0 %v2676
    %v2779 = vpop.f32.mrf.mxu0
    %v2780 = vadd.f32 %v2754, %v2779
    %2781 = vmatmul.f32.gmra.mxu0 %v2679
    %v2782 = vpop.f32.mrf.mxu0
    %v2783 = vadd.f32 %v2757, %v2782
    %2784 = vmatmul.f32.gmra.mxu0 %v2682
    %v2785 = vpop.f32.mrf.mxu0
    %v2786 = vadd.f32 %v2760, %v2785
    %2787 = vdwg.mxu0
    %v2788 = vadd.f32 %v2728, %v2731
    %v2789 = vsel %vm1699, %v2734, 0.0
    %v2790 = vadd.f32 %v2788, %v2789
    %v2791 = vrot.slane %v2790, 4
    %v2792 = vadd.f32 %v2790, %v2791
    %v2793 = vrot.slane %v2792, 2
    %v2794 = vadd.f32 %v2792, %v2793
    %v2795 = vrot.slane %v2794, 1
    %v2796 = vadd.f32 %v2794, %v2795
    %v2797 = vsel %vm271, %v2780, 0.0
    %v2798 = vsel %vm271, %v2783, 0.0
    %v2799 = vadd.f32 %v2797, %v2798
    %vm2800 = vcmask 257024
    %v2801 = vsel %vm2800, %v2786, 0.0
    %v2802 = vadd.f32 %v2799, %v2801
    %v2803 = vrot.slane %v2802, 4
    %v2804 = vadd.f32 %v2802, %v2803
    %v2805 = vrot.slane %v2804, 2
    %v2806 = vadd.f32 %v2804, %v2805
    %v2807 = vrot.slane %v2806, 1
    %v2808 = vadd.f32 %v2806, %v2807
    %v2809 = vsub.f32 %v2627, %v2796
    %v2810 = vsub.f32 %v2628, %v2808
    %v2811 = vsub.f32 %v2629, %v2796
    %v2812 = vsub.f32 %v2630, %v2808
    %v2813 = vsub.f32 %v2631, %v2796
    %v2814 = vsub.f32 %v2632, %v2808
    %v2815 = vmul.f32 %v2809, %v2809
    %v2816 = vmul.f32 %v2810, %v2810
    %v2817 = vmul.f32 %v2811, %v2811
    %v2818 = vmul.f32 %v2812, %v2812
    %v2819 = vmul.f32 %v2813, %v2813
    %v2820 = vmul.f32 %v2814, %v2814
    %v2822 = vsel %vm271, %v2816, 0
    %v2825 = vsel %vm271, %v2818, 0
    %v2828 = vsel %vm271, %v2820, 0
    %2830 = vmatpush.msra.mxu0 %v2663
    %2831 = vmatpush.msra.mxu0 %v2661
    %2832 = vmatpush.msra.mxu0 %v2659
    %2833 = vmatpush.msra.mxu0 %v2657
    %2834 = vmatpush.msra.mxu0 %v2655
    %2835 = vmatpush.msra.mxu0 %v2653
    %2836 = vmatpush.msra.mxu0 %v2651
    %2837 = vmatpush.msra.mxu0 %v2649
    %2838 = vmatpush.msra.mxu0 %v2647
    %2839 = vmatpush.msra.mxu0 %v2645
    %2840 = vmatpush.msra.mxu0 %v2643
    %2841 = vmatpush.msra.mxu0 %v2641
    %2842 = vmatpush.msra.mxu0 %v2639
    %2843 = vmatpush.msra.mxu0 %v2637
    %2844 = vmatpush.msra.mxu0 %v2635
    %2845 = vmatpush.msra.mxu0 %v2633
    %2846 = vmatmul.f32.gmra.mxu0 %v2815
    %v2847 = vpop.f32.mrf.mxu0
    %v2848 = vadd.f32 0.0, %v2847
    %2849 = vmatmul.f32.gmra.mxu0 %v2817
    %v2850 = vpop.f32.mrf.mxu0
    %v2851 = vadd.f32 0.0, %v2850
    %2852 = vmatmul.f32.gmra.mxu0 %v2819
    %v2853 = vpop.f32.mrf.mxu0
    %v2854 = vadd.f32 0.0, %v2853
    %2855 = vdwg.mxu0
    %2856 = vmatpush.msra.mxu0 0.0
    %2857 = vmatpush.msra.mxu0 0.0
    %2858 = vmatpush.msra.mxu0 0.0
    %2859 = vmatpush.msra.mxu0 0.0
    %2860 = vmatpush.msra.mxu0 0.0
    %2861 = vmatpush.msra.mxu0 0.0
    %2862 = vmatpush.msra.mxu0 0.0
    %2863 = vmatpush.msra.mxu0 0.0
    %2864 = vmatpush.msra.mxu0 0.0
    %2865 = vmatpush.msra.mxu0 0.0
    %2866 = vmatpush.msra.mxu0 0.0
    %2867 = vmatpush.msra.mxu0 0.0
    %2868 = vmatpush.msra.mxu0 %v2671
    %2869 = vmatpush.msra.mxu0 %v2669
    %2870 = vmatpush.msra.mxu0 %v2667
    %2871 = vmatpush.msra.mxu0 %v2665
    %2872 = vmatmul.f32.gmra.mxu0 %v2822
    %v2873 = vpop.f32.mrf.mxu0
    %v2874 = vadd.f32 %v2848, %v2873
    %2875 = vmatmul.f32.gmra.mxu0 %v2825
    %v2876 = vpop.f32.mrf.mxu0
    %v2877 = vadd.f32 %v2851, %v2876
    %2878 = vmatmul.f32.gmra.mxu0 %v2828
    %v2879 = vpop.f32.mrf.mxu0
    %v2880 = vadd.f32 %v2854, %v2879
    %2881 = vdwg.mxu0
    %2882 = vmatpush.msra.mxu0 %v2664
    %2883 = vmatpush.msra.mxu0 %v2662
    %2884 = vmatpush.msra.mxu0 %v2660
    %2885 = vmatpush.msra.mxu0 %v2658
    %2886 = vmatpush.msra.mxu0 %v2656
    %2887 = vmatpush.msra.mxu0 %v2654
    %2888 = vmatpush.msra.mxu0 %v2652
    %2889 = vmatpush.msra.mxu0 %v2650
    %2890 = vmatpush.msra.mxu0 %v2648
    %2891 = vmatpush.msra.mxu0 %v2646
    %2892 = vmatpush.msra.mxu0 %v2644
    %2893 = vmatpush.msra.mxu0 %v2642
    %2894 = vmatpush.msra.mxu0 %v2640
    %2895 = vmatpush.msra.mxu0 %v2638
    %2896 = vmatpush.msra.mxu0 %v2636
    %2897 = vmatpush.msra.mxu0 %v2634
    %2898 = vmatmul.f32.gmra.mxu0 %v2815
    %v2899 = vpop.f32.mrf.mxu0
    %v2900 = vadd.f32 0.0, %v2899
    %2901 = vmatmul.f32.gmra.mxu0 %v2817
    %v2902 = vpop.f32.mrf.mxu0
    %v2903 = vadd.f32 0.0, %v2902
    %2904 = vmatmul.f32.gmra.mxu0 %v2819
    %v2905 = vpop.f32.mrf.mxu0
    %v2906 = vadd.f32 0.0, %v2905
    %2907 = vdwg.mxu0
    %2908 = vmatpush.msra.mxu0 0.0
    %2909 = vmatpush.msra.mxu0 0.0
    %2910 = vmatpush.msra.mxu0 0.0
    %2911 = vmatpush.msra.mxu0 0.0
    %2912 = vmatpush.msra.mxu0 0.0
    %2913 = vmatpush.msra.mxu0 0.0
    %2914 = vmatpush.msra.mxu0 0.0
    %2915 = vmatpush.msra.mxu0 0.0
    %2916 = vmatpush.msra.mxu0 0.0
    %2917 = vmatpush.msra.mxu0 0.0
    %2918 = vmatpush.msra.mxu0 0.0
    %2919 = vmatpush.msra.mxu0 0.0
    %2920 = vmatpush.msra.mxu0 %v2672
    %2921 = vmatpush.msra.mxu0 %v2670
    %2922 = vmatpush.msra.mxu0 %v2668
    %2923 = vmatpush.msra.mxu0 %v2666
    %2924 = vmatmul.f32.gmra.mxu0 %v2822
    %v2925 = vpop.f32.mrf.mxu0
    %v2926 = vadd.f32 %v2900, %v2925
    %2927 = vmatmul.f32.gmra.mxu0 %v2825
    %v2928 = vpop.f32.mrf.mxu0
    %v2929 = vadd.f32 %v2903, %v2928
    %2930 = vmatmul.f32.gmra.mxu0 %v2828
    %v2931 = vpop.f32.mrf.mxu0
    %v2932 = vadd.f32 %v2906, %v2931
    %2933 = vdwg.mxu0
    %v2934 = vadd.f32 %v2874, %v2877
    %v2935 = vsel %vm1699, %v2880, 0.0
    %v2936 = vadd.f32 %v2934, %v2935
    %v2937 = vrot.slane %v2936, 4
    %v2938 = vadd.f32 %v2936, %v2937
    %v2939 = vrot.slane %v2938, 2
    %v2940 = vadd.f32 %v2938, %v2939
    %v2941 = vrot.slane %v2940, 1
    %v2942 = vadd.f32 %v2940, %v2941
    %v2943 = vsel %vm271, %v2926, 0.0
    %v2944 = vsel %vm271, %v2929, 0.0
    %v2945 = vadd.f32 %v2943, %v2944
    %v2946 = vsel %vm2800, %v2932, 0.0
    %v2947 = vadd.f32 %v2945, %v2946
    %v2948 = vrot.slane %v2947, 4
    %v2949 = vadd.f32 %v2947, %v2948
    %v2950 = vrot.slane %v2949, 2
    %v2951 = vadd.f32 %v2949, %v2950
    %v2952 = vrot.slane %v2951, 1
    %v2953 = vadd.f32 %v2951, %v2952
    %v2955 = vperm.slane %v2673, 0
    %v2956 = vperm.slane %v2673, 1
    %v2959 = vmul.f32 %v2955, %v2809
    %v2960 = vmul.f32 %v2956, %v2810
    %v2961 = vmul.f32 %v2955, %v2811
    %v2962 = vmul.f32 %v2956, %v2812
    %v2963 = vmul.f32 %v2955, %v2813
    %v2964 = vmul.f32 %v2956, %v2814
    %v2965 = vadd.f32 %v2942, 1e-05
    %v2966 = vadd.f32 %v2953, 1e-05
    %v2967 = vrsqrt.pop %v2965
    %v2968 = vmul.f32 %v2967, %v2965
    %v2969 = vmul.f32 %v2968, %v2967
    %v2970 = vmul.f32 0.5, %v2969
    %v2971 = vsub.f32 1.5, %v2970
    %v2972 = vmul.f32 %v2967, %v2971
    %vm2973 = vweird.f32 %v2965
    %vm2974 = vweird.f32 %v2967
    %vm2975 = vmor %vm2973, %vm2974
    %v2976 = vsel %vm2975, %v2967, %v2972
    %v2977 = vrsqrt.pop %v2966
    %v2978 = vmul.f32 %v2977, %v2966
    %v2979 = vmul.f32 %v2978, %v2977
    %v2980 = vmul.f32 0.5, %v2979
    %v2981 = vsub.f32 1.5, %v2980
    %v2982 = vmul.f32 %v2977, %v2981
    %vm2983 = vweird.f32 %v2966
    %vm2984 = vweird.f32 %v2977
    %vm2985 = vmor %vm2983, %vm2984
    %v2986 = vsel %vm2985, %v2977, %v2982
    %v2987 = vmul.f32 %v2959, %v2976
    %v2988 = vmul.f32 %v2960, %v2986
    %v2989 = vmul.f32 %v2961, %v2976
    %v2990 = vmul.f32 %v2962, %v2986
    %v2991 = vmul.f32 %v2963, %v2976
    %v2992 = vmul.f32 %v2964, %v2986
    %v2994 = vperm.slane %v2674, 0
    %v2995 = vperm.slane %v2674, 1
    %v2998 = vadd.f32 %v2987, %v2994
    %v2999 = vadd.f32 %v2988, %v2995
    %v3000 = vadd.f32 %v2989, %v2994
    %v3001 = vadd.f32 %v2990, %v2995
    %v3002 = vadd.f32 %v2991, %v2994
    %v3003 = vadd.f32 %v2992, %v2995
    %v3004 = vsub.f32 0.0, %v2998
    %v3005 = vsub.f32 0.0, %v2999
    %v3006 = vsub.f32 0.0, %v3000
    %v3007 = vsub.f32 0.0, %v3001
    %v3008 = vsub.f32 0.0, %v3002
    %v3009 = vsub.f32 0.0, %v3003
    %v3010 = vmul.f32 %v3004, 1.442695
    %v3011 = vpow.pop %v3010
    %v3012 = vmul.f32 %v3005, 1.442695
    %v3013 = vpow.pop %v3012
    %v3014 = vmul.f32 %v3006, 1.442695
    %v3015 = vpow.pop %v3014
    %v3016 = vmul.f32 %v3007, 1.442695
    %v3017 = vpow.pop %v3016
    %v3018 = vmul.f32 %v3008, 1.442695
    %v3019 = vpow.pop %v3018
    %v3020 = vmul.f32 %v3009, 1.442695
    %v3021 = vpow.pop %v3020
    %v3022 = vadd.f32 %v3011, 1.0
    %v3023 = vadd.f32 %v3013, 1.0
    %v3024 = vadd.f32 %v3015, 1.0
    %v3025 = vadd.f32 %v3017, 1.0
    %v3026 = vadd.f32 %v3019, 1.0
    %v3027 = vadd.f32 %v3021, 1.0
    %v3028 = vrcp.pop %v3022
    %v3029 = vmul.f32 %v3022, %v3028
    %v3030 = vsub.f32 1.0, %v3029
    %v3031 = vmul.f32 %v3028, %v3030
    %v3032 = vadd.f32 %v3028, %v3031
    %vm3033 = vweird.f32 %v3022
    %vm3034 = vweird.f32 %v3028
    %vm3035 = vmor %vm3033, %vm3034
    %v3036 = vsel %vm3035, %v3028, %v3032
    %v3037 = vand.u32 2147483647, %v3022
    %vm3038 = vcmp.eq.f32.partialorder %v3037, 8.507059e+37
    %v3039 = vand.u32 %v3022, 2147483648
    %v3040 = vor.u32 1.1754944e-38, %v3039
    %v3041 = vsel %vm3038, %v3040, %v3036
    %v3042 = vmul.f32 1.0, %v3041
    %v3043 = vrcp.pop %v3023
    %v3044 = vmul.f32 %v3023, %v3043
    %v3045 = vsub.f32 1.0, %v3044
    %v3046 = vmul.f32 %v3043, %v3045
    %v3047 = vadd.f32 %v3043, %v3046
    %vm3048 = vweird.f32 %v3023
    %vm3049 = vweird.f32 %v3043
    %vm3050 = vmor %vm3048, %vm3049
    %v3051 = vsel %vm3050, %v3043, %v3047
    %v3052 = vand.u32 2147483647, %v3023
    %vm3053 = vcmp.eq.f32.partialorder %v3052, 8.507059e+37
    %v3054 = vand.u32 %v3023, 2147483648
    %v3055 = vor.u32 1.1754944e-38, %v3054
    %v3056 = vsel %vm3053, %v3055, %v3051
    %v3057 = vmul.f32 1.0, %v3056
    %v3058 = vrcp.pop %v3024
    %v3059 = vmul.f32 %v3024, %v3058
    %v3060 = vsub.f32 1.0, %v3059
    %v3061 = vmul.f32 %v3058, %v3060
    %v3062 = vadd.f32 %v3058, %v3061
    %vm3063 = vweird.f32 %v3024
    %vm3064 = vweird.f32 %v3058
    %vm3065 = vmor %vm3063, %vm3064
    %v3066 = vsel %vm3065, %v3058, %v3062
    %v3067 = vand.u32 2147483647, %v3024
    %vm3068 = vcmp.eq.f32.partialorder %v3067, 8.507059e+37
    %v3069 = vand.u32 %v3024, 2147483648
    %v3070 = vor.u32 1.1754944e-38, %v3069
    %v3071 = vsel %vm3068, %v3070, %v3066
    %v3072 = vmul.f32 1.0, %v3071
    %v3073 = vrcp.pop %v3025
    %v3074 = vmul.f32 %v3025, %v3073
    %v3075 = vsub.f32 1.0, %v3074
    %v3076 = vmul.f32 %v3073, %v3075
    %v3077 = vadd.f32 %v3073, %v3076
    %vm3078 = vweird.f32 %v3025
    %vm3079 = vweird.f32 %v3073
    %vm3080 = vmor %vm3078, %vm3079
    %v3081 = vsel %vm3080, %v3073, %v3077
    %v3082 = vand.u32 2147483647, %v3025
    %vm3083 = vcmp.eq.f32.partialorder %v3082, 8.507059e+37
    %v3084 = vand.u32 %v3025, 2147483648
    %v3085 = vor.u32 1.1754944e-38, %v3084
    %v3086 = vsel %vm3083, %v3085, %v3081
    %v3087 = vmul.f32 1.0, %v3086
    %v3088 = vrcp.pop %v3026
    %v3089 = vmul.f32 %v3026, %v3088
    %v3090 = vsub.f32 1.0, %v3089
    %v3091 = vmul.f32 %v3088, %v3090
    %v3092 = vadd.f32 %v3088, %v3091
    %vm3093 = vweird.f32 %v3026
    %vm3094 = vweird.f32 %v3088
    %vm3095 = vmor %vm3093, %vm3094
    %v3096 = vsel %vm3095, %v3088, %v3092
    %v3097 = vand.u32 2147483647, %v3026
    %vm3098 = vcmp.eq.f32.partialorder %v3097, 8.507059e+37
    %v3099 = vand.u32 %v3026, 2147483648
    %v3100 = vor.u32 1.1754944e-38, %v3099
    %v3101 = vsel %vm3098, %v3100, %v3096
    %v3102 = vmul.f32 1.0, %v3101
    %v3103 = vrcp.pop %v3027
    %v3104 = vmul.f32 %v3027, %v3103
    %v3105 = vsub.f32 1.0, %v3104
    %v3106 = vmul.f32 %v3103, %v3105
    %v3107 = vadd.f32 %v3103, %v3106
    %vm3108 = vweird.f32 %v3027
    %vm3109 = vweird.f32 %v3103
    %vm3110 = vmor %vm3108, %vm3109
    %v3111 = vsel %vm3110, %v3103, %v3107
    %v3112 = vand.u32 2147483647, %v3027
    %vm3113 = vcmp.eq.f32.partialorder %v3112, 8.507059e+37
    %v3114 = vand.u32 %v3027, 2147483648
    %v3115 = vor.u32 1.1754944e-38, %v3114
    %v3116 = vsel %vm3113, %v3115, %v3111
    %v3117 = vmul.f32 1.0, %v3116
    %v3118 = vpack.c.bf16 %v3072, %v3042
    %v3119 = vpack.c.bf16 %v3087, %v3057
    %v3120 = vpack.c.bf16 %v3102, %v3102
    %v3121 = vpack.c.bf16 %v3117, %v3117
    %v3122 = vld [vmem:[%s10] sm:$0xff]
    %v3123 = vld [vmem:[%s10 + $0x8] sm:$0xff]
    %v3124 = vld [vmem:[%s10 + $0x10] sm:$0xf]
    %v3125 = vld [vmem:[%s10 + $0x14] sm:$0xff]
    %v3126 = vld [vmem:[%s10 + $0x1c] sm:$0xff]
    %v3127 = vld [vmem:[%s10 + $0x24] sm:$0xf]
    %v3128 = vld [vmem:[%s10 + $0x28] sm:$0xff]
    %v3129 = vld [vmem:[%s10 + $0x30] sm:$0xff]
    %v3130 = vld [vmem:[%s10 + $0x38] sm:$0xf]
    %v3131 = vld [vmem:[%s10 + $0x3c] sm:$0xff]
    %v3132 = vld [vmem:[%s10 + $0x44] sm:$0xff]
    %v3133 = vld [vmem:[%s10 + $0x4c] sm:$0xf]
    %v3134 = vld [vmem:[%s10 + $0x50] sm:$0xff]
    %v3135 = vld [vmem:[%s10 + $0x58] sm:$0xff]
    %v3136 = vld [vmem:[%s10 + $0x60] sm:$0xf]
    %v3137 = vld [vmem:[%s10 + $0x64] sm:$0xff]
    %v3138 = vld [vmem:[%s10 + $0x6c] sm:$0xff]
    %v3139 = vld [vmem:[%s10 + $0x74] sm:$0xf]
    %v3140 = vld [vmem:[%s10 + $0x78] sm:$0xff]
    %v3141 = vld [vmem:[%s10 + $0x80] sm:$0xff]
    %v3142 = vld [vmem:[%s10 + $0x88] sm:$0xf]
    %v3143 = vld [vmem:[%s10 + $0x8c] sm:$0xff]
    %v3144 = vld [vmem:[%s10 + $0x94] sm:$0xff]
    %v3145 = vld [vmem:[%s10 + $0x9c] sm:$0xf]
    %v3146 = vld [vmem:[%s10 + $0xa0] sm:$0xff]
    %v3147 = vld [vmem:[%s10 + $0xa8] sm:$0xff]
    %v3148 = vld [vmem:[%s10 + $0xb0] sm:$0xf]
    %v3149 = vld [vmem:[%s10 + $0xb4] sm:$0xff]
    %v3150 = vld [vmem:[%s10 + $0xbc] sm:$0xff]
    %v3151 = vld [vmem:[%s10 + $0xc4] sm:$0xf]
    %v3152 = vld [vmem:[%s10 + $0xc8] sm:$0xff]
    %v3153 = vld [vmem:[%s10 + $0xd0] sm:$0xff]
    %v3154 = vld [vmem:[%s10 + $0xd8] sm:$0xf]
    %v3155 = vld [vmem:[%s10 + $0xdc] sm:$0xff]
    %v3156 = vld [vmem:[%s10 + $0xe4] sm:$0xff]
    %v3157 = vld [vmem:[%s10 + $0xec] sm:$0xf]
    %v3158 = vld [vmem:[%s10 + $0xf0] sm:$0xff]
    %v3159 = vld [vmem:[%s10 + $0xf8] sm:$0xff]
    %v3160 = vld [vmem:[%s10 + $0x100] sm:$0xf]
    %v3161 = vld [vmem:[%s10 + $0x104] sm:$0xff]
    %v3162 = vld [vmem:[%s10 + $0x10c] sm:$0xff]
    %v3163 = vld [vmem:[%s10 + $0x114] sm:$0xf]
    %v3164 = vld [vmem:[%s10 + $0x118] sm:$0xff]
    %v3165 = vld [vmem:[%s10 + $0x120] sm:$0xff]
    %v3166 = vld [vmem:[%s10 + $0x128] sm:$0xf]
    %v3167 = vld [vmem:[%s10 + $0x12c] sm:$0xff]
    %v3168 = vld [vmem:[%s10 + $0x134] sm:$0xff]
    %v3169 = vld [vmem:[%s10 + $0x13c] sm:$0xf]
    %v3170 = vld [vmem:[%s10 + $0x140] sm:$0xff]
    %v3171 = vld [vmem:[%s10 + $0x148] sm:$0xff]
    %v3172 = vld [vmem:[%s10 + $0x150] sm:$0xf]
    %v3173 = vld [vmem:[%s10 + $0x154] sm:$0xff]
    %v3174 = vld [vmem:[%s10 + $0x15c] sm:$0xff]
    %v3175 = vld [vmem:[%s10 + $0x164] sm:$0xf]
    %v3176 = vld [vmem:[%s10 + $0x168] sm:$0xff]
    %v3177 = vld [vmem:[%s10 + $0x170] sm:$0xff]
    %v3178 = vld [vmem:[%s10 + $0x178] sm:$0xf]
    %v3179 = vld [vmem:[%s10 + $0x17c] sm:$0xff]
    %v3180 = vld [vmem:[%s10 + $0x184] sm:$0xff]
    %v3181 = vld [vmem:[%s10 + $0x18c] sm:$0xf]
    %v3242 = vunpack.c.l.b16 %v3122
    %v3243 = vunpack.c.h.b16 %v3122
    %v3244 = vunpack.c.l.b16 %v3123
    %v3245 = vunpack.c.h.b16 %v3123
    %v3246 = vunpack.c.l.b16 %v3124
    %v3247 = vunpack.c.l.b16 %v3125
    %v3248 = vunpack.c.h.b16 %v3125
    %v3249 = vunpack.c.l.b16 %v3126
    %v3250 = vunpack.c.h.b16 %v3126
    %v3251 = vunpack.c.l.b16 %v3127
    %v3252 = vunpack.c.l.b16 %v3128
    %v3253 = vunpack.c.h.b16 %v3128
    %v3254 = vunpack.c.l.b16 %v3129
    %v3255 = vunpack.c.h.b16 %v3129
    %v3256 = vunpack.c.l.b16 %v3130
    %v3257 = vunpack.c.l.b16 %v3131
    %v3258 = vunpack.c.h.b16 %v3131
    %v3259 = vunpack.c.l.b16 %v3132
    %v3260 = vunpack.c.h.b16 %v3132
    %v3261 = vunpack.c.l.b16 %v3133
    %v3262 = vunpack.c.l.b16 %v3134
    %v3263 = vunpack.c.h.b16 %v3134
    %v3264 = vunpack.c.l.b16 %v3135
    %v3265 = vunpack.c.h.b16 %v3135
    %v3266 = vunpack.c.l.b16 %v3136
    %v3267 = vunpack.c.l.b16 %v3137
    %v3268 = vunpack.c.h.b16 %v3137
    %v3269 = vunpack.c.l.b16 %v3138
    %v3270 = vunpack.c.h.b16 %v3138
    %v3271 = vunpack.c.l.b16 %v3139
    %v3272 = vunpack.c.l.b16 %v3140
    %v3273 = vunpack.c.h.b16 %v3140
    %v3274 = vunpack.c.l.b16 %v3141
    %v3275 = vunpack.c.h.b16 %v3141
    %v3276 = vunpack.c.l.b16 %v3142
    %v3277 = vunpack.c.l.b16 %v3143
    %v3278 = vunpack.c.h.b16 %v3143
    %v3279 = vunpack.c.l.b16 %v3144
    %v3280 = vunpack.c.h.b16 %v3144
    %v3281 = vunpack.c.l.b16 %v3145
    %v3282 = vunpack.c.l.b16 %v3146
    %v3283 = vunpack.c.h.b16 %v3146
    %v3284 = vunpack.c.l.b16 %v3147
    %v3285 = vunpack.c.h.b16 %v3147
    %v3286 = vunpack.c.l.b16 %v3148
    %v3287 = vunpack.c.l.b16 %v3149
    %v3288 = vunpack.c.h.b16 %v3149
    %v3289 = vunpack.c.l.b16 %v3150
    %v3290 = vunpack.c.h.b16 %v3150
    %v3291 = vunpack.c.l.b16 %v3151
    %v3292 = vunpack.c.l.b16 %v3152
    %v3293 = vunpack.c.h.b16 %v3152
    %v3294 = vunpack.c.l.b16 %v3153
    %v3295 = vunpack.c.h.b16 %v3153
    %v3296 = vunpack.c.l.b16 %v3154
    %v3297 = vunpack.c.l.b16 %v3155
    %v3298 = vunpack.c.h.b16 %v3155
    %v3299 = vunpack.c.l.b16 %v3156
    %v3300 = vunpack.c.h.b16 %v3156
    %v3301 = vunpack.c.l.b16 %v3157
    %v3302 = vunpack.c.l.b16 %v3158
    %v3303 = vunpack.c.h.b16 %v3158
    %v3304 = vunpack.c.l.b16 %v3159
    %v3305 = vunpack.c.h.b16 %v3159
    %v3306 = vunpack.c.l.b16 %v3160
    %v3307 = vunpack.c.l.b16 %v3161
    %v3308 = vunpack.c.h.b16 %v3161
    %v3309 = vunpack.c.l.b16 %v3162
    %v3310 = vunpack.c.h.b16 %v3162
    %v3311 = vunpack.c.l.b16 %v3163
    %v3312 = vunpack.c.l.b16 %v3164
    %v3313 = vunpack.c.h.b16 %v3164
    %v3314 = vunpack.c.l.b16 %v3165
    %v3315 = vunpack.c.h.b16 %v3165
    %v3316 = vunpack.c.l.b16 %v3166
    %v3317 = vunpack.c.l.b16 %v3167
    %v3318 = vunpack.c.h.b16 %v3167
    %v3319 = vunpack.c.l.b16 %v3168
    %v3320 = vunpack.c.h.b16 %v3168
    %v3321 = vunpack.c.l.b16 %v3169
    %v3322 = vunpack.c.l.b16 %v3170
    %v3323 = vunpack.c.h.b16 %v3170
    %v3324 = vunpack.c.l.b16 %v3171
    %v3325 = vunpack.c.h.b16 %v3171
    %v3326 = vunpack.c.l.b16 %v3172
    %v3327 = vunpack.c.l.b16 %v3173
    %v3328 = vunpack.c.h.b16 %v3173
    %v3329 = vunpack.c.l.b16 %v3174
    %v3330 = vunpack.c.h.b16 %v3174
    %v3331 = vunpack.c.l.b16 %v3175
    %v3332 = vunpack.c.l.b16 %v3176
    %v3333 = vunpack.c.h.b16 %v3176
    %v3334 = vunpack.c.l.b16 %v3177
    %v3335 = vunpack.c.h.b16 %v3177
    %v3336 = vunpack.c.l.b16 %v3178
    %v3337 = vunpack.c.l.b16 %v3179
    %v3338 = vunpack.c.h.b16 %v3179
    %v3339 = vunpack.c.l.b16 %v3180
    %v3340 = vunpack.c.h.b16 %v3180
    %v3341 = vunpack.c.l.b16 %v3181
    %v3342 = vpack.c.b16 %v3247, %v3242
    %v3343 = vpack.c.b16 %v3248, %v3243
    %v3344 = vpack.c.b16 %v3249, %v3244
    %v3345 = vpack.c.b16 %v3250, %v3245
    %v3346 = vpack.c.b16 %v3251, %v3246
    %v3347 = vpack.c.b16 %v3257, %v3252
    %v3348 = vpack.c.b16 %v3258, %v3253
    %v3349 = vpack.c.b16 %v3259, %v3254
    %v3350 = vpack.c.b16 %v3260, %v3255
    %v3351 = vpack.c.b16 %v3261, %v3256
    %v3352 = vpack.c.b16 %v3267, %v3262
    %v3353 = vpack.c.b16 %v3268, %v3263
    %v3354 = vpack.c.b16 %v3269, %v3264
    %v3355 = vpack.c.b16 %v3270, %v3265
    %v3356 = vpack.c.b16 %v3271, %v3266
    %v3357 = vpack.c.b16 %v3277, %v3272
    %v3358 = vpack.c.b16 %v3278, %v3273
    %v3359 = vpack.c.b16 %v3279, %v3274
    %v3360 = vpack.c.b16 %v3280, %v3275
    %v3361 = vpack.c.b16 %v3281, %v3276
    %v3362 = vpack.c.b16 %v3287, %v3282
    %v3363 = vpack.c.b16 %v3288, %v3283
    %v3364 = vpack.c.b16 %v3289, %v3284
    %v3365 = vpack.c.b16 %v3290, %v3285
    %v3366 = vpack.c.b16 %v3291, %v3286
    %v3367 = vpack.c.b16 %v3297, %v3292
    %v3368 = vpack.c.b16 %v3298, %v3293
    %v3369 = vpack.c.b16 %v3299, %v3294
    %v3370 = vpack.c.b16 %v3300, %v3295
    %v3371 = vpack.c.b16 %v3301, %v3296
    %v3372 = vpack.c.b16 %v3307, %v3302
    %v3373 = vpack.c.b16 %v3308, %v3303
    %v3374 = vpack.c.b16 %v3309, %v3304
    %v3375 = vpack.c.b16 %v3310, %v3305
    %v3376 = vpack.c.b16 %v3311, %v3306
    %v3377 = vpack.c.b16 %v3317, %v3312
    %v3378 = vpack.c.b16 %v3318, %v3313
    %v3379 = vpack.c.b16 %v3319, %v3314
    %v3380 = vpack.c.b16 %v3320, %v3315
    %v3381 = vpack.c.b16 %v3321, %v3316
    %v3382 = vpack.c.b16 %v3327, %v3322
    %v3383 = vpack.c.b16 %v3328, %v3323
    %v3384 = vpack.c.b16 %v3329, %v3324
    %v3385 = vpack.c.b16 %v3330, %v3325
    %v3386 = vpack.c.b16 %v3331, %v3326
    %v3387 = vpack.c.b16 %v3337, %v3332
    %v3388 = vpack.c.b16 %v3338, %v3333
    %v3389 = vpack.c.b16 %v3339, %v3334
    %v3390 = vpack.c.b16 %v3340, %v3335
    %v3391 = vpack.c.b16 %v3341, %v3336
    %v3443 = vsel %vm271, %v3119, 0
    %v3446 = vsel %vm271, %v3121, 0
    %3448 = vmatpush.bf16.msra.mxu0 %v3377
    %3449 = vmatpush.bf16.msra.mxu0 %v3372
    %3450 = vmatpush.bf16.msra.mxu0 %v3367
    %3451 = vmatpush.bf16.msra.mxu0 %v3362
    %3452 = vmatpush.bf16.msra.mxu0 %v3357
    %3453 = vmatpush.bf16.msra.mxu0 %v3352
    %3454 = vmatpush.bf16.msra.mxu0 %v3347
    %3455 = vmatpush.bf16.msra.mxu0 %v3342
    %3456 = vmatmul.bf16.gmra.mxu0 %v3118
    %v3457 = vpop.f32.mrf.mxu0
    %v3458 = vadd.f32 0.0, %v3457
    %v3459 = vpop.f32.mrf.mxu0
    %v3460 = vadd.f32 0.0, %v3459
    %3461 = vmatmul.bf16.gmra.mxu0 %v3120
    %v3462 = vpop.f32.mrf.mxu0
    %v3463 = vadd.f32 0.0, %v3462
    %v3464 = vpop.f32.mrf.mxu0
    %3465 = vdwg.mxu0
    %3466 = vmatpush.bf16.msra.mxu0 0
    %3467 = vmatpush.bf16.msra.mxu0 0
    %3468 = vmatpush.bf16.msra.mxu0 0
    %3469 = vmatpush.bf16.msra.mxu0 0
    %3470 = vmatpush.bf16.msra.mxu0 0
    %3471 = vmatpush.bf16.msra.mxu0 0
    %3472 = vmatpush.bf16.msra.mxu0 %v3387
    %3473 = vmatpush.bf16.msra.mxu0 %v3382
    %3474 = vmatmul.bf16.gmra.mxu0 %v3443
    %v3475 = vpop.f32.mrf.mxu0
    %v3476 = vadd.f32 %v3458, %v3475
    %v3477 = vpop.f32.mrf.mxu0
    %v3478 = vadd.f32 %v3460, %v3477
    %3479 = vmatmul.bf16.gmra.mxu0 %v3446
    %v3480 = vpop.f32.mrf.mxu0
    %v3481 = vadd.f32 %v3463, %v3480
    %v3482 = vpop.f32.mrf.mxu0
    %3483 = vdwg.mxu0
    %3484 = vmatpush.bf16.msra.mxu0 %v3378
    %3485 = vmatpush.bf16.msra.mxu0 %v3373
    %3486 = vmatpush.bf16.msra.mxu0 %v3368
    %3487 = vmatpush.bf16.msra.mxu0 %v3363
    %3488 = vmatpush.bf16.msra.mxu0 %v3358
    %3489 = vmatpush.bf16.msra.mxu0 %v3353
    %3490 = vmatpush.bf16.msra.mxu0 %v3348
    %3491 = vmatpush.bf16.msra.mxu0 %v3343
    %3492 = vmatmul.bf16.gmra.mxu0 %v3118
    %v3493 = vpop.f32.mrf.mxu0
    %v3494 = vadd.f32 0.0, %v3493
    %v3495 = vpop.f32.mrf.mxu0
    %v3496 = vadd.f32 0.0, %v3495
    %3497 = vmatmul.bf16.gmra.mxu0 %v3120
    %v3498 = vpop.f32.mrf.mxu0
    %v3499 = vadd.f32 0.0, %v3498
    %v3500 = vpop.f32.mrf.mxu0
    %3501 = vdwg.mxu0
    %3502 = vmatpush.bf16.msra.mxu0 0
    %3503 = vmatpush.bf16.msra.mxu0 0
    %3504 = vmatpush.bf16.msra.mxu0 0
    %3505 = vmatpush.bf16.msra.mxu0 0
    %3506 = vmatpush.bf16.msra.mxu0 0
    %3507 = vmatpush.bf16.msra.mxu0 0
    %3508 = vmatpush.bf16.msra.mxu0 %v3388
    %3509 = vmatpush.bf16.msra.mxu0 %v3383
    %3510 = vmatmul.bf16.gmra.mxu0 %v3443
    %v3511 = vpop.f32.mrf.mxu0
    %v3512 = vadd.f32 %v3494, %v3511
    %v3513 = vpop.f32.mrf.mxu0
    %v3514 = vadd.f32 %v3496, %v3513
    %3515 = vmatmul.bf16.gmra.mxu0 %v3446
    %v3516 = vpop.f32.mrf.mxu0
    %v3517 = vadd.f32 %v3499, %v3516
    %v3518 = vpop.f32.mrf.mxu0
    %3519 = vdwg.mxu0
    %3520 = vmatpush.bf16.msra.mxu0 %v3379
    %3521 = vmatpush.bf16.msra.mxu0 %v3374
    %3522 = vmatpush.bf16.msra.mxu0 %v3369
    %3523 = vmatpush.bf16.msra.mxu0 %v3364
    %3524 = vmatpush.bf16.msra.mxu0 %v3359
    %3525 = vmatpush.bf16.msra.mxu0 %v3354
    %3526 = vmatpush.bf16.msra.mxu0 %v3349
    %3527 = vmatpush.bf16.msra.mxu0 %v3344
    %3528 = vmatmul.bf16.gmra.mxu0 %v3118
    %v3529 = vpop.f32.mrf.mxu0
    %v3530 = vadd.f32 0.0, %v3529
    %v3531 = vpop.f32.mrf.mxu0
    %v3532 = vadd.f32 0.0, %v3531
    %3533 = vmatmul.bf16.gmra.mxu0 %v3120
    %v3534 = vpop.f32.mrf.mxu0
    %v3535 = vadd.f32 0.0, %v3534
    %v3536 = vpop.f32.mrf.mxu0
    %3537 = vdwg.mxu0
    %3538 = vmatpush.bf16.msra.mxu0 0
    %3539 = vmatpush.bf16.msra.mxu0 0
    %3540 = vmatpush.bf16.msra.mxu0 0
    %3541 = vmatpush.bf16.msra.mxu0 0
    %3542 = vmatpush.bf16.msra.mxu0 0
    %3543 = vmatpush.bf16.msra.mxu0 0
    %3544 = vmatpush.bf16.msra.mxu0 %v3389
    %3545 = vmatpush.bf16.msra.mxu0 %v3384
    %3546 = vmatmul.bf16.gmra.mxu0 %v3443
    %v3547 = vpop.f32.mrf.mxu0
    %v3548 = vadd.f32 %v3530, %v3547
    %v3549 = vpop.f32.mrf.mxu0
    %v3550 = vadd.f32 %v3532, %v3549
    %3551 = vmatmul.bf16.gmra.mxu0 %v3446
    %v3552 = vpop.f32.mrf.mxu0
    %v3553 = vadd.f32 %v3535, %v3552
    %v3554 = vpop.f32.mrf.mxu0
    %3555 = vdwg.mxu0
    %3556 = vmatpush.bf16.msra.mxu0 %v3380
    %3557 = vmatpush.bf16.msra.mxu0 %v3375
    %3558 = vmatpush.bf16.msra.mxu0 %v3370
    %3559 = vmatpush.bf16.msra.mxu0 %v3365
    %3560 = vmatpush.bf16.msra.mxu0 %v3360
    %3561 = vmatpush.bf16.msra.mxu0 %v3355
    %3562 = vmatpush.bf16.msra.mxu0 %v3350
    %3563 = vmatpush.bf16.msra.mxu0 %v3345
    %3564 = vmatmul.bf16.gmra.mxu0 %v3118
    %v3565 = vpop.f32.mrf.mxu0
    %v3566 = vadd.f32 0.0, %v3565
    %v3567 = vpop.f32.mrf.mxu0
    %v3568 = vadd.f32 0.0, %v3567
    %3569 = vmatmul.bf16.gmra.mxu0 %v3120
    %v3570 = vpop.f32.mrf.mxu0
    %v3571 = vadd.f32 0.0, %v3570
    %v3572 = vpop.f32.mrf.mxu0
    %3573 = vdwg.mxu0
    %3574 = vmatpush.bf16.msra.mxu0 0
    %3575 = vmatpush.bf16.msra.mxu0 0
    %3576 = vmatpush.bf16.msra.mxu0 0
    %3577 = vmatpush.bf16.msra.mxu0 0
    %3578 = vmatpush.bf16.msra.mxu0 0
    %3579 = vmatpush.bf16.msra.mxu0 0
    %3580 = vmatpush.bf16.msra.mxu0 %v3390
    %3581 = vmatpush.bf16.msra.mxu0 %v3385
    %3582 = vmatmul.bf16.gmra.mxu0 %v3443
    %v3583 = vpop.f32.mrf.mxu0
    %v3584 = vadd.f32 %v3566, %v3583
    %v3585 = vpop.f32.mrf.mxu0
    %v3586 = vadd.f32 %v3568, %v3585
    %3587 = vmatmul.bf16.gmra.mxu0 %v3446
    %v3588 = vpop.f32.mrf.mxu0
    %v3589 = vadd.f32 %v3571, %v3588
    %v3590 = vpop.f32.mrf.mxu0
    %3591 = vdwg.mxu0
    %3592 = vmatpush.bf16.msra.mxu0 %v3381
    %3593 = vmatpush.bf16.msra.mxu0 %v3376
    %3594 = vmatpush.bf16.msra.mxu0 %v3371
    %3595 = vmatpush.bf16.msra.mxu0 %v3366
    %3596 = vmatpush.bf16.msra.mxu0 %v3361
    %3597 = vmatpush.bf16.msra.mxu0 %v3356
    %3598 = vmatpush.bf16.msra.mxu0 %v3351
    %3599 = vmatpush.bf16.msra.mxu0 %v3346
    %3600 = vmatmul.bf16.gmra.mxu0 %v3118
    %v3601 = vpop.f32.mrf.mxu0
    %v3602 = vadd.f32 0.0, %v3601
    %v3603 = vpop.f32.mrf.mxu0
    %v3604 = vadd.f32 0.0, %v3603
    %3605 = vmatmul.bf16.gmra.mxu0 %v3120
    %v3606 = vpop.f32.mrf.mxu0
    %v3607 = vadd.f32 0.0, %v3606
    %v3608 = vpop.f32.mrf.mxu0
    %3609 = vdwg.mxu0
    %3610 = vmatpush.bf16.msra.mxu0 0
    %3611 = vmatpush.bf16.msra.mxu0 0
    %3612 = vmatpush.bf16.msra.mxu0 0
    %3613 = vmatpush.bf16.msra.mxu0 0
    %3614 = vmatpush.bf16.msra.mxu0 0
    %3615 = vmatpush.bf16.msra.mxu0 0
    %3616 = vmatpush.bf16.msra.mxu0 %v3391
    %3617 = vmatpush.bf16.msra.mxu0 %v3386
    %3618 = vmatmul.bf16.gmra.mxu0 %v3443
    %v3619 = vpop.f32.mrf.mxu0
    %v3620 = vadd.f32 %v3602, %v3619
    %v3621 = vpop.f32.mrf.mxu0
    %v3622 = vadd.f32 %v3604, %v3621
    %3623 = vmatmul.bf16.gmra.mxu0 %v3446
    %v3624 = vpop.f32.mrf.mxu0
    %v3625 = vadd.f32 %v3607, %v3624
    %v3626 = vpop.f32.mrf.mxu0
    %3627 = vdwg.mxu0
    %v3628 = vld [vmem:[%s11] sm:$0x3]
    %s3629 = scalar_lea.vmem %s11, 2
    %v3630 = vld [vmem:[%s3629] sm:$0x3]
    %3637 = vrot.lane.b32.xlu0 %v3476, 8
    %v3638 = vpop.permute.xlu0 %3637
    %3639 = vrot.lane.b32.xlu0 %v3512, 8
    %v3640 = vpop.permute.xlu0 %3639
    %3641 = vrot.lane.b32.xlu0 %v3478, 8
    %v3642 = vpop.permute.xlu0 %3641
    %3643 = vrot.lane.b32.xlu0 %v3514, 8
    %v3644 = vpop.permute.xlu0 %3643
    %3645 = vrot.lane.b32.xlu0 %v3481, 8
    %v3646 = vpop.permute.xlu0 %3645
    %3647 = vrot.lane.b32.xlu0 %v3517, 8
    %v3648 = vpop.permute.xlu0 %3647
    %vm3649 = vcmask 64512
    %v3650 = vsel %vm3649, %v3638, %v3640
    %v3651 = vsel %vm3649, %v3642, %v3644
    %v3652 = vsel %vm3649, %v3646, %v3648
    %vm3655 = vcmask 162816
    %v3657 = vsel %vm3655, %v3630, 0
    %v3659 = vsel %vm1699, %v3652, 0
    %3661 = vmatpush.msra.mxu0 0.0
    %3662 = vmatpush.msra.mxu0 0.0
    %3663 = vmatpush.msra.mxu0 0.0
    %3664 = vmatpush.msra.mxu0 0.0
    %3665 = vmatpush.msra.mxu0 0.0
    %3666 = vmatpush.msra.mxu0 0.0
    %3667 = vmatpush.msra.mxu0 0.0
    %3668 = vmatpush.msra.mxu0 0.0
    %3669 = vmatpush.msra.mxu0 0.0
    %3670 = vmatpush.msra.mxu0 0.0
    %3671 = vmatpush.msra.mxu0 0.0
    %3672 = vmatpush.msra.mxu0 0.0
    %3673 = vmatpush.msra.mxu0 0.0
    %3674 = vmatpush.msra.mxu0 %v3659
    %3675 = vmatpush.msra.mxu0 %v3651
    %3676 = vmatpush.msra.mxu0 %v3650
    %3677 = vmatmul.f32.gmra.mxu0 %v3657
    %v3678 = vpop.f32.mrf.mxu0
    %v3679 = vadd.f32 0.0, %v3678
    %3680 = vdwg.mxu0
    %v3682 = vsel %vm3655, %v3628, 0
    %v3684 = vsel %vm1699, %v3481, 0
    %3686 = vmatpush.msra.mxu0 0.0
    %3687 = vmatpush.msra.mxu0 0.0
    %3688 = vmatpush.msra.mxu0 0.0
    %3689 = vmatpush.msra.mxu0 0.0
    %3690 = vmatpush.msra.mxu0 0.0
    %3691 = vmatpush.msra.mxu0 0.0
    %3692 = vmatpush.msra.mxu0 0.0
    %3693 = vmatpush.msra.mxu0 0.0
    %3694 = vmatpush.msra.mxu0 0.0
    %3695 = vmatpush.msra.mxu0 0.0
    %3696 = vmatpush.msra.mxu0 0.0
    %3697 = vmatpush.msra.mxu0 0.0
    %3698 = vmatpush.msra.mxu0 0.0
    %3699 = vmatpush.msra.mxu0 %v3684
    %3700 = vmatpush.msra.mxu0 %v3478
    %3701 = vmatpush.msra.mxu0 %v3476
    %3702 = vmatmul.f32.gmra.mxu0 %v3682
    %v3703 = vpop.f32.mrf.mxu0
    %v3704 = vadd.f32 %v3679, %v3703
    %3705 = vdwg.mxu0
    %s3706 = scalar_lea.vmem %s11, 4
    %v3707 = vld [vmem:[%s3706] sm:$0x3]
    %3711 = vrot.lane.b32.xlu0 %v3512, 16
    %v3712 = vpop.permute.xlu0 %3711
    %3713 = vrot.lane.b32.xlu0 %v3548, 16
    %v3714 = vpop.permute.xlu0 %3713
    %3715 = vrot.lane.b32.xlu0 %v3514, 16
    %v3716 = vpop.permute.xlu0 %3715
    %3717 = vrot.lane.b32.xlu0 %v3550, 16
    %v3718 = vpop.permute.xlu0 %3717
    %3719 = vrot.lane.b32.xlu0 %v3517, 16
    %v3720 = vpop.permute.xlu0 %3719
    %3721 = vrot.lane.b32.xlu0 %v3553, 16
    %v3722 = vpop.permute.xlu0 %3721
    %vm3723 = vcmask 130048
    %v3724 = vsel %vm3723, %v3712, %v3714
    %v3725 = vsel %vm3723, %v3716, %v3718
    %v3726 = vsel %vm3723, %v3720, %v3722
    %v3730 = vsel %vm3655, %v3707, 0
    %v3732 = vsel %vm1699, %v3726, 0
    %3734 = vmatpush.msra.mxu0 0.0
    %3735 = vmatpush.msra.mxu0 0.0
    %3736 = vmatpush.msra.mxu0 0.0
    %3737 = vmatpush.msra.mxu0 0.0
    %3738 = vmatpush.msra.mxu0 0.0
    %3739 = vmatpush.msra.mxu0 0.0
    %3740 = vmatpush.msra.mxu0 0.0
    %3741 = vmatpush.msra.mxu0 0.0
    %3742 = vmatpush.msra.mxu0 0.0
    %3743 = vmatpush.msra.mxu0 0.0
    %3744 = vmatpush.msra.mxu0 0.0
    %3745 = vmatpush.msra.mxu0 0.0
    %3746 = vmatpush.msra.mxu0 0.0
    %3747 = vmatpush.msra.mxu0 %v3732
    %3748 = vmatpush.msra.mxu0 %v3725
    %3749 = vmatpush.msra.mxu0 %v3724
    %3750 = vmatmul.f32.gmra.mxu0 %v3730
    %v3751 = vpop.f32.mrf.mxu0
    %v3752 = vadd.f32 0.0, %v3751
    %3753 = vdwg.mxu0
    %v3754 = vadd.f32 %v3704, %v3752
    %s3755 = scalar_lea.vmem %s11, 6
    %v3756 = vld [vmem:[%s3755] sm:$0x3]
    %3760 = vrot.lane.b32.xlu0 %v3548, 24
    %v3761 = vpop.permute.xlu0 %3760
    %3762 = vrot.lane.b32.xlu0 %v3584, 24
    %v3763 = vpop.permute.xlu0 %3762
    %3764 = vrot.lane.b32.xlu0 %v3550, 24
    %v3765 = vpop.permute.xlu0 %3764
    %3766 = vrot.lane.b32.xlu0 %v3586, 24
    %v3767 = vpop.permute.xlu0 %3766
    %3768 = vrot.lane.b32.xlu0 %v3553, 24
    %v3769 = vpop.permute.xlu0 %3768
    %3770 = vrot.lane.b32.xlu0 %v3589, 24
    %v3771 = vpop.permute.xlu0 %3770
    %vm3772 = vcmask 195584
    %v3773 = vsel %vm3772, %v3761, %v3763
    %v3774 = vsel %vm3772, %v3765, %v3767
    %v3775 = vsel %vm3772, %v3769, %v3771
    %v3779 = vsel %vm3655, %v3756, 0
    %v3781 = vsel %vm1699, %v3775, 0
    %3783 = vmatpush.msra.mxu0 0.0
    %3784 = vmatpush.msra.mxu0 0.0
    %3785 = vmatpush.msra.mxu0 0.0
    %3786 = vmatpush.msra.mxu0 0.0
    %3787 = vmatpush.msra.mxu0 0.0
    %3788 = vmatpush.msra.mxu0 0.0
    %3789 = vmatpush.msra.mxu0 0.0
    %3790 = vmatpush.msra.mxu0 0.0
    %3791 = vmatpush.msra.mxu0 0.0
    %3792 = vmatpush.msra.mxu0 0.0
    %3793 = vmatpush.msra.mxu0 0.0
    %3794 = vmatpush.msra.mxu0 0.0
    %3795 = vmatpush.msra.mxu0 0.0
    %3796 = vmatpush.msra.mxu0 %v3781
    %3797 = vmatpush.msra.mxu0 %v3774
    %3798 = vmatpush.msra.mxu0 %v3773
    %3799 = vmatmul.f32.gmra.mxu0 %v3779
    %v3800 = vpop.f32.mrf.mxu0
    %v3801 = vadd.f32 0.0, %v3800
    %3802 = vdwg.mxu0
    %v3803 = vadd.f32 %v3754, %v3801
    %s3804 = scalar_lea.vmem %s11, 8
    %v3805 = vld [vmem:[%s3804] sm:$0x3]
    %3809 = vrot.lane.b32.xlu0 %v3584, 32
    %v3810 = vpop.permute.xlu0 %3809
    %3811 = vrot.lane.b32.xlu0 %v3620, 32
    %v3812 = vpop.permute.xlu0 %3811
    %3813 = vrot.lane.b32.xlu0 %v3586, 32
    %v3814 = vpop.permute.xlu0 %3813
    %3815 = vrot.lane.b32.xlu0 %v3622, 32
    %v3816 = vpop.permute.xlu0 %3815
    %3817 = vrot.lane.b32.xlu0 %v3589, 32
    %v3818 = vpop.permute.xlu0 %3817
    %3819 = vrot.lane.b32.xlu0 %v3625, 32
    %v3820 = vpop.permute.xlu0 %3819
    %v3821 = vsel %vm271, %v3810, %v3812
    %v3822 = vsel %vm271, %v3814, %v3816
    %v3823 = vsel %vm271, %v3818, %v3820
    %v3827 = vsel %vm3655, %v3805, 0
    %v3829 = vsel %vm1699, %v3823, 0
    %3831 = vmatpush.msra.mxu0 0.0
    %3832 = vmatpush.msra.mxu0 0.0
    %3833 = vmatpush.msra.mxu0 0.0
    %3834 = vmatpush.msra.mxu0 0.0
    %3835 = vmatpush.msra.mxu0 0.0
    %3836 = vmatpush.msra.mxu0 0.0
    %3837 = vmatpush.msra.mxu0 0.0
    %3838 = vmatpush.msra.mxu0 0.0
    %3839 = vmatpush.msra.mxu0 0.0
    %3840 = vmatpush.msra.mxu0 0.0
    %3841 = vmatpush.msra.mxu0 0.0
    %3842 = vmatpush.msra.mxu0 0.0
    %3843 = vmatpush.msra.mxu0 0.0
    %3844 = vmatpush.msra.mxu0 %v3829
    %3845 = vmatpush.msra.mxu0 %v3822
    %3846 = vmatpush.msra.mxu0 %v3821
    %3847 = vmatmul.f32.gmra.mxu0 %v3827
    %v3848 = vpop.f32.mrf.mxu0
    %v3849 = vadd.f32 0.0, %v3848
    %3850 = vdwg.mxu0
    %v3851 = vadd.f32 %v3803, %v3849
    %v3852 = vld [vmem:[%s12] sm:$0x1]
    %v3853 = vld [vmem:[%s13] sm:$0x1]
    %vm3854 = vcmask 975872
    %v3855 = vsel %vm3854, %v3851, 0.0
    %v3856 = vrot.slane %v3855, 4
    %v3857 = vadd.f32 %v3855, %v3856
    %v3858 = vrot.slane %v3857, 2
    %v3859 = vadd.f32 %v3857, %v3858
    %v3860 = vrot.slane %v3859, 1
    %v3861 = vadd.f32 %v3859, %v3860
    %v3862 = vrcp.pop 2.0
    %v3863 = vmul.f32 2.0, %v3862
    %v3864 = vsub.f32 1.0, %v3863
    %v3865 = vmul.f32 %v3862, %v3864
    %v3866 = vadd.f32 %v3862, %v3865
    %vm3867 = vweird.f32 %v3862
    %v3868 = vsel %vm3867, %v3862, %v3866
    %v3869 = vmul.f32 %v3861, %v3868
    %v3870 = vsub.f32 %v3851, %v3869
    %v3871 = vmul.f32 %v3870, %v3870
    %v3872 = vsel %vm3854, %v3871, 0.0
    %v3873 = vrot.slane %v3872, 4
    %v3874 = vadd.f32 %v3872, %v3873
    %v3875 = vrot.slane %v3874, 2
    %v3876 = vadd.f32 %v3874, %v3875
    %v3877 = vrot.slane %v3876, 1
    %v3878 = vadd.f32 %v3876, %v3877
    %v3879 = vmul.f32 %v3878, %v3868
    %v3881 = vperm.slane %v3852, 0
    %v3883 = vmul.f32 %v3881, %v3870
    %v3884 = vadd.f32 %v3879, 1e-05
    %v3885 = vrsqrt.pop %v3884
    %v3886 = vmul.f32 %v3885, %v3884
    %v3887 = vmul.f32 %v3886, %v3885
    %v3888 = vmul.f32 0.5, %v3887
    %v3889 = vsub.f32 1.5, %v3888
    %v3890 = vmul.f32 %v3885, %v3889
    %vm3891 = vweird.f32 %v3884
    %vm3892 = vweird.f32 %v3885
    %vm3893 = vmor %vm3891, %vm3892
    %v3894 = vsel %vm3893, %v3885, %v3890
    %v3895 = vmul.f32 %v3883, %v3894
    %v3897 = vperm.slane %v3853, 0
    %v3899 = vadd.f32 %v3895, %v3897
    %v3900 = vsub.f32 0.0, %v3899
    %v3901 = vmul.f32 %v3900, 1.442695
    %v3902 = vpow.pop %v3901
    %v3903 = vadd.f32 %v3902, 1.0
    %v3904 = vrcp.pop %v3903
    %v3905 = vmul.f32 %v3903, %v3904
    %v3906 = vsub.f32 1.0, %v3905
    %v3907 = vmul.f32 %v3904, %v3906
    %v3908 = vadd.f32 %v3904, %v3907
    %vm3909 = vweird.f32 %v3903
    %vm3910 = vweird.f32 %v3904
    %vm3911 = vmor %vm3909, %vm3910
    %v3912 = vsel %vm3911, %v3904, %v3908
    %v3913 = vand.u32 2147483647, %v3903
    %vm3914 = vcmp.eq.f32.partialorder %v3913, 8.507059e+37
    %v3915 = vand.u32 %v3903, 2147483648
    %v3916 = vor.u32 1.1754944e-38, %v3915
    %v3917 = vsel %vm3914, %v3916, %v3912
    %v3918 = vmul.f32 1.0, %v3917
    %v3919 = vpack.c.bf16 %v3918, %v3918
    %v3920 = vld [vmem:[%s14] sm:$0xf]
    %v3921 = vld [vmem:[%s14 + $0x4] sm:$0xf]
    %v3922 = vld [vmem:[%s14 + $0x8] sm:$0xf]
    %v3923 = vld [vmem:[%s14 + $0xc] sm:$0xf]
    %v3924 = vld [vmem:[%s14 + $0x10] sm:$0xf]
    %v3925 = vld [vmem:[%s14 + $0x14] sm:$0xf]
    %v3926 = vld [vmem:[%s14 + $0x18] sm:$0xf]
    %v3927 = vld [vmem:[%s14 + $0x1c] sm:$0xf]
    %v3928 = vld [vmem:[%s14 + $0x20] sm:$0xf]
    %v3929 = vld [vmem:[%s14 + $0x24] sm:$0xf]
    %v3930 = vld [vmem:[%s14 + $0x28] sm:$0xf]
    %v3931 = vld [vmem:[%s14 + $0x2c] sm:$0xf]
    %v3932 = vld [vmem:[%s14 + $0x30] sm:$0xf]
    %v3933 = vld [vmem:[%s14 + $0x34] sm:$0xf]
    %v3934 = vld [vmem:[%s14 + $0x38] sm:$0xf]
    %v3950 = vunpack.c.l.b16 %v3920
    %v3951 = vunpack.c.l.b16 %v3921
    %v3952 = vunpack.c.l.b16 %v3922
    %v3953 = vunpack.c.l.b16 %v3923
    %v3954 = vunpack.c.l.b16 %v3924
    %v3955 = vunpack.c.l.b16 %v3925
    %v3956 = vunpack.c.l.b16 %v3926
    %v3957 = vunpack.c.l.b16 %v3927
    %v3958 = vunpack.c.l.b16 %v3928
    %v3959 = vunpack.c.l.b16 %v3929
    %v3960 = vunpack.c.l.b16 %v3930
    %v3961 = vunpack.c.l.b16 %v3931
    %v3962 = vunpack.c.l.b16 %v3932
    %v3963 = vunpack.c.l.b16 %v3933
    %v3964 = vunpack.c.l.b16 %v3934
    %v3965 = vpack.c.b16 %v3951, %v3950
    %v3966 = vpack.c.b16 %v3953, %v3952
    %v3967 = vpack.c.b16 %v3955, %v3954
    %v3968 = vpack.c.b16 %v3957, %v3956
    %v3969 = vpack.c.b16 %v3959, %v3958
    %v3970 = vpack.c.b16 %v3961, %v3960
    %v3971 = vpack.c.b16 %v3963, %v3962
    %v3972 = vpack.c.b16 %v3964, %v3964
    %vm3980 = vcmask 982016
    %v3982 = vsel %vm3980, %v3919, 0
    %v3985 = vsel %vm1699, %v3972, 0
    %3987 = vmatpush.bf16.msra.mxu0 %v3985
    %3988 = vmatpush.bf16.msra.mxu0 %v3971
    %3989 = vmatpush.bf16.msra.mxu0 %v3970
    %3990 = vmatpush.bf16.msra.mxu0 %v3969
    %3991 = vmatpush.bf16.msra.mxu0 %v3968
    %3992 = vmatpush.bf16.msra.mxu0 %v3967
    %3993 = vmatpush.bf16.msra.mxu0 %v3966
    %3994 = vmatpush.bf16.msra.mxu0 %v3965
    %3995 = vmatmul.bf16.gmra.mxu0 %v3982
    %v3996 = vpop.f32.mrf.mxu0
    %v3997 = vadd.f32 0.0, %v3996
    %v3998 = vpop.f32.mrf.mxu0
    %3999 = vdwg.mxu0
    %v4000 = vld [vmem:[%s15] sm:$0x1]
    %v4001 = vld [vmem:[%s16] sm:$0x1]
    %vm4002 = vcmask 680960
    %v4003 = vsel %vm4002, %v3997, 0.0
    %v4004 = vrot.slane %v4003, 4
    %v4005 = vadd.f32 %v4003, %v4004
    %v4006 = vrot.slane %v4005, 2
    %v4007 = vadd.f32 %v4005, %v4006
    %v4008 = vrot.slane %v4007, 1
    %v4009 = vadd.f32 %v4007, %v4008
    %v4010 = vmul.f32 %v4009, %v3868
    %v4011 = vsub.f32 %v3997, %v4010
    %v4012 = vmul.f32 %v4011, %v4011
    %v4013 = vsel %vm4002, %v4012, 0.0
    %v4014 = vrot.slane %v4013, 4
    %v4015 = vadd.f32 %v4013, %v4014
    %v4016 = vrot.slane %v4015, 2
    %v4017 = vadd.f32 %v4015, %v4016
    %v4018 = vrot.slane %v4017, 1
    %v4019 = vadd.f32 %v4017, %v4018
    %v4020 = vmul.f32 %v4019, %v3868
    %v4022 = vperm.slane %v4000, 0
    %v4024 = vmul.f32 %v4022, %v4011
    %v4025 = vadd.f32 %v4020, 1e-05
    %v4026 = vrsqrt.pop %v4025
    %v4027 = vmul.f32 %v4026, %v4025
    %v4028 = vmul.f32 %v4027, %v4026
    %v4029 = vmul.f32 0.5, %v4028
    %v4030 = vsub.f32 1.5, %v4029
    %v4031 = vmul.f32 %v4026, %v4030
    %vm4032 = vweird.f32 %v4025
    %vm4033 = vweird.f32 %v4026
    %vm4034 = vmor %vm4032, %vm4033
    %v4035 = vsel %vm4034, %v4026, %v4031
    %v4036 = vmul.f32 %v4024, %v4035
    %v4038 = vperm.slane %v4001, 0
    %v4040 = vadd.f32 %v4036, %v4038
    %v4041 = vsub.f32 0.0, %v4040
    %v4042 = vmul.f32 %v4041, 1.442695
    %v4043 = vpow.pop %v4042
    %v4044 = vadd.f32 %v4043, 1.0
    %v4045 = vrcp.pop %v4044
    %v4046 = vmul.f32 %v4044, %v4045
    %v4047 = vsub.f32 1.0, %v4046
    %v4048 = vmul.f32 %v4045, %v4047
    %v4049 = vadd.f32 %v4045, %v4048
    %vm4050 = vweird.f32 %v4044
    %vm4051 = vweird.f32 %v4045
    %vm4052 = vmor %vm4050, %vm4051
    %v4053 = vsel %vm4052, %v4045, %v4049
    %v4054 = vand.u32 2147483647, %v4044
    %vm4055 = vcmp.eq.f32.partialorder %v4054, 8.507059e+37
    %v4056 = vand.u32 %v4044, 2147483648
    %v4057 = vor.u32 1.1754944e-38, %v4056
    %v4058 = vsel %vm4055, %v4057, %v4053
    %v4059 = vmul.f32 1.0, %v4058
    %v4060 = vpack.c.bf16 %v4059, %v4059
    %v4061 = vld [vmem:[%s17] sm:$0xf]
    %v4062 = vld [vmem:[%s17 + $0x4] sm:$0xf]
    %v4063 = vld [vmem:[%s17 + $0x8] sm:$0xf]
    %v4064 = vld [vmem:[%s17 + $0xc] sm:$0xf]
    %v4065 = vld [vmem:[%s17 + $0x10] sm:$0xf]
    %v4066 = vld [vmem:[%s17 + $0x14] sm:$0xf]
    %v4067 = vld [vmem:[%s17 + $0x18] sm:$0xf]
    %v4068 = vld [vmem:[%s17 + $0x1c] sm:$0xf]
    %v4069 = vld [vmem:[%s17 + $0x20] sm:$0xf]
    %v4070 = vld [vmem:[%s17 + $0x24] sm:$0xf]
    %v4071 = vld [vmem:[%s17 + $0x28] sm:$0x3]
    %v4072 = vld [vmem:[%s18] sm:$0x1]
    %v4074 = vperm.slane %v4072, 0
    %v4087 = vunpack.c.l.b16 %v4061
    %v4088 = vunpack.c.l.b16 %v4062
    %v4089 = vunpack.c.l.b16 %v4063
    %v4090 = vunpack.c.l.b16 %v4064
    %v4091 = vunpack.c.l.b16 %v4065
    %v4092 = vunpack.c.l.b16 %v4066
    %v4093 = vunpack.c.l.b16 %v4067
    %v4094 = vunpack.c.l.b16 %v4068
    %v4095 = vunpack.c.l.b16 %v4069
    %v4096 = vunpack.c.l.b16 %v4070
    %v4097 = vunpack.c.l.b16 %v4071
    %v4098 = vpack.c.b16 %v4088, %v4087
    %v4099 = vpack.c.b16 %v4090, %v4089
    %v4100 = vpack.c.b16 %v4092, %v4091
    %v4101 = vpack.c.b16 %v4094, %v4093
    %v4102 = vpack.c.b16 %v4096, %v4095
    %v4103 = vpack.c.b16 %v4097, %v4097
    %vm4109 = vcmask 687104
    %v4111 = vsel %vm4109, %v4060, 0
    %vm4113 = vcmask 1041408
    %v4115 = vsel %vm4113, %v4103, 0
    %4117 = vmatpush.bf16.msra.mxu0 0
    %4118 = vmatpush.bf16.msra.mxu0 0
    %4119 = vmatpush.bf16.msra.mxu0 %v4115
    %4120 = vmatpush.bf16.msra.mxu0 %v4102
    %4121 = vmatpush.bf16.msra.mxu0 %v4101
    %4122 = vmatpush.bf16.msra.mxu0 %v4100
    %4123 = vmatpush.bf16.msra.mxu0 %v4099
    %4124 = vmatpush.bf16.msra.mxu0 %v4098
    %4125 = vmatmul.bf16.gmra.mxu0 %v4111
    %v4126 = vpop.f32.mrf.mxu0
    %v4127 = vadd.f32 %v4074, %v4126
    %v4128 = vpop.f32.mrf.mxu0
    %4129 = vdwg.mxu0
    %vm4130 = vcmask 74752
    %4131 = vst.msk [vmem:[#allocation8] sm:$0x3] %vm4130, %v4127
    // Predicated region
    $region90: #{lenet_forward.1} parent=1 // pred_check
      _
    $region91: #{lenet_forward.1} parent=1 // pred_check_branch
      %4133 = sbr.rel (0) target = $region93
    $region92: #{lenet_forward.1} parent=1 // pred_region
      %4135 = vsyncadd [#allocation4], 0
      %s4137 = sshll.u32 [#allocation8], 4
      %s4138 = int_to_ptr.vmem [resolvable:$true] %s4137
      %s4139 = sshll.u32 %s19, 4
      %s4140 = int_to_ptr.hbm [resolvable:$true] %s4139
      %4142 = dma.vmem_to_hbm [thread:$0]  %s4138, 32, %s4140, [#allocation4]
    $region93: #{lenet_forward.1} parent=1 // pred_fallthru
      _
    // Predicated region
    $region94: #{lenet_forward.1} parent=1 // pred_check
      _
    $region95: #{lenet_forward.1} parent=1 // pred_check_branch
      %4144 = sbr.rel (0) target = $region97
    $region96: #{lenet_forward.1} parent=1 // pred_region
      %4146 = dma.done [#allocation4], 32
    $region97: #{lenet_forward.1} parent=1 // pred_fallthru
      _
    %4147 = vsyncpa [#allocation3], 1
    %4148 = vsyncpa [#allocation6], 1
    %4149 = vsyncpa [#allocation4], 1

</llo_original>
